<compile_context>
chip_gen: v7x
topology: tpu7x:2x2x1
jax: 0.10.0
libtpu: 0.0.40
codegen_flags: <defaults>
</compile_context>

<pallas_src>
import functools

import jax
import jax.numpy as jnp
from jax.experimental import pallas as pl
from jax.experimental.pallas import tpu as pltpu

# ---- stand-in for the `cf` config of the original module ----
VOCAB_SIZE = 50
EMB_DIM = 32          # emd_dim == cf.feature_dim (d_model)
NHEAD = 4
DIM_FF = 64           # cf.dim_feedforward
NLAYERS = 2           # cf.nlayers
CODE_MAX_LEN = 8      # cf.code_max_len
BATCH_SIZE = 2        # cf.batch_size
LN_EPS = 1e-5
# cf.dropout is irrelevant in a deterministic / eval forward (identity).

_VMEM = pl.BlockSpec(memory_space=pltpu.MemorySpace.VMEM)


def _layernorm(x, gamma, beta):
    mean = jnp.mean(x, axis=-1, keepdims=True)
    var = jnp.mean(jnp.square(x - mean), axis=-1, keepdims=True)
    return (x - mean) * jax.lax.rsqrt(var + LN_EPS) * gamma + beta


# -------------------- fused embedding + 2-layer encoder kernel --------------------
def _fused_encoder_kernel(nhead, tok_ref, mask_ref, emb_ref,
                          wqkv_ref, bqkv_ref, wo_ref, bo_ref,
                          g1_ref, be1_ref, w1_ref, b1_ref, w2_ref, b2_ref,
                          g2_ref, be2_ref, o_ref):
    N, Dm = o_ref.shape              # N = L * B (flat token rows), Dm = d_model
    V = emb_ref.shape[0]
    NL = wqkv_ref.shape[0]
    H = nhead
    Dh = Dm // H

    # ---- embedding: one-hot from a single lane-iota compare, gather on the MXU ----
    col = jax.lax.broadcasted_iota(jnp.int32, (N, V), 1)
    onehot = (col == tok_ref[...]).astype(jnp.float32)                      # (N, V)
    x = jnp.dot(onehot, emb_ref[...], preferred_element_type=jnp.float32)   # (N, Dm)

    # additive mask: row n only attends to rows of the same batch element
    # (row n of the flat (L*B, D) buffer == position (s = n // B, b = n % B))
    mask_add = mask_ref[...]                              # (N, N), 0 or -1e30

    for layer in range(NL):                               # NLAYERS=2, unrolled
        wqkv = wqkv_ref[layer]                            # (Dm, 3Dm), pre-transposed, Q scaled
        bqkv = bqkv_ref[layer]                            # (1, 3Dm)
        wo = wo_ref[layer]                                # (Dm, Dm), pre-transposed
        bo = bo_ref[layer]                                # (1, Dm)
        g1, be1 = g1_ref[layer], be1_ref[layer]
        w1, b1 = w1_ref[layer], b1_ref[layer]             # (Dm, FF), (1, FF)
        w2, b2 = w2_ref[layer], b2_ref[layer]             # (FF, Dm), (1, Dm)
        g2, be2 = g2_ref[layer], be2_ref[layer]

        # ---- multi-head self attention (nn.MultiheadAttention semantics) ----
        qkv = jnp.dot(x, wqkv, preferred_element_type=jnp.float32) + bqkv   # (N, 3Dm)
        q = qkv[:, :Dm]
        k = qkv[:, Dm:2 * Dm]
        v = qkv[:, 2 * Dm:]

        ctx = []
        for h in range(H):                                # heads stay packed in lanes
            lo, hi = h * Dh, (h + 1) * Dh
            qh, kh, vh = q[:, lo:hi], k[:, lo:hi], v[:, lo:hi]
            # scores = qh @ kh^T via dot_general (no explicit transpose)
            s = jax.lax.dot_general(qh, kh, (((1,), (1,)), ((), ())),
                                    preferred_element_type=jnp.float32)     # (N, N)
            s = s + mask_add
            m = jnp.max(s, axis=-1, keepdims=True)
            e = jnp.exp(s - m)
            p = e * pl.reciprocal(jnp.sum(e, axis=-1, keepdims=True), approx=True)
            ctx.append(jnp.dot(p, vh, preferred_element_type=jnp.float32))  # (N, Dh)

        # concat heads in-lane, single MXU out-projection
        ctx_all = jnp.concatenate(ctx, axis=-1)                             # (N, Dm)
        attn = jnp.dot(ctx_all, wo, preferred_element_type=jnp.float32) + bo

        # ---- residual + LayerNorm 1 (post-norm, dropout = 0) ----
        y = _layernorm(x + attn, g1, be1)

        # ---- feed-forward (ReLU) + residual + LayerNorm 2 ----
        hdn = jnp.maximum(jnp.dot(y, w1, preferred_element_type=jnp.float32) + b1, 0.0)
        f = jnp.dot(hdn, w2, preferred_element_type=jnp.float32) + b2
        x = _layernorm(y + f, g2, be2)

    o_ref[...] = x                                        # lane-dense (N, Dm) slab


# -------------------- parameter init (deterministic, synthetic, pre-transposed) ----
def init_params(key):
    keys = jax.random.split(key, 1 + NLAYERS)
    D, FF, H = EMB_DIM, DIM_FF, NHEAD
    scale = 1.0 / float(D // H) ** 0.5
    emb = jax.random.normal(keys[0], (VOCAB_SIZE, D), jnp.float32) * 0.02

    cols = {k: [] for k in ("wqkv", "bqkv", "wo", "bo", "g1", "be1",
                            "w1", "b1", "w2", "b2", "g2", "be2")}
    for i in range(NLAYERS):
        lk = jax.random.split(keys[1 + i], 4)
        in_proj_w = jax.random.normal(lk[0], (3 * D, D), jnp.float32) * 0.05   # in_proj_weight
        in_proj_b = jnp.zeros((3 * D,), jnp.float32)                           # in_proj_bias
        out_proj_w = jax.random.normal(lk[1], (D, D), jnp.float32) * 0.05      # out_proj.weight
        lin1_w = jax.random.normal(lk[2], (FF, D), jnp.float32) * 0.05         # linear1.weight
        lin2_w = jax.random.normal(lk[3], (D, FF), jnp.float32) * 0.05         # linear2.weight

        # pre-transpose to (in, out); fold 1/sqrt(Dh) softmax scale into the Q block
        wqkv_t = in_proj_w.T                                                   # (D, 3D)
        wqkv_t = jnp.concatenate([wqkv_t[:, :D] * scale, wqkv_t[:, D:]], axis=1)
        bqkv_r = in_proj_b.reshape(1, 3 * D)
        bqkv_r = jnp.concatenate([bqkv_r[:, :D] * scale, bqkv_r[:, D:]], axis=1)

        cols["wqkv"].append(wqkv_t)
        cols["bqkv"].append(bqkv_r)
        cols["wo"].append(out_proj_w.T)                                        # (D, D)
        cols["bo"].append(jnp.zeros((1, D), jnp.float32))
        cols["g1"].append(jnp.ones((1, D), jnp.float32))
        cols["be1"].append(jnp.zeros((1, D), jnp.float32))
        cols["w1"].append(lin1_w.T)                                            # (D, FF)
        cols["b1"].append(jnp.zeros((1, FF), jnp.float32))
        cols["w2"].append(lin2_w.T)                                            # (FF, D)
        cols["b2"].append(jnp.zeros((1, D), jnp.float32))
        cols["g2"].append(jnp.ones((1, D), jnp.float32))
        cols["be2"].append(jnp.zeros((1, D), jnp.float32))

    params = {k: jnp.stack(v) for k, v in cols.items()}   # leading axis = NLAYERS
    params["emb"] = emb
    return params


# -------------------- forward (matches CodeTransEncoder.forward) --------------------
def code_trans_encoder(tokens, params):
    b, l = tokens.shape
    n = b * l
    d = EMB_DIM
    tok_col = tokens.reshape(n, 1).astype(jnp.int32)      # (N, 1) column of token ids

    # same-batch additive mask for the flat (L*B) row layout (row n -> batch n % B)
    idx = jnp.arange(n, dtype=jnp.int32)
    same_batch = (idx[:, None] % b) == (idx[None, :] % b)
    mask_add = jnp.where(same_batch, 0.0, -1e30).astype(jnp.float32)

    kernel = functools.partial(_fused_encoder_kernel, NHEAD)
    out = pl.pallas_call(
        kernel,
        out_shape=jax.ShapeDtypeStruct((n, d), jnp.float32),
        in_specs=[_VMEM] * 15,
        out_specs=_VMEM,
    )(tok_col, mask_add, params["emb"],
      params["wqkv"], params["bqkv"], params["wo"], params["bo"],
      params["g1"], params["be1"], params["w1"], params["b1"],
      params["w2"], params["b2"], params["g2"], params["be2"])

    # torch: embedded.view(L, B, -1) then memory.view(B, L, -1) are pure views of
    # the same flat buffer the kernel operated on, so a single reshape suffices.
    return out.reshape(b, l, d)                           # (B, L, D)


if __name__ == "__main__":
    key = jax.random.PRNGKey(0)
    k_tok, k_par = jax.random.split(key)
    tokens = jax.random.randint(k_tok, (BATCH_SIZE, CODE_MAX_LEN), 0, VOCAB_SIZE, jnp.int32)
    params = init_params(k_par)

    out = code_trans_encoder(tokens, params)
    out = jax.block_until_ready(out)
    assert out.shape == (BATCH_SIZE, CODE_MAX_LEN, EMB_DIM)
    assert bool(jnp.all(jnp.isfinite(out)))
    print("KERNEL_OK")
</pallas_src>

<mosaic_0001>
module attributes {stable_mosaic.version = 11 : i64} {
  func.func @_fused_encoder_kernel(%arg0: memref<16x1xi32, #tpu.memory_space<vmem>>, %arg1: memref<16x16xf32, #tpu.memory_space<vmem>>, %arg2: memref<50x32xf32, #tpu.memory_space<vmem>>, %arg3: memref<2x32x96xf32, #tpu.memory_space<vmem>>, %arg4: memref<2x1x96xf32, #tpu.memory_space<vmem>>, %arg5: memref<2x32x32xf32, #tpu.memory_space<vmem>>, %arg6: memref<2x1x32xf32, #tpu.memory_space<vmem>>, %arg7: memref<2x1x32xf32, #tpu.memory_space<vmem>>, %arg8: memref<2x1x32xf32, #tpu.memory_space<vmem>>, %arg9: memref<2x32x64xf32, #tpu.memory_space<vmem>>, %arg10: memref<2x1x64xf32, #tpu.memory_space<vmem>>, %arg11: memref<2x64x32xf32, #tpu.memory_space<vmem>>, %arg12: memref<2x1x32xf32, #tpu.memory_space<vmem>>, %arg13: memref<2x1x32xf32, #tpu.memory_space<vmem>>, %arg14: memref<2x1x32xf32, #tpu.memory_space<vmem>>, %arg15: memref<16x32xf32, #tpu.memory_space<vmem>>) attributes {dimension_semantics = [], scalar_prefetch = 0 : i64, scratch_operands = 0 : i64, tpu.core_type = #tpu.core_type<tc>} {
    %0 = tpu.iota {dimensions = array<i32: 1>} : vector<16x50xi32>
    %c0 = arith.constant 0 : index
    %c0_0 = arith.constant 0 : index
    %1 = vector.load %arg0[%c0, %c0_0] : memref<16x1xi32, #tpu.memory_space<vmem>>, vector<16x1xi32>
    %2 = vector.broadcast %1 : vector<16x1xi32> to vector<16x50xi32>
    %3 = arith.cmpi eq, %0, %2 : vector<16x50xi32>
    %4 = arith.extui %3 : vector<16x50xi1> to vector<16x50xi32>
    %5 = arith.sitofp %4 : vector<16x50xi32> to vector<16x50xf32>
    %c0_1 = arith.constant 0 : index
    %c0_2 = arith.constant 0 : index
    %6 = vector.load %arg2[%c0_1, %c0_2] : memref<50x32xf32, #tpu.memory_space<vmem>>, vector<50x32xf32>
    %cst = arith.constant dense<0.000000e+00> : vector<16x32xf32>
    %7 = tpu.matmul %5, %6, %cst {dimension_numbers = #tpu.dot_dimension_numbers<[1], [0], [0], [1], [0, 0, 1, 1], [], []>} : vector<16x50xf32>, vector<50x32xf32>, vector<16x32xf32> -> vector<16x32xf32>
    %c0_3 = arith.constant 0 : index
    %c0_4 = arith.constant 0 : index
    %8 = vector.load %arg1[%c0_3, %c0_4] : memref<16x16xf32, #tpu.memory_space<vmem>>, vector<16x16xf32>
    %c0_5 = arith.constant 0 : index
    %c0_6 = arith.constant 0 : index
    %c0_7 = arith.constant 0 : index
    %9 = vector.load %arg3[%c0_5, %c0_6, %c0_7] : memref<2x32x96xf32, #tpu.memory_space<vmem>>, vector<1x32x96xf32>
    %10 = vector.shape_cast %9 : vector<1x32x96xf32> to vector<32x96xf32>
    %c0_8 = arith.constant 0 : index
    %c0_9 = arith.constant 0 : index
    %c0_10 = arith.constant 0 : index
    %11 = vector.load %arg4[%c0_8, %c0_9, %c0_10] : memref<2x1x96xf32, #tpu.memory_space<vmem>>, vector<1x1x96xf32>
    %12 = vector.shape_cast %11 : vector<1x1x96xf32> to vector<1x96xf32>
    %c0_11 = arith.constant 0 : index
    %c0_12 = arith.constant 0 : index
    %c0_13 = arith.constant 0 : index
    %13 = vector.load %arg5[%c0_11, %c0_12, %c0_13] : memref<2x32x32xf32, #tpu.memory_space<vmem>>, vector<1x32x32xf32>
    %14 = vector.shape_cast %13 : vector<1x32x32xf32> to vector<32x32xf32>
    %c0_14 = arith.constant 0 : index
    %c0_15 = arith.constant 0 : index
    %c0_16 = arith.constant 0 : index
    %15 = vector.load %arg6[%c0_14, %c0_15, %c0_16] : memref<2x1x32xf32, #tpu.memory_space<vmem>>, vector<1x1x32xf32>
    %16 = vector.shape_cast %15 : vector<1x1x32xf32> to vector<1x32xf32>
    %c0_17 = arith.constant 0 : index
    %c0_18 = arith.constant 0 : index
    %c0_19 = arith.constant 0 : index
    %17 = vector.load %arg7[%c0_17, %c0_18, %c0_19] : memref<2x1x32xf32, #tpu.memory_space<vmem>>, vector<1x1x32xf32>
    %18 = vector.shape_cast %17 : vector<1x1x32xf32> to vector<1x32xf32>
    %c0_20 = arith.constant 0 : index
    %c0_21 = arith.constant 0 : index
    %c0_22 = arith.constant 0 : index
    %19 = vector.load %arg8[%c0_20, %c0_21, %c0_22] : memref<2x1x32xf32, #tpu.memory_space<vmem>>, vector<1x1x32xf32>
    %20 = vector.shape_cast %19 : vector<1x1x32xf32> to vector<1x32xf32>
    %c0_23 = arith.constant 0 : index
    %c0_24 = arith.constant 0 : index
    %c0_25 = arith.constant 0 : index
    %21 = vector.load %arg9[%c0_23, %c0_24, %c0_25] : memref<2x32x64xf32, #tpu.memory_space<vmem>>, vector<1x32x64xf32>
    %22 = vector.shape_cast %21 : vector<1x32x64xf32> to vector<32x64xf32>
    %c0_26 = arith.constant 0 : index
    %c0_27 = arith.constant 0 : index
    %c0_28 = arith.constant 0 : index
    %23 = vector.load %arg10[%c0_26, %c0_27, %c0_28] : memref<2x1x64xf32, #tpu.memory_space<vmem>>, vector<1x1x64xf32>
    %24 = vector.shape_cast %23 : vector<1x1x64xf32> to vector<1x64xf32>
    %c0_29 = arith.constant 0 : index
    %c0_30 = arith.constant 0 : index
    %c0_31 = arith.constant 0 : index
    %25 = vector.load %arg11[%c0_29, %c0_30, %c0_31] : memref<2x64x32xf32, #tpu.memory_space<vmem>>, vector<1x64x32xf32>
    %26 = vector.shape_cast %25 : vector<1x64x32xf32> to vector<64x32xf32>
    %c0_32 = arith.constant 0 : index
    %c0_33 = arith.constant 0 : index
    %c0_34 = arith.constant 0 : index
    %27 = vector.load %arg12[%c0_32, %c0_33, %c0_34] : memref<2x1x32xf32, #tpu.memory_space<vmem>>, vector<1x1x32xf32>
    %28 = vector.shape_cast %27 : vector<1x1x32xf32> to vector<1x32xf32>
    %c0_35 = arith.constant 0 : index
    %c0_36 = arith.constant 0 : index
    %c0_37 = arith.constant 0 : index
    %29 = vector.load %arg13[%c0_35, %c0_36, %c0_37] : memref<2x1x32xf32, #tpu.memory_space<vmem>>, vector<1x1x32xf32>
    %30 = vector.shape_cast %29 : vector<1x1x32xf32> to vector<1x32xf32>
    %c0_38 = arith.constant 0 : index
    %c0_39 = arith.constant 0 : index
    %c0_40 = arith.constant 0 : index
    %31 = vector.load %arg14[%c0_38, %c0_39, %c0_40] : memref<2x1x32xf32, #tpu.memory_space<vmem>>, vector<1x1x32xf32>
    %32 = vector.shape_cast %31 : vector<1x1x32xf32> to vector<1x32xf32>
    %cst_41 = arith.constant dense<0.000000e+00> : vector<16x96xf32>
    %33 = tpu.matmul %7, %10, %cst_41 {dimension_numbers = #tpu.dot_dimension_numbers<[1], [0], [0], [1], [0, 0, 1, 1], [], []>} : vector<16x32xf32>, vector<32x96xf32>, vector<16x96xf32> -> vector<16x96xf32>
    %34 = vector.broadcast %12 : vector<1x96xf32> to vector<16x96xf32>
    %35 = arith.addf %33, %34 : vector<16x96xf32>
    %36 = vector.extract_strided_slice %35 {offsets = [0, 0], sizes = [16, 32], strides = [1, 1]} : vector<16x96xf32> to vector<16x32xf32>
    %37 = vector.extract_strided_slice %35 {offsets = [0, 32], sizes = [16, 32], strides = [1, 1]} : vector<16x96xf32> to vector<16x32xf32>
    %38 = vector.extract_strided_slice %35 {offsets = [0, 64], sizes = [16, 32], strides = [1, 1]} : vector<16x96xf32> to vector<16x32xf32>
    %39 = vector.extract_strided_slice %36 {offsets = [0, 0], sizes = [16, 8], strides = [1, 1]} : vector<16x32xf32> to vector<16x8xf32>
    %40 = vector.extract_strided_slice %37 {offsets = [0, 0], sizes = [16, 8], strides = [1, 1]} : vector<16x32xf32> to vector<16x8xf32>
    %41 = vector.extract_strided_slice %38 {offsets = [0, 0], sizes = [16, 8], strides = [1, 1]} : vector<16x32xf32> to vector<16x8xf32>
    %cst_42 = arith.constant dense<0.000000e+00> : vector<16x16xf32>
    %42 = tpu.matmul %39, %40, %cst_42 {dimension_numbers = #tpu.dot_dimension_numbers<[1], [1], [0], [0], [0, 0, 1, 0], [], []>} : vector<16x8xf32>, vector<16x8xf32>, vector<16x16xf32> -> vector<16x16xf32>
    %43 = arith.addf %42, %8 : vector<16x16xf32>
    %cst_43 = arith.constant dense<0xFF800000> : vector<16xf32>
    %44 = vector.multi_reduction <maximumf>, %43, %cst_43 [1] : vector<16x16xf32> to vector<16xf32>
    %45 = vector.shape_cast %44 : vector<16xf32> to vector<16x1xf32>
    %46 = vector.broadcast %45 : vector<16x1xf32> to vector<16x16xf32>
    %47 = arith.subf %43, %46 : vector<16x16xf32>
    %48 = math.exp %47 : vector<16x16xf32>
    %cst_44 = arith.constant dense<0.000000e+00> : vector<16xf32>
    %49 = vector.multi_reduction <add>, %48, %cst_44 [1] : vector<16x16xf32> to vector<16xf32>
    %50 = vector.shape_cast %49 : vector<16xf32> to vector<16x1xf32>
    %51 = tpu.reciprocal %50 {approx = true} : vector<16x1xf32> -> vector<16x1xf32>
    %52 = vector.broadcast %51 : vector<16x1xf32> to vector<16x16xf32>
    %53 = arith.mulf %48, %52 : vector<16x16xf32>
    %cst_45 = arith.constant dense<0.000000e+00> : vector<16x8xf32>
    %54 = tpu.matmul %53, %41, %cst_45 {dimension_numbers = #tpu.dot_dimension_numbers<[1], [0], [0], [1], [0, 0, 1, 1], [], []>} : vector<16x16xf32>, vector<16x8xf32>, vector<16x8xf32> -> vector<16x8xf32>
    %55 = vector.extract_strided_slice %36 {offsets = [0, 8], sizes = [16, 8], strides = [1, 1]} : vector<16x32xf32> to vector<16x8xf32>
    %56 = vector.extract_strided_slice %37 {offsets = [0, 8], sizes = [16, 8], strides = [1, 1]} : vector<16x32xf32> to vector<16x8xf32>
    %57 = vector.extract_strided_slice %38 {offsets = [0, 8], sizes = [16, 8], strides = [1, 1]} : vector<16x32xf32> to vector<16x8xf32>
    %cst_46 = arith.constant dense<0.000000e+00> : vector<16x16xf32>
    %58 = tpu.matmul %55, %56, %cst_46 {dimension_numbers = #tpu.dot_dimension_numbers<[1], [1], [0], [0], [0, 0, 1, 0], [], []>} : vector<16x8xf32>, vector<16x8xf32>, vector<16x16xf32> -> vector<16x16xf32>
    %59 = arith.addf %58, %8 : vector<16x16xf32>
    %cst_47 = arith.constant dense<0xFF800000> : vector<16xf32>
    %60 = vector.multi_reduction <maximumf>, %59, %cst_47 [1] : vector<16x16xf32> to vector<16xf32>
    %61 = vector.shape_cast %60 : vector<16xf32> to vector<16x1xf32>
    %62 = vector.broadcast %61 : vector<16x1xf32> to vector<16x16xf32>
    %63 = arith.subf %59, %62 : vector<16x16xf32>
    %64 = math.exp %63 : vector<16x16xf32>
    %cst_48 = arith.constant dense<0.000000e+00> : vector<16xf32>
    %65 = vector.multi_reduction <add>, %64, %cst_48 [1] : vector<16x16xf32> to vector<16xf32>
    %66 = vector.shape_cast %65 : vector<16xf32> to vector<16x1xf32>
    %67 = tpu.reciprocal %66 {approx = true} : vector<16x1xf32> -> vector<16x1xf32>
    %68 = vector.broadcast %67 : vector<16x1xf32> to vector<16x16xf32>
    %69 = arith.mulf %64, %68 : vector<16x16xf32>
    %cst_49 = arith.constant dense<0.000000e+00> : vector<16x8xf32>
    %70 = tpu.matmul %69, %57, %cst_49 {dimension_numbers = #tpu.dot_dimension_numbers<[1], [0], [0], [1], [0, 0, 1, 1], [], []>} : vector<16x16xf32>, vector<16x8xf32>, vector<16x8xf32> -> vector<16x8xf32>
    %71 = vector.extract_strided_slice %36 {offsets = [0, 16], sizes = [16, 8], strides = [1, 1]} : vector<16x32xf32> to vector<16x8xf32>
    %72 = vector.extract_strided_slice %37 {offsets = [0, 16], sizes = [16, 8], strides = [1, 1]} : vector<16x32xf32> to vector<16x8xf32>
    %73 = vector.extract_strided_slice %38 {offsets = [0, 16], sizes = [16, 8], strides = [1, 1]} : vector<16x32xf32> to vector<16x8xf32>
    %cst_50 = arith.constant dense<0.000000e+00> : vector<16x16xf32>
    %74 = tpu.matmul %71, %72, %cst_50 {dimension_numbers = #tpu.dot_dimension_numbers<[1], [1], [0], [0], [0, 0, 1, 0], [], []>} : vector<16x8xf32>, vector<16x8xf32>, vector<16x16xf32> -> vector<16x16xf32>
    %75 = arith.addf %74, %8 : vector<16x16xf32>
    %cst_51 = arith.constant dense<0xFF800000> : vector<16xf32>
    %76 = vector.multi_reduction <maximumf>, %75, %cst_51 [1] : vector<16x16xf32> to vector<16xf32>
    %77 = vector.shape_cast %76 : vector<16xf32> to vector<16x1xf32>
    %78 = vector.broadcast %77 : vector<16x1xf32> to vector<16x16xf32>
    %79 = arith.subf %75, %78 : vector<16x16xf32>
    %80 = math.exp %79 : vector<16x16xf32>
    %cst_52 = arith.constant dense<0.000000e+00> : vector<16xf32>
    %81 = vector.multi_reduction <add>, %80, %cst_52 [1] : vector<16x16xf32> to vector<16xf32>
    %82 = vector.shape_cast %81 : vector<16xf32> to vector<16x1xf32>
    %83 = tpu.reciprocal %82 {approx = true} : vector<16x1xf32> -> vector<16x1xf32>
    %84 = vector.broadcast %83 : vector<16x1xf32> to vector<16x16xf32>
    %85 = arith.mulf %80, %84 : vector<16x16xf32>
    %cst_53 = arith.constant dense<0.000000e+00> : vector<16x8xf32>
    %86 = tpu.matmul %85, %73, %cst_53 {dimension_numbers = #tpu.dot_dimension_numbers<[1], [0], [0], [1], [0, 0, 1, 1], [], []>} : vector<16x16xf32>, vector<16x8xf32>, vector<16x8xf32> -> vector<16x8xf32>
    %87 = vector.extract_strided_slice %36 {offsets = [0, 24], sizes = [16, 8], strides = [1, 1]} : vector<16x32xf32> to vector<16x8xf32>
    %88 = vector.extract_strided_slice %37 {offsets = [0, 24], sizes = [16, 8], strides = [1, 1]} : vector<16x32xf32> to vector<16x8xf32>
    %89 = vector.extract_strided_slice %38 {offsets = [0, 24], sizes = [16, 8], strides = [1, 1]} : vector<16x32xf32> to vector<16x8xf32>
    %cst_54 = arith.constant dense<0.000000e+00> : vector<16x16xf32>
    %90 = tpu.matmul %87, %88, %cst_54 {dimension_numbers = #tpu.dot_dimension_numbers<[1], [1], [0], [0], [0, 0, 1, 0], [], []>} : vector<16x8xf32>, vector<16x8xf32>, vector<16x16xf32> -> vector<16x16xf32>
    %91 = arith.addf %90, %8 : vector<16x16xf32>
    %cst_55 = arith.constant dense<0xFF800000> : vector<16xf32>
    %92 = vector.multi_reduction <maximumf>, %91, %cst_55 [1] : vector<16x16xf32> to vector<16xf32>
    %93 = vector.shape_cast %92 : vector<16xf32> to vector<16x1xf32>
    %94 = vector.broadcast %93 : vector<16x1xf32> to vector<16x16xf32>
    %95 = arith.subf %91, %94 : vector<16x16xf32>
    %96 = math.exp %95 : vector<16x16xf32>
    %cst_56 = arith.constant dense<0.000000e+00> : vector<16xf32>
    %97 = vector.multi_reduction <add>, %96, %cst_56 [1] : vector<16x16xf32> to vector<16xf32>
    %98 = vector.shape_cast %97 : vector<16xf32> to vector<16x1xf32>
    %99 = tpu.reciprocal %98 {approx = true} : vector<16x1xf32> -> vector<16x1xf32>
    %100 = vector.broadcast %99 : vector<16x1xf32> to vector<16x16xf32>
    %101 = arith.mulf %96, %100 : vector<16x16xf32>
    %cst_57 = arith.constant dense<0.000000e+00> : vector<16x8xf32>
    %102 = tpu.matmul %101, %89, %cst_57 {dimension_numbers = #tpu.dot_dimension_numbers<[1], [0], [0], [1], [0, 0, 1, 1], [], []>} : vector<16x16xf32>, vector<16x8xf32>, vector<16x8xf32> -> vector<16x8xf32>
    %103 = tpu.concatenate %54, %70, %86, %102 in 1 : vector<16x8xf32>, vector<16x8xf32>, vector<16x8xf32>, vector<16x8xf32> -> vector<16x32xf32>
    %cst_58 = arith.constant dense<0.000000e+00> : vector<16x32xf32>
    %104 = tpu.matmul %103, %14, %cst_58 {dimension_numbers = #tpu.dot_dimension_numbers<[1], [0], [0], [1], [0, 0, 1, 1], [], []>} : vector<16x32xf32>, vector<32x32xf32>, vector<16x32xf32> -> vector<16x32xf32>
    %105 = vector.broadcast %16 : vector<1x32xf32> to vector<16x32xf32>
    %106 = arith.addf %104, %105 : vector<16x32xf32>
    %107 = arith.addf %7, %106 : vector<16x32xf32>
    %cst_59 = arith.constant dense<0.000000e+00> : vector<16xf32>
    %108 = vector.multi_reduction <add>, %107, %cst_59 [1] : vector<16x32xf32> to vector<16xf32>
    %109 = vector.shape_cast %108 : vector<16xf32> to vector<16x1xf32>
    %cst_60 = arith.constant 3.200000e+01 : f32
    %110 = vector.broadcast %cst_60 : f32 to vector<16x1xf32>
    %111 = arith.divf %109, %110 : vector<16x1xf32>
    %112 = vector.broadcast %111 : vector<16x1xf32> to vector<16x32xf32>
    %113 = arith.subf %107, %112 : vector<16x32xf32>
    %114 = arith.mulf %113, %113 : vector<16x32xf32>
    %cst_61 = arith.constant dense<0.000000e+00> : vector<16xf32>
    %115 = vector.multi_reduction <add>, %114, %cst_61 [1] : vector<16x32xf32> to vector<16xf32>
    %116 = vector.shape_cast %115 : vector<16xf32> to vector<16x1xf32>
    %cst_62 = arith.constant 3.200000e+01 : f32
    %117 = vector.broadcast %cst_62 : f32 to vector<16x1xf32>
    %118 = arith.divf %116, %117 : vector<16x1xf32>
    %119 = vector.broadcast %111 : vector<16x1xf32> to vector<16x32xf32>
    %120 = arith.subf %107, %119 : vector<16x32xf32>
    %cst_63 = arith.constant 9.99999974E-6 : f32
    %121 = vector.broadcast %cst_63 : f32 to vector<16x1xf32>
    %122 = arith.addf %118, %121 : vector<16x1xf32>
    %123 = math.rsqrt %122 : vector<16x1xf32>
    %124 = vector.broadcast %123 : vector<16x1xf32> to vector<16x32xf32>
    %125 = arith.mulf %120, %124 : vector<16x32xf32>
    %126 = vector.broadcast %18 : vector<1x32xf32> to vector<16x32xf32>
    %127 = arith.mulf %125, %126 : vector<16x32xf32>
    %128 = vector.broadcast %20 : vector<1x32xf32> to vector<16x32xf32>
    %129 = arith.addf %127, %128 : vector<16x32xf32>
    %cst_64 = arith.constant dense<0.000000e+00> : vector<16x64xf32>
    %130 = tpu.matmul %129, %22, %cst_64 {dimension_numbers = #tpu.dot_dimension_numbers<[1], [0], [0], [1], [0, 0, 1, 1], [], []>} : vector<16x32xf32>, vector<32x64xf32>, vector<16x64xf32> -> vector<16x64xf32>
    %131 = vector.broadcast %24 : vector<1x64xf32> to vector<16x64xf32>
    %132 = arith.addf %130, %131 : vector<16x64xf32>
    %cst_65 = arith.constant 0.000000e+00 : f32
    %133 = vector.broadcast %cst_65 : f32 to vector<16x64xf32>
    %134 = arith.maximumf %132, %133 : vector<16x64xf32>
    %cst_66 = arith.constant dense<0.000000e+00> : vector<16x32xf32>
    %135 = tpu.matmul %134, %26, %cst_66 {dimension_numbers = #tpu.dot_dimension_numbers<[1], [0], [0], [1], [0, 0, 1, 1], [], []>} : vector<16x64xf32>, vector<64x32xf32>, vector<16x32xf32> -> vector<16x32xf32>
    %136 = vector.broadcast %28 : vector<1x32xf32> to vector<16x32xf32>
    %137 = arith.addf %135, %136 : vector<16x32xf32>
    %138 = arith.addf %129, %137 : vector<16x32xf32>
    %cst_67 = arith.constant dense<0.000000e+00> : vector<16xf32>
    %139 = vector.multi_reduction <add>, %138, %cst_67 [1] : vector<16x32xf32> to vector<16xf32>
    %140 = vector.shape_cast %139 : vector<16xf32> to vector<16x1xf32>
    %cst_68 = arith.constant 3.200000e+01 : f32
    %141 = vector.broadcast %cst_68 : f32 to vector<16x1xf32>
    %142 = arith.divf %140, %141 : vector<16x1xf32>
    %143 = vector.broadcast %142 : vector<16x1xf32> to vector<16x32xf32>
    %144 = arith.subf %138, %143 : vector<16x32xf32>
    %145 = arith.mulf %144, %144 : vector<16x32xf32>
    %cst_69 = arith.constant dense<0.000000e+00> : vector<16xf32>
    %146 = vector.multi_reduction <add>, %145, %cst_69 [1] : vector<16x32xf32> to vector<16xf32>
    %147 = vector.shape_cast %146 : vector<16xf32> to vector<16x1xf32>
    %cst_70 = arith.constant 3.200000e+01 : f32
    %148 = vector.broadcast %cst_70 : f32 to vector<16x1xf32>
    %149 = arith.divf %147, %148 : vector<16x1xf32>
    %150 = vector.broadcast %142 : vector<16x1xf32> to vector<16x32xf32>
    %151 = arith.subf %138, %150 : vector<16x32xf32>
    %cst_71 = arith.constant 9.99999974E-6 : f32
    %152 = vector.broadcast %cst_71 : f32 to vector<16x1xf32>
    %153 = arith.addf %149, %152 : vector<16x1xf32>
    %154 = math.rsqrt %153 : vector<16x1xf32>
    %155 = vector.broadcast %154 : vector<16x1xf32> to vector<16x32xf32>
    %156 = arith.mulf %151, %155 : vector<16x32xf32>
    %157 = vector.broadcast %30 : vector<1x32xf32> to vector<16x32xf32>
    %158 = arith.mulf %156, %157 : vector<16x32xf32>
    %159 = vector.broadcast %32 : vector<1x32xf32> to vector<16x32xf32>
    %160 = arith.addf %158, %159 : vector<16x32xf32>
    %c1 = arith.constant 1 : index
    %c0_72 = arith.constant 0 : index
    %c0_73 = arith.constant 0 : index
    %161 = vector.load %arg3[%c1, %c0_72, %c0_73] : memref<2x32x96xf32, #tpu.memory_space<vmem>>, vector<1x32x96xf32>
    %162 = vector.shape_cast %161 : vector<1x32x96xf32> to vector<32x96xf32>
    %c1_74 = arith.constant 1 : index
    %c0_75 = arith.constant 0 : index
    %c0_76 = arith.constant 0 : index
    %163 = vector.load %arg4[%c1_74, %c0_75, %c0_76] : memref<2x1x96xf32, #tpu.memory_space<vmem>>, vector<1x1x96xf32>
    %164 = vector.shape_cast %163 : vector<1x1x96xf32> to vector<1x96xf32>
    %c1_77 = arith.constant 1 : index
    %c0_78 = arith.constant 0 : index
    %c0_79 = arith.constant 0 : index
    %165 = vector.load %arg5[%c1_77, %c0_78, %c0_79] : memref<2x32x32xf32, #tpu.memory_space<vmem>>, vector<1x32x32xf32>
    %166 = vector.shape_cast %165 : vector<1x32x32xf32> to vector<32x32xf32>
    %c1_80 = arith.constant 1 : index
    %c0_81 = arith.constant 0 : index
    %c0_82 = arith.constant 0 : index
    %167 = vector.load %arg6[%c1_80, %c0_81, %c0_82] : memref<2x1x32xf32, #tpu.memory_space<vmem>>, vector<1x1x32xf32>
    %168 = vector.shape_cast %167 : vector<1x1x32xf32> to vector<1x32xf32>
    %c1_83 = arith.constant 1 : index
    %c0_84 = arith.constant 0 : index
    %c0_85 = arith.constant 0 : index
    %169 = vector.load %arg7[%c1_83, %c0_84, %c0_85] : memref<2x1x32xf32, #tpu.memory_space<vmem>>, vector<1x1x32xf32>
    %170 = vector.shape_cast %169 : vector<1x1x32xf32> to vector<1x32xf32>
    %c1_86 = arith.constant 1 : index
    %c0_87 = arith.constant 0 : index
    %c0_88 = arith.constant 0 : index
    %171 = vector.load %arg8[%c1_86, %c0_87, %c0_88] : memref<2x1x32xf32, #tpu.memory_space<vmem>>, vector<1x1x32xf32>
    %172 = vector.shape_cast %171 : vector<1x1x32xf32> to vector<1x32xf32>
    %c1_89 = arith.constant 1 : index
    %c0_90 = arith.constant 0 : index
    %c0_91 = arith.constant 0 : index
    %173 = vector.load %arg9[%c1_89, %c0_90, %c0_91] : memref<2x32x64xf32, #tpu.memory_space<vmem>>, vector<1x32x64xf32>
    %174 = vector.shape_cast %173 : vector<1x32x64xf32> to vector<32x64xf32>
    %c1_92 = arith.constant 1 : index
    %c0_93 = arith.constant 0 : index
    %c0_94 = arith.constant 0 : index
    %175 = vector.load %arg10[%c1_92, %c0_93, %c0_94] : memref<2x1x64xf32, #tpu.memory_space<vmem>>, vector<1x1x64xf32>
    %176 = vector.shape_cast %175 : vector<1x1x64xf32> to vector<1x64xf32>
    %c1_95 = arith.constant 1 : index
    %c0_96 = arith.constant 0 : index
    %c0_97 = arith.constant 0 : index
    %177 = vector.load %arg11[%c1_95, %c0_96, %c0_97] : memref<2x64x32xf32, #tpu.memory_space<vmem>>, vector<1x64x32xf32>
    %178 = vector.shape_cast %177 : vector<1x64x32xf32> to vector<64x32xf32>
    %c1_98 = arith.constant 1 : index
    %c0_99 = arith.constant 0 : index
    %c0_100 = arith.constant 0 : index
    %179 = vector.load %arg12[%c1_98, %c0_99, %c0_100] : memref<2x1x32xf32, #tpu.memory_space<vmem>>, vector<1x1x32xf32>
    %180 = vector.shape_cast %179 : vector<1x1x32xf32> to vector<1x32xf32>
    %c1_101 = arith.constant 1 : index
    %c0_102 = arith.constant 0 : index
    %c0_103 = arith.constant 0 : index
    %181 = vector.load %arg13[%c1_101, %c0_102, %c0_103] : memref<2x1x32xf32, #tpu.memory_space<vmem>>, vector<1x1x32xf32>
    %182 = vector.shape_cast %181 : vector<1x1x32xf32> to vector<1x32xf32>
    %c1_104 = arith.constant 1 : index
    %c0_105 = arith.constant 0 : index
    %c0_106 = arith.constant 0 : index
    %183 = vector.load %arg14[%c1_104, %c0_105, %c0_106] : memref<2x1x32xf32, #tpu.memory_space<vmem>>, vector<1x1x32xf32>
    %184 = vector.shape_cast %183 : vector<1x1x32xf32> to vector<1x32xf32>
    %cst_107 = arith.constant dense<0.000000e+00> : vector<16x96xf32>
    %185 = tpu.matmul %160, %162, %cst_107 {dimension_numbers = #tpu.dot_dimension_numbers<[1], [0], [0], [1], [0, 0, 1, 1], [], []>} : vector<16x32xf32>, vector<32x96xf32>, vector<16x96xf32> -> vector<16x96xf32>
    %186 = vector.broadcast %164 : vector<1x96xf32> to vector<16x96xf32>
    %187 = arith.addf %185, %186 : vector<16x96xf32>
    %188 = vector.extract_strided_slice %187 {offsets = [0, 0], sizes = [16, 32], strides = [1, 1]} : vector<16x96xf32> to vector<16x32xf32>
    %189 = vector.extract_strided_slice %187 {offsets = [0, 32], sizes = [16, 32], strides = [1, 1]} : vector<16x96xf32> to vector<16x32xf32>
    %190 = vector.extract_strided_slice %187 {offsets = [0, 64], sizes = [16, 32], strides = [1, 1]} : vector<16x96xf32> to vector<16x32xf32>
    %191 = vector.extract_strided_slice %188 {offsets = [0, 0], sizes = [16, 8], strides = [1, 1]} : vector<16x32xf32> to vector<16x8xf32>
    %192 = vector.extract_strided_slice %189 {offsets = [0, 0], sizes = [16, 8], strides = [1, 1]} : vector<16x32xf32> to vector<16x8xf32>
    %193 = vector.extract_strided_slice %190 {offsets = [0, 0], sizes = [16, 8], strides = [1, 1]} : vector<16x32xf32> to vector<16x8xf32>
    %cst_108 = arith.constant dense<0.000000e+00> : vector<16x16xf32>
    %194 = tpu.matmul %191, %192, %cst_108 {dimension_numbers = #tpu.dot_dimension_numbers<[1], [1], [0], [0], [0, 0, 1, 0], [], []>} : vector<16x8xf32>, vector<16x8xf32>, vector<16x16xf32> -> vector<16x16xf32>
    %195 = arith.addf %194, %8 : vector<16x16xf32>
    %cst_109 = arith.constant dense<0xFF800000> : vector<16xf32>
    %196 = vector.multi_reduction <maximumf>, %195, %cst_109 [1] : vector<16x16xf32> to vector<16xf32>
    %197 = vector.shape_cast %196 : vector<16xf32> to vector<16x1xf32>
    %198 = vector.broadcast %197 : vector<16x1xf32> to vector<16x16xf32>
    %199 = arith.subf %195, %198 : vector<16x16xf32>
    %200 = math.exp %199 : vector<16x16xf32>
    %cst_110 = arith.constant dense<0.000000e+00> : vector<16xf32>
    %201 = vector.multi_reduction <add>, %200, %cst_110 [1] : vector<16x16xf32> to vector<16xf32>
    %202 = vector.shape_cast %201 : vector<16xf32> to vector<16x1xf32>
    %203 = tpu.reciprocal %202 {approx = true} : vector<16x1xf32> -> vector<16x1xf32>
    %204 = vector.broadcast %203 : vector<16x1xf32> to vector<16x16xf32>
    %205 = arith.mulf %200, %204 : vector<16x16xf32>
    %cst_111 = arith.constant dense<0.000000e+00> : vector<16x8xf32>
    %206 = tpu.matmul %205, %193, %cst_111 {dimension_numbers = #tpu.dot_dimension_numbers<[1], [0], [0], [1], [0, 0, 1, 1], [], []>} : vector<16x16xf32>, vector<16x8xf32>, vector<16x8xf32> -> vector<16x8xf32>
    %207 = vector.extract_strided_slice %188 {offsets = [0, 8], sizes = [16, 8], strides = [1, 1]} : vector<16x32xf32> to vector<16x8xf32>
    %208 = vector.extract_strided_slice %189 {offsets = [0, 8], sizes = [16, 8], strides = [1, 1]} : vector<16x32xf32> to vector<16x8xf32>
    %209 = vector.extract_strided_slice %190 {offsets = [0, 8], sizes = [16, 8], strides = [1, 1]} : vector<16x32xf32> to vector<16x8xf32>
    %cst_112 = arith.constant dense<0.000000e+00> : vector<16x16xf32>
    %210 = tpu.matmul %207, %208, %cst_112 {dimension_numbers = #tpu.dot_dimension_numbers<[1], [1], [0], [0], [0, 0, 1, 0], [], []>} : vector<16x8xf32>, vector<16x8xf32>, vector<16x16xf32> -> vector<16x16xf32>
    %211 = arith.addf %210, %8 : vector<16x16xf32>
    %cst_113 = arith.constant dense<0xFF800000> : vector<16xf32>
    %212 = vector.multi_reduction <maximumf>, %211, %cst_113 [1] : vector<16x16xf32> to vector<16xf32>
    %213 = vector.shape_cast %212 : vector<16xf32> to vector<16x1xf32>
    %214 = vector.broadcast %213 : vector<16x1xf32> to vector<16x16xf32>
    %215 = arith.subf %211, %214 : vector<16x16xf32>
    %216 = math.exp %215 : vector<16x16xf32>
    %cst_114 = arith.constant dense<0.000000e+00> : vector<16xf32>
    %217 = vector.multi_reduction <add>, %216, %cst_114 [1] : vector<16x16xf32> to vector<16xf32>
    %218 = vector.shape_cast %217 : vector<16xf32> to vector<16x1xf32>
    %219 = tpu.reciprocal %218 {approx = true} : vector<16x1xf32> -> vector<16x1xf32>
    %220 = vector.broadcast %219 : vector<16x1xf32> to vector<16x16xf32>
    %221 = arith.mulf %216, %220 : vector<16x16xf32>
    %cst_115 = arith.constant dense<0.000000e+00> : vector<16x8xf32>
    %222 = tpu.matmul %221, %209, %cst_115 {dimension_numbers = #tpu.dot_dimension_numbers<[1], [0], [0], [1], [0, 0, 1, 1], [], []>} : vector<16x16xf32>, vector<16x8xf32>, vector<16x8xf32> -> vector<16x8xf32>
    %223 = vector.extract_strided_slice %188 {offsets = [0, 16], sizes = [16, 8], strides = [1, 1]} : vector<16x32xf32> to vector<16x8xf32>
    %224 = vector.extract_strided_slice %189 {offsets = [0, 16], sizes = [16, 8], strides = [1, 1]} : vector<16x32xf32> to vector<16x8xf32>
    %225 = vector.extract_strided_slice %190 {offsets = [0, 16], sizes = [16, 8], strides = [1, 1]} : vector<16x32xf32> to vector<16x8xf32>
    %cst_116 = arith.constant dense<0.000000e+00> : vector<16x16xf32>
    %226 = tpu.matmul %223, %224, %cst_116 {dimension_numbers = #tpu.dot_dimension_numbers<[1], [1], [0], [0], [0, 0, 1, 0], [], []>} : vector<16x8xf32>, vector<16x8xf32>, vector<16x16xf32> -> vector<16x16xf32>
    %227 = arith.addf %226, %8 : vector<16x16xf32>
    %cst_117 = arith.constant dense<0xFF800000> : vector<16xf32>
    %228 = vector.multi_reduction <maximumf>, %227, %cst_117 [1] : vector<16x16xf32> to vector<16xf32>
    %229 = vector.shape_cast %228 : vector<16xf32> to vector<16x1xf32>
    %230 = vector.broadcast %229 : vector<16x1xf32> to vector<16x16xf32>
    %231 = arith.subf %227, %230 : vector<16x16xf32>
    %232 = math.exp %231 : vector<16x16xf32>
    %cst_118 = arith.constant dense<0.000000e+00> : vector<16xf32>
    %233 = vector.multi_reduction <add>, %232, %cst_118 [1] : vector<16x16xf32> to vector<16xf32>
    %234 = vector.shape_cast %233 : vector<16xf32> to vector<16x1xf32>
    %235 = tpu.reciprocal %234 {approx = true} : vector<16x1xf32> -> vector<16x1xf32>
    %236 = vector.broadcast %235 : vector<16x1xf32> to vector<16x16xf32>
    %237 = arith.mulf %232, %236 : vector<16x16xf32>
    %cst_119 = arith.constant dense<0.000000e+00> : vector<16x8xf32>
    %238 = tpu.matmul %237, %225, %cst_119 {dimension_numbers = #tpu.dot_dimension_numbers<[1], [0], [0], [1], [0, 0, 1, 1], [], []>} : vector<16x16xf32>, vector<16x8xf32>, vector<16x8xf32> -> vector<16x8xf32>
    %239 = vector.extract_strided_slice %188 {offsets = [0, 24], sizes = [16, 8], strides = [1, 1]} : vector<16x32xf32> to vector<16x8xf32>
    %240 = vector.extract_strided_slice %189 {offsets = [0, 24], sizes = [16, 8], strides = [1, 1]} : vector<16x32xf32> to vector<16x8xf32>
    %241 = vector.extract_strided_slice %190 {offsets = [0, 24], sizes = [16, 8], strides = [1, 1]} : vector<16x32xf32> to vector<16x8xf32>
    %cst_120 = arith.constant dense<0.000000e+00> : vector<16x16xf32>
    %242 = tpu.matmul %239, %240, %cst_120 {dimension_numbers = #tpu.dot_dimension_numbers<[1], [1], [0], [0], [0, 0, 1, 0], [], []>} : vector<16x8xf32>, vector<16x8xf32>, vector<16x16xf32> -> vector<16x16xf32>
    %243 = arith.addf %242, %8 : vector<16x16xf32>
    %cst_121 = arith.constant dense<0xFF800000> : vector<16xf32>
    %244 = vector.multi_reduction <maximumf>, %243, %cst_121 [1] : vector<16x16xf32> to vector<16xf32>
    %245 = vector.shape_cast %244 : vector<16xf32> to vector<16x1xf32>
    %246 = vector.broadcast %245 : vector<16x1xf32> to vector<16x16xf32>
    %247 = arith.subf %243, %246 : vector<16x16xf32>
    %248 = math.exp %247 : vector<16x16xf32>
    %cst_122 = arith.constant dense<0.000000e+00> : vector<16xf32>
    %249 = vector.multi_reduction <add>, %248, %cst_122 [1] : vector<16x16xf32> to vector<16xf32>
    %250 = vector.shape_cast %249 : vector<16xf32> to vector<16x1xf32>
    %251 = tpu.reciprocal %250 {approx = true} : vector<16x1xf32> -> vector<16x1xf32>
    %252 = vector.broadcast %251 : vector<16x1xf32> to vector<16x16xf32>
    %253 = arith.mulf %248, %252 : vector<16x16xf32>
    %cst_123 = arith.constant dense<0.000000e+00> : vector<16x8xf32>
    %254 = tpu.matmul %253, %241, %cst_123 {dimension_numbers = #tpu.dot_dimension_numbers<[1], [0], [0], [1], [0, 0, 1, 1], [], []>} : vector<16x16xf32>, vector<16x8xf32>, vector<16x8xf32> -> vector<16x8xf32>
    %255 = tpu.concatenate %206, %222, %238, %254 in 1 : vector<16x8xf32>, vector<16x8xf32>, vector<16x8xf32>, vector<16x8xf32> -> vector<16x32xf32>
    %cst_124 = arith.constant dense<0.000000e+00> : vector<16x32xf32>
    %256 = tpu.matmul %255, %166, %cst_124 {dimension_numbers = #tpu.dot_dimension_numbers<[1], [0], [0], [1], [0, 0, 1, 1], [], []>} : vector<16x32xf32>, vector<32x32xf32>, vector<16x32xf32> -> vector<16x32xf32>
    %257 = vector.broadcast %168 : vector<1x32xf32> to vector<16x32xf32>
    %258 = arith.addf %256, %257 : vector<16x32xf32>
    %259 = arith.addf %160, %258 : vector<16x32xf32>
    %cst_125 = arith.constant dense<0.000000e+00> : vector<16xf32>
    %260 = vector.multi_reduction <add>, %259, %cst_125 [1] : vector<16x32xf32> to vector<16xf32>
    %261 = vector.shape_cast %260 : vector<16xf32> to vector<16x1xf32>
    %cst_126 = arith.constant 3.200000e+01 : f32
    %262 = vector.broadcast %cst_126 : f32 to vector<16x1xf32>
    %263 = arith.divf %261, %262 : vector<16x1xf32>
    %264 = vector.broadcast %263 : vector<16x1xf32> to vector<16x32xf32>
    %265 = arith.subf %259, %264 : vector<16x32xf32>
    %266 = arith.mulf %265, %265 : vector<16x32xf32>
    %cst_127 = arith.constant dense<0.000000e+00> : vector<16xf32>
    %267 = vector.multi_reduction <add>, %266, %cst_127 [1] : vector<16x32xf32> to vector<16xf32>
    %268 = vector.shape_cast %267 : vector<16xf32> to vector<16x1xf32>
    %cst_128 = arith.constant 3.200000e+01 : f32
    %269 = vector.broadcast %cst_128 : f32 to vector<16x1xf32>
    %270 = arith.divf %268, %269 : vector<16x1xf32>
    %271 = vector.broadcast %263 : vector<16x1xf32> to vector<16x32xf32>
    %272 = arith.subf %259, %271 : vector<16x32xf32>
    %cst_129 = arith.constant 9.99999974E-6 : f32
    %273 = vector.broadcast %cst_129 : f32 to vector<16x1xf32>
    %274 = arith.addf %270, %273 : vector<16x1xf32>
    %275 = math.rsqrt %274 : vector<16x1xf32>
    %276 = vector.broadcast %275 : vector<16x1xf32> to vector<16x32xf32>
    %277 = arith.mulf %272, %276 : vector<16x32xf32>
    %278 = vector.broadcast %170 : vector<1x32xf32> to vector<16x32xf32>
    %279 = arith.mulf %277, %278 : vector<16x32xf32>
    %280 = vector.broadcast %172 : vector<1x32xf32> to vector<16x32xf32>
    %281 = arith.addf %279, %280 : vector<16x32xf32>
    %cst_130 = arith.constant dense<0.000000e+00> : vector<16x64xf32>
    %282 = tpu.matmul %281, %174, %cst_130 {dimension_numbers = #tpu.dot_dimension_numbers<[1], [0], [0], [1], [0, 0, 1, 1], [], []>} : vector<16x32xf32>, vector<32x64xf32>, vector<16x64xf32> -> vector<16x64xf32>
    %283 = vector.broadcast %176 : vector<1x64xf32> to vector<16x64xf32>
    %284 = arith.addf %282, %283 : vector<16x64xf32>
    %cst_131 = arith.constant 0.000000e+00 : f32
    %285 = vector.broadcast %cst_131 : f32 to vector<16x64xf32>
    %286 = arith.maximumf %284, %285 : vector<16x64xf32>
    %cst_132 = arith.constant dense<0.000000e+00> : vector<16x32xf32>
    %287 = tpu.matmul %286, %178, %cst_132 {dimension_numbers = #tpu.dot_dimension_numbers<[1], [0], [0], [1], [0, 0, 1, 1], [], []>} : vector<16x64xf32>, vector<64x32xf32>, vector<16x32xf32> -> vector<16x32xf32>
    %288 = vector.broadcast %180 : vector<1x32xf32> to vector<16x32xf32>
    %289 = arith.addf %287, %288 : vector<16x32xf32>
    %290 = arith.addf %281, %289 : vector<16x32xf32>
    %cst_133 = arith.constant dense<0.000000e+00> : vector<16xf32>
    %291 = vector.multi_reduction <add>, %290, %cst_133 [1] : vector<16x32xf32> to vector<16xf32>
    %292 = vector.shape_cast %291 : vector<16xf32> to vector<16x1xf32>
    %cst_134 = arith.constant 3.200000e+01 : f32
    %293 = vector.broadcast %cst_134 : f32 to vector<16x1xf32>
    %294 = arith.divf %292, %293 : vector<16x1xf32>
    %295 = vector.broadcast %294 : vector<16x1xf32> to vector<16x32xf32>
    %296 = arith.subf %290, %295 : vector<16x32xf32>
    %297 = arith.mulf %296, %296 : vector<16x32xf32>
    %cst_135 = arith.constant dense<0.000000e+00> : vector<16xf32>
    %298 = vector.multi_reduction <add>, %297, %cst_135 [1] : vector<16x32xf32> to vector<16xf32>
    %299 = vector.shape_cast %298 : vector<16xf32> to vector<16x1xf32>
    %cst_136 = arith.constant 3.200000e+01 : f32
    %300 = vector.broadcast %cst_136 : f32 to vector<16x1xf32>
    %301 = arith.divf %299, %300 : vector<16x1xf32>
    %302 = vector.broadcast %294 : vector<16x1xf32> to vector<16x32xf32>
    %303 = arith.subf %290, %302 : vector<16x32xf32>
    %cst_137 = arith.constant 9.99999974E-6 : f32
    %304 = vector.broadcast %cst_137 : f32 to vector<16x1xf32>
    %305 = arith.addf %301, %304 : vector<16x1xf32>
    %306 = math.rsqrt %305 : vector<16x1xf32>
    %307 = vector.broadcast %306 : vector<16x1xf32> to vector<16x32xf32>
    %308 = arith.mulf %303, %307 : vector<16x32xf32>
    %309 = vector.broadcast %182 : vector<1x32xf32> to vector<16x32xf32>
    %310 = arith.mulf %308, %309 : vector<16x32xf32>
    %311 = vector.broadcast %184 : vector<1x32xf32> to vector<16x32xf32>
    %312 = arith.addf %310, %311 : vector<16x32xf32>
    %c0_138 = arith.constant 0 : index
    %c0_139 = arith.constant 0 : index
    %313 = vector.load %arg15[%c0_138, %c0_139] : memref<16x32xf32, #tpu.memory_space<vmem>>, vector<16x32xf32>
    tpu.vector_store %arg15[%c0_138, %c0_139], %312 {strides = array<i32>} : memref<16x32xf32, #tpu.memory_space<vmem>>, vector<16x32xf32>,
    return
  }
}

</mosaic_0001>

<llo_original>
// kernel: tpu_custom_call.1
$region0: #{tpu_custom_call.1}
  #allocation0 [shape = 'u32[]', space=smem, size = 0x4, offset = 0x4, fixed_abs, tag = 'smem constant byte address 0x4 - core index']
  #allocation1 [shape = 'u32[144,128]{1,0:T(1,128)}', space=vmem, size = 0x12000, scoped, tag = 'internal scratch']
  %s0 = inlined_call_operand.vmem [shape: s32[16,1], index: 0, kind: input, shape index: {}]
  %s1 = inlined_call_operand.vmem [shape: f32[16,16], index: 1, kind: input, shape index: {}]
  %s2 = inlined_call_operand.vmem [shape: f32[50,32], index: 2, kind: input, shape index: {}]
  %s3 = inlined_call_operand.vmem [shape: f32[2,32,96], index: 3, kind: input, shape index: {}]
  %s4 = inlined_call_operand.vmem [shape: f32[2,1,96], index: 4, kind: input, shape index: {}]
  %s5 = inlined_call_operand.vmem [shape: f32[2,32,32], index: 5, kind: input, shape index: {}]
  %s6 = inlined_call_operand.vmem [shape: f32[2,1,32], index: 6, kind: input, shape index: {}]
  %s7 = inlined_call_operand.vmem [shape: f32[2,1,32], index: 7, kind: input, shape index: {}]
  %s8 = inlined_call_operand.vmem [shape: f32[2,1,32], index: 8, kind: input, shape index: {}]
  %s9 = inlined_call_operand.vmem [shape: f32[2,32,64], index: 9, kind: input, shape index: {}]
  %s10 = inlined_call_operand.vmem [shape: f32[2,1,64], index: 10, kind: input, shape index: {}]
  %s11 = inlined_call_operand.vmem [shape: f32[2,64,32], index: 11, kind: input, shape index: {}]
  %s12 = inlined_call_operand.vmem [shape: f32[2,1,32], index: 12, kind: input, shape index: {}]
  %s13 = inlined_call_operand.vmem [shape: f32[2,1,32], index: 13, kind: input, shape index: {}]
  %s14 = inlined_call_operand.vmem [shape: f32[2,1,32], index: 14, kind: input, shape index: {}]
  %s15 = inlined_call_operand.hbm [shape: f32[16,32], index: 15, kind: output, shape index: {}]
  %s16 = sld [smem:[#allocation0]]
  $region70: #{tpu_custom_call.1} parent=0
    _
  %s18 = ssub.s32 1, %s16
  %s19 = scalar_select 0, %s18, %s16
  $region1: #{tpu_custom_call.1} parent=0
    #allocation2 [shape = 'u8[8192]{0}', space=vmem, size = 0x2000, scoped, tag = 'output window, operand 0, single buffered']
    #allocation3 [shape = 's32[1]{0}', space=sflag, size = 0x4, scoped, tag = 'scoped memory for tpu_custom_call.1']
    %20 = vsyncpa [#allocation3], 0
    // Predicated region
    $region2: #{tpu_custom_call.1} parent=1 // pred_check
      _
    $region3: #{tpu_custom_call.1} parent=1 // pred_check_branch
      %22 = sbr.rel (0) target = $region5
    $region4: #{tpu_custom_call.1} parent=1 // pred_region
      _
    $region5: #{tpu_custom_call.1} parent=1 // pred_fallthru
      _
    // Predicated region
    $region6: #{tpu_custom_call.1} parent=1 // pred_check
      _
    $region7: #{tpu_custom_call.1} parent=1 // pred_check_branch
      %24 = sbr.rel (0) target = $region9
    $region8: #{tpu_custom_call.1} parent=1 // pred_region
      _
    $region9: #{tpu_custom_call.1} parent=1 // pred_fallthru
      _
    // Predicated region
    $region10: #{tpu_custom_call.1} parent=1 // pred_check
      _
    $region11: #{tpu_custom_call.1} parent=1 // pred_check_branch
      %26 = sbr.rel (0) target = $region13
    $region12: #{tpu_custom_call.1} parent=1 // pred_region
      _
    $region13: #{tpu_custom_call.1} parent=1 // pred_fallthru
      _
    // Predicated region
    $region14: #{tpu_custom_call.1} parent=1 // pred_check
      _
    $region15: #{tpu_custom_call.1} parent=1 // pred_check_branch
      %28 = sbr.rel (0) target = $region17
    $region16: #{tpu_custom_call.1} parent=1 // pred_region
      _
    $region17: #{tpu_custom_call.1} parent=1 // pred_fallthru
      _
    // Predicated region
    $region18: #{tpu_custom_call.1} parent=1 // pred_check
      _
    $region19: #{tpu_custom_call.1} parent=1 // pred_check_branch
      %30 = sbr.rel (0) target = $region21
    $region20: #{tpu_custom_call.1} parent=1 // pred_region
      _
    $region21: #{tpu_custom_call.1} parent=1 // pred_fallthru
      _
    // Predicated region
    $region22: #{tpu_custom_call.1} parent=1 // pred_check
      _
    $region23: #{tpu_custom_call.1} parent=1 // pred_check_branch
      %32 = sbr.rel (0) target = $region25
    $region24: #{tpu_custom_call.1} parent=1 // pred_region
      _
    $region25: #{tpu_custom_call.1} parent=1 // pred_fallthru
      _
    // Predicated region
    $region26: #{tpu_custom_call.1} parent=1 // pred_check
      _
    $region27: #{tpu_custom_call.1} parent=1 // pred_check_branch
      %34 = sbr.rel (0) target = $region29
    $region28: #{tpu_custom_call.1} parent=1 // pred_region
      _
    $region29: #{tpu_custom_call.1} parent=1 // pred_fallthru
      _
    // Predicated region
    $region30: #{tpu_custom_call.1} parent=1 // pred_check
      _
    $region31: #{tpu_custom_call.1} parent=1 // pred_check_branch
      %36 = sbr.rel (0) target = $region33
    $region32: #{tpu_custom_call.1} parent=1 // pred_region
      _
    $region33: #{tpu_custom_call.1} parent=1 // pred_fallthru
      _
    // Predicated region
    $region34: #{tpu_custom_call.1} parent=1 // pred_check
      _
    $region35: #{tpu_custom_call.1} parent=1 // pred_check_branch
      %38 = sbr.rel (0) target = $region37
    $region36: #{tpu_custom_call.1} parent=1 // pred_region
      _
    $region37: #{tpu_custom_call.1} parent=1 // pred_fallthru
      _
    // Predicated region
    $region38: #{tpu_custom_call.1} parent=1 // pred_check
      _
    $region39: #{tpu_custom_call.1} parent=1 // pred_check_branch
      %40 = sbr.rel (0) target = $region41
    $region40: #{tpu_custom_call.1} parent=1 // pred_region
      _
    $region41: #{tpu_custom_call.1} parent=1 // pred_fallthru
      _
    // Predicated region
    $region42: #{tpu_custom_call.1} parent=1 // pred_check
      _
    $region43: #{tpu_custom_call.1} parent=1 // pred_check_branch
      %42 = sbr.rel (0) target = $region45
    $region44: #{tpu_custom_call.1} parent=1 // pred_region
      _
    $region45: #{tpu_custom_call.1} parent=1 // pred_fallthru
      _
    // Predicated region
    $region46: #{tpu_custom_call.1} parent=1 // pred_check
      _
    $region47: #{tpu_custom_call.1} parent=1 // pred_check_branch
      %44 = sbr.rel (0) target = $region49
    $region48: #{tpu_custom_call.1} parent=1 // pred_region
      _
    $region49: #{tpu_custom_call.1} parent=1 // pred_fallthru
      _
    // Predicated region
    $region50: #{tpu_custom_call.1} parent=1 // pred_check
      _
    $region51: #{tpu_custom_call.1} parent=1 // pred_check_branch
      %46 = sbr.rel (0) target = $region53
    $region52: #{tpu_custom_call.1} parent=1 // pred_region
      _
    $region53: #{tpu_custom_call.1} parent=1 // pred_fallthru
      _
    // Predicated region
    $region54: #{tpu_custom_call.1} parent=1 // pred_check
      _
    $region55: #{tpu_custom_call.1} parent=1 // pred_check_branch
      %48 = sbr.rel (0) target = $region57
    $region56: #{tpu_custom_call.1} parent=1 // pred_region
      _
    $region57: #{tpu_custom_call.1} parent=1 // pred_fallthru
      _
    // Predicated region
    $region58: #{tpu_custom_call.1} parent=1 // pred_check
      _
    $region59: #{tpu_custom_call.1} parent=1 // pred_check_branch
      %50 = sbr.rel (0) target = $region61
    $region60: #{tpu_custom_call.1} parent=1 // pred_region
      _
    $region61: #{tpu_custom_call.1} parent=1 // pred_fallthru
      _
    %v51 = vlaneseq
    %v52 = vand.u32 %v51, 127
    %v53 = vld [vmem:[%s0] sm:$0xff]
    %v54 = vld [vmem:[%s0 + $0x8] sm:$0xff]
    %55 = vset.pattern.permute.xlu0 0
    %56 = vperm.xlu0 %55, %v53
    %v57 = vpop.permute.xlu0 %56
    %58 = vset.pattern.permute.xlu0 0
    %59 = vperm.xlu0 %58, %v54
    %v60 = vpop.permute.xlu0 %59
    %vm61 = vcmp.eq.s32.totalorder %v52, %v57
    %vm62 = vcmp.eq.s32.totalorder %v52, %v60
    %v63 = vsel %vm61, 1, 0
    %v64 = vsel %vm62, 1, 0
    %v65 = vcvt.s32.f32 %v63
    %v66 = vcvt.s32.f32 %v64
    %v67 = vld [vmem:[%s2] sm:$0xff]
    %v68 = vld [vmem:[%s2 + $0x8] sm:$0xff]
    %v69 = vld [vmem:[%s2 + $0x10] sm:$0xff]
    %v70 = vld [vmem:[%s2 + $0x18] sm:$0xff]
    %v71 = vld [vmem:[%s2 + $0x20] sm:$0xff]
    %v72 = vld [vmem:[%s2 + $0x28] sm:$0xff]
    %v73 = vld [vmem:[%s2 + $0x30] sm:$0x3]
    %vm74 = vcmask 408576
    %v76 = vsel %vm74, %v65, 0
    %v79 = vsel %vm74, %v66, 0
    %vm81 = vcmask 1041408
    %v83 = vsel %vm81, %v73, 0
    %85 = vmatprep.subr.mxu0 0.0
    %86 = vmatpush1.msra.mxu0 %v67
    %87 = vmatprep.subr.mxu0 0.0
    %88 = vmatpush1.msra.mxu0 %v68
    %89 = vmatprep.subr.mxu0 0.0
    %90 = vmatpush1.msra.mxu0 %v69
    %91 = vmatprep.subr.mxu0 0.0
    %92 = vmatpush1.msra.mxu0 %v70
    %93 = vmatprep.subr.mxu0 0.0
    %94 = vmatpush1.msra.mxu0 %v71
    %95 = vmatprep.subr.mxu0 0.0
    %96 = vmatpush1.msra.mxu0 %v72
    %97 = vmatprep.subr.mxu0 0.0
    %98 = vmatpush1.msra.mxu0 %v83
    %99 = vmatprep.subr.mxu0 0.0
    %100 = vmatpush1.msra.mxu0 0.0
    %101 = vmatprep.subr.mxu0 0.0
    %102 = vmatpush1.msra.mxu0 0.0
    %103 = vmatprep.subr.mxu0 0.0
    %104 = vmatpush1.msra.mxu0 0.0
    %105 = vmatprep.subr.mxu0 0.0
    %106 = vmatpush1.msra.mxu0 0.0
    %107 = vmatprep.subr.mxu0 0.0
    %108 = vmatpush1.msra.mxu0 0.0
    %109 = vmatprep.subr.mxu0 0.0
    %110 = vmatpush1.msra.mxu0 0.0
    %111 = vmatprep.subr.mxu0 0.0
    %112 = vmatpush1.msra.mxu0 0.0
    %113 = vmatprep.subr.mxu0 0.0
    %114 = vmatpush1.msra.mxu0 0.0
    %115 = vmatprep.subr.mxu0 0.0
    %116 = vmatpush1.msra.mxu0 0.0
    %117 = vmatprep.subr.mxu0 0.0
    %118 = vmatpush1.msra.mxu0 0.0
    %119 = vmatprep.subr.mxu0 0.0
    %120 = vmatpush1.msra.mxu0 0.0
    %121 = vmatprep.subr.mxu0 0.0
    %122 = vmatpush1.msra.mxu0 0.0
    %123 = vmatprep.subr.mxu0 0.0
    %124 = vmatpush1.msra.mxu0 0.0
    %125 = vmatprep.subr.mxu0 0.0
    %126 = vmatpush1.msra.mxu0 0.0
    %127 = vmatprep.subr.mxu0 0.0
    %128 = vmatpush1.msra.mxu0 0.0
    %129 = vmatprep.subr.mxu0 0.0
    %130 = vmatpush1.msra.mxu0 0.0
    %131 = vmatprep.subr.mxu0 0.0
    %132 = vmatpush1.msra.mxu0 0.0
    %133 = vmatprep.subr.mxu0 0.0
    %134 = vmatpush1.msra.mxu0 0.0
    %135 = vmatprep.subr.mxu0 0.0
    %136 = vmatpush1.msra.mxu0 0.0
    %137 = vmatprep.subr.mxu0 0.0
    %138 = vmatpush1.msra.mxu0 0.0
    %139 = vmatprep.subr.mxu0 0.0
    %140 = vmatpush1.msra.mxu0 0.0
    %141 = vmatprep.subr.mxu0 0.0
    %142 = vmatpush1.msra.mxu0 0.0
    %143 = vmatprep.subr.mxu0 0.0
    %144 = vmatpush1.msra.mxu0 0.0
    %145 = vmatprep.subr.mxu0 0.0
    %146 = vmatpush1.msra.mxu0 0.0
    %147 = vmatprep.subr.mxu0 0.0
    %148 = vmatpush1.msra.mxu0 0.0
    %149 = vmatprep.mubr.f32.mxu0 0.0
    %150 = vmatmul.mubr.f32.gmra.mrb[0].mxu0 %v76
    %v151 = vpop.f32.mrb[0].mxu0
    %v152 = vadd.f32 0.0, %v151
    %v153 = vpop.f32.mrb[0].mxu0
    %154 = vmatprep.mubr.f32.mxu0 0.0
    %155 = vmatmul.mubr.f32.gmra.mrb[0].mxu0 %v79
    %v156 = vpop.f32.mrb[0].mxu0
    %v157 = vadd.f32 0.0, %v156
    %v158 = vpop.f32.mrb[0].mxu0
    %159 = vdwg.mxu0
    %v160 = vld [vmem:[%s1] sm:$0xff]
    %v161 = vld [vmem:[%s1 + $0x8] sm:$0xff]
    %v162 = vld [vmem:[%s3] sm:$0xff]
    %v163 = vld [vmem:[%s3 + $0x8] sm:$0xff]
    %v164 = vld [vmem:[%s3 + $0x10] sm:$0xff]
    %v165 = vld [vmem:[%s3 + $0x18] sm:$0xff]
    %v166 = vld [vmem:[%s4] sm:$0x1]
    %v167 = vld [vmem:[%s5] sm:$0xff]
    %v168 = vld [vmem:[%s5 + $0x8] sm:$0xff]
    %v169 = vld [vmem:[%s5 + $0x10] sm:$0xff]
    %v170 = vld [vmem:[%s5 + $0x18] sm:$0xff]
    %v171 = vld [vmem:[%s6] sm:$0x1]
    %v172 = vld [vmem:[%s7] sm:$0x1]
    %v173 = vld [vmem:[%s8] sm:$0x1]
    %v174 = vld [vmem:[%s9] sm:$0xff]
    %v175 = vld [vmem:[%s9 + $0x8] sm:$0xff]
    %v176 = vld [vmem:[%s9 + $0x10] sm:$0xff]
    %v177 = vld [vmem:[%s9 + $0x18] sm:$0xff]
    %v178 = vld [vmem:[%s10] sm:$0x1]
    %v179 = vld [vmem:[%s11] sm:$0xff]
    %v180 = vld [vmem:[%s11 + $0x8] sm:$0xff]
    %v181 = vld [vmem:[%s11 + $0x10] sm:$0xff]
    %v182 = vld [vmem:[%s11 + $0x18] sm:$0xff]
    %v183 = vld [vmem:[%s11 + $0x20] sm:$0xff]
    %v184 = vld [vmem:[%s11 + $0x28] sm:$0xff]
    %v185 = vld [vmem:[%s11 + $0x30] sm:$0xff]
    %v186 = vld [vmem:[%s11 + $0x38] sm:$0xff]
    %v187 = vld [vmem:[%s12] sm:$0x1]
    %v188 = vld [vmem:[%s13] sm:$0x1]
    %v189 = vld [vmem:[%s14] sm:$0x1]
    %v191 = vlaneseq
    %v192 = vshrl.u32 %v191, 7
    %v193 = vsub.s32 0, %v192
    %v194 = vrot.slane %v166, %v193
    %vm196 = vcmask 261120
    %v198 = vsel %vm196, %v152, 0
    %v201 = vsel %vm196, %v157, 0
    %203 = vmatprep.subr.mxu0 0.0
    %204 = vmatpush1.msra.mxu0 %v162
    %205 = vmatprep.subr.mxu0 0.0
    %206 = vmatpush1.msra.mxu0 %v163
    %207 = vmatprep.subr.mxu0 0.0
    %208 = vmatpush1.msra.mxu0 %v164
    %209 = vmatprep.subr.mxu0 0.0
    %210 = vmatpush1.msra.mxu0 %v165
    %211 = vmatprep.subr.mxu0 0.0
    %212 = vmatpush1.msra.mxu0 0.0
    %213 = vmatprep.subr.mxu0 0.0
    %214 = vmatpush1.msra.mxu0 0.0
    %215 = vmatprep.subr.mxu0 0.0
    %216 = vmatpush1.msra.mxu0 0.0
    %217 = vmatprep.subr.mxu0 0.0
    %218 = vmatpush1.msra.mxu0 0.0
    %219 = vmatprep.subr.mxu0 0.0
    %220 = vmatpush1.msra.mxu0 0.0
    %221 = vmatprep.subr.mxu0 0.0
    %222 = vmatpush1.msra.mxu0 0.0
    %223 = vmatprep.subr.mxu0 0.0
    %224 = vmatpush1.msra.mxu0 0.0
    %225 = vmatprep.subr.mxu0 0.0
    %226 = vmatpush1.msra.mxu0 0.0
    %227 = vmatprep.subr.mxu0 0.0
    %228 = vmatpush1.msra.mxu0 0.0
    %229 = vmatprep.subr.mxu0 0.0
    %230 = vmatpush1.msra.mxu0 0.0
    %231 = vmatprep.subr.mxu0 0.0
    %232 = vmatpush1.msra.mxu0 0.0
    %233 = vmatprep.subr.mxu0 0.0
    %234 = vmatpush1.msra.mxu0 0.0
    %235 = vmatprep.subr.mxu0 0.0
    %236 = vmatpush1.msra.mxu0 0.0
    %237 = vmatprep.subr.mxu0 0.0
    %238 = vmatpush1.msra.mxu0 0.0
    %239 = vmatprep.subr.mxu0 0.0
    %240 = vmatpush1.msra.mxu0 0.0
    %241 = vmatprep.subr.mxu0 0.0
    %242 = vmatpush1.msra.mxu0 0.0
    %243 = vmatprep.subr.mxu0 0.0
    %244 = vmatpush1.msra.mxu0 0.0
    %245 = vmatprep.subr.mxu0 0.0
    %246 = vmatpush1.msra.mxu0 0.0
    %247 = vmatprep.subr.mxu0 0.0
    %248 = vmatpush1.msra.mxu0 0.0
    %249 = vmatprep.subr.mxu0 0.0
    %250 = vmatpush1.msra.mxu0 0.0
    %251 = vmatprep.subr.mxu0 0.0
    %252 = vmatpush1.msra.mxu0 0.0
    %253 = vmatprep.subr.mxu0 0.0
    %254 = vmatpush1.msra.mxu0 0.0
    %255 = vmatprep.subr.mxu0 0.0
    %256 = vmatpush1.msra.mxu0 0.0
    %257 = vmatprep.subr.mxu0 0.0
    %258 = vmatpush1.msra.mxu0 0.0
    %259 = vmatprep.subr.mxu0 0.0
    %260 = vmatpush1.msra.mxu0 0.0
    %261 = vmatprep.subr.mxu0 0.0
    %262 = vmatpush1.msra.mxu0 0.0
    %263 = vmatprep.subr.mxu0 0.0
    %264 = vmatpush1.msra.mxu0 0.0
    %265 = vmatprep.subr.mxu0 0.0
    %266 = vmatpush1.msra.mxu0 0.0
    %267 = vmatprep.mubr.f32.mxu0 0.0
    %268 = vmatmul.mubr.f32.gmra.mrb[0].mxu0 %v198
    %v269 = vpop.f32.mrb[0].mxu0
    %v270 = vadd.f32 %v194, %v269
    %v271 = vpop.f32.mrb[0].mxu0
    %272 = vmatprep.mubr.f32.mxu0 0.0
    %273 = vmatmul.mubr.f32.gmra.mrb[0].mxu0 %v201
    %v274 = vpop.f32.mrb[0].mxu0
    %v275 = vadd.f32 %v194, %v274
    %v276 = vpop.f32.mrb[0].mxu0
    %277 = vdwg.mxu0
    %280 = vrot.lane.b32.xlu0 %v270, 96
    %v281 = vpop.permute.xlu0 %280
    %282 = vrot.lane.b32.xlu0 %v275, 96
    %v283 = vpop.permute.xlu0 %282
    %vm284 = vcmask 64512
    %v285 = vsel %vm284, %v270, 0
    %v287 = vsel %vm284, %v275, 0
    %v289 = vsel %vm284, %v281, 0
    %v291 = vsel %vm284, %v283, 0
    %293 = vmatprep.subr.mxu0 0.0
    %294 = vmatpush1.xpose.msra.mxu0 %v289
    %295 = vmatprep.subr.mxu0 0.0
    %296 = vmatpush1.xpose.msra.mxu0 %v291
    %297 = vmatprep.subr.mxu0 0.0
    %298 = vmatpush1.xpose.msra.mxu0 0.0
    %299 = vmatprep.subr.mxu0 0.0
    %300 = vmatpush1.xpose.msra.mxu0 0.0
    %301 = vmatprep.subr.mxu0 0.0
    %302 = vmatpush1.xpose.msra.mxu0 0.0
    %303 = vmatprep.subr.mxu0 0.0
    %304 = vmatpush1.xpose.msra.mxu0 0.0
    %305 = vmatprep.subr.mxu0 0.0
    %306 = vmatpush1.xpose.msra.mxu0 0.0
    %307 = vmatprep.subr.mxu0 0.0
    %308 = vmatpush1.xpose.msra.mxu0 0.0
    %309 = vmatprep.subr.mxu0 0.0
    %310 = vmatpush1.xpose.msra.mxu0 0.0
    %311 = vmatprep.subr.mxu0 0.0
    %312 = vmatpush1.xpose.msra.mxu0 0.0
    %313 = vmatprep.subr.mxu0 0.0
    %314 = vmatpush1.xpose.msra.mxu0 0.0
    %315 = vmatprep.subr.mxu0 0.0
    %316 = vmatpush1.xpose.msra.mxu0 0.0
    %317 = vmatprep.subr.mxu0 0.0
    %318 = vmatpush1.xpose.msra.mxu0 0.0
    %319 = vmatprep.subr.mxu0 0.0
    %320 = vmatpush1.xpose.msra.mxu0 0.0
    %321 = vmatprep.subr.mxu0 0.0
    %322 = vmatpush1.xpose.msra.mxu0 0.0
    %323 = vmatprep.subr.mxu0 0.0
    %324 = vmatpush1.xpose.msra.mxu0 0.0
    %325 = vmatprep.subr.mxu0 0.0
    %326 = vmatpush1.xpose.msra.mxu0 0.0
    %327 = vmatprep.subr.mxu0 0.0
    %328 = vmatpush1.xpose.msra.mxu0 0.0
    %329 = vmatprep.subr.mxu0 0.0
    %330 = vmatpush1.xpose.msra.mxu0 0.0
    %331 = vmatprep.subr.mxu0 0.0
    %332 = vmatpush1.xpose.msra.mxu0 0.0
    %333 = vmatprep.subr.mxu0 0.0
    %334 = vmatpush1.xpose.msra.mxu0 0.0
    %335 = vmatprep.subr.mxu0 0.0
    %336 = vmatpush1.xpose.msra.mxu0 0.0
    %337 = vmatprep.subr.mxu0 0.0
    %338 = vmatpush1.xpose.msra.mxu0 0.0
    %339 = vmatprep.subr.mxu0 0.0
    %340 = vmatpush1.xpose.msra.mxu0 0.0
    %341 = vmatprep.subr.mxu0 0.0
    %342 = vmatpush1.xpose.msra.mxu0 0.0
    %343 = vmatprep.subr.mxu0 0.0
    %344 = vmatpush1.xpose.msra.mxu0 0.0
    %345 = vmatprep.subr.mxu0 0.0
    %346 = vmatpush1.xpose.msra.mxu0 0.0
    %347 = vmatprep.subr.mxu0 0.0
    %348 = vmatpush1.xpose.msra.mxu0 0.0
    %349 = vmatprep.subr.mxu0 0.0
    %350 = vmatpush1.xpose.msra.mxu0 0.0
    %351 = vmatprep.subr.mxu0 0.0
    %352 = vmatpush1.xpose.msra.mxu0 0.0
    %353 = vmatprep.subr.mxu0 0.0
    %354 = vmatpush1.xpose.msra.mxu0 0.0
    %355 = vmatprep.subr.mxu0 0.0
    %356 = vmatpush1.xpose.msra.mxu0 0.0
    %357 = vmatprep.mubr.f32.mxu0 0.0
    %358 = vmatmul.mubr.f32.gmra.mrb[0].mxu0 %v285
    %v359 = vpop.f32.mrb[0].mxu0
    %v360 = vadd.f32 %v160, %v359
    %v361 = vpop.f32.mrb[0].mxu0
    %362 = vmatprep.mubr.f32.mxu0 0.0
    %363 = vmatmul.mubr.f32.gmra.mrb[0].mxu0 %v287
    %v364 = vpop.f32.mrb[0].mxu0
    %v365 = vadd.f32 %v161, %v364
    %v366 = vpop.f32.mrb[0].mxu0
    %367 = vdwg.mxu0
    %vm368 = vcmask 130048
    %v369 = vsel %vm368, %v360, -inf
    %370 = vmax.xlane.f32.xlu0 %v369
    %v371 = vpop.xlane.xlu0 %370
    %v372 = vsel %vm368, %v365, -inf
    %373 = vmax.xlane.f32.xlu0 %v372
    %v374 = vpop.xlane.xlu0 %373
    %v375 = vsub.f32 %v360, %v371
    %v376 = vsub.f32 %v365, %v374
    %v377 = vmul.f32 %v375, 1.442695
    %v378 = vpow.pop %v377
    %v379 = vmul.f32 %v376, 1.442695
    %v380 = vpow.pop %v379
    %v381 = vsel %vm368, %v378, 0.0
    %382 = vadd.xlane.f32.xlu0 %v381
    %v383 = vpop.xlane.xlu0 %382
    %v384 = vsel %vm368, %v380, 0.0
    %385 = vadd.xlane.f32.xlu0 %v384
    %v386 = vpop.xlane.xlu0 %385
    %v387 = vrcp.pop %v383
    %v388 = vrcp.pop %v386
    %v389 = vmul.f32 %v378, %v387
    %v390 = vmul.f32 %v380, %v388
    %391 = vrot.lane.b32.xlu0 %v270, 64
    %v392 = vpop.permute.xlu0 %391
    %393 = vrot.lane.b32.xlu0 %v275, 64
    %v394 = vpop.permute.xlu0 %393
    %v398 = vsel %vm368, %v389, 0
    %v401 = vsel %vm368, %v390, 0
    %403 = vmatprep.subr.mxu0 0.0
    %404 = vmatpush1.msra.mxu0 %v392
    %405 = vmatprep.subr.mxu0 0.0
    %406 = vmatpush1.msra.mxu0 %v394
    %407 = vmatprep.subr.mxu0 0.0
    %408 = vmatpush1.msra.mxu0 0.0
    %409 = vmatprep.subr.mxu0 0.0
    %410 = vmatpush1.msra.mxu0 0.0
    %411 = vmatprep.subr.mxu0 0.0
    %412 = vmatpush1.msra.mxu0 0.0
    %413 = vmatprep.subr.mxu0 0.0
    %414 = vmatpush1.msra.mxu0 0.0
    %415 = vmatprep.subr.mxu0 0.0
    %416 = vmatpush1.msra.mxu0 0.0
    %417 = vmatprep.subr.mxu0 0.0
    %418 = vmatpush1.msra.mxu0 0.0
    %419 = vmatprep.subr.mxu0 0.0
    %420 = vmatpush1.msra.mxu0 0.0
    %421 = vmatprep.subr.mxu0 0.0
    %422 = vmatpush1.msra.mxu0 0.0
    %423 = vmatprep.subr.mxu0 0.0
    %424 = vmatpush1.msra.mxu0 0.0
    %425 = vmatprep.subr.mxu0 0.0
    %426 = vmatpush1.msra.mxu0 0.0
    %427 = vmatprep.subr.mxu0 0.0
    %428 = vmatpush1.msra.mxu0 0.0
    %429 = vmatprep.subr.mxu0 0.0
    %430 = vmatpush1.msra.mxu0 0.0
    %431 = vmatprep.subr.mxu0 0.0
    %432 = vmatpush1.msra.mxu0 0.0
    %433 = vmatprep.subr.mxu0 0.0
    %434 = vmatpush1.msra.mxu0 0.0
    %435 = vmatprep.subr.mxu0 0.0
    %436 = vmatpush1.msra.mxu0 0.0
    %437 = vmatprep.subr.mxu0 0.0
    %438 = vmatpush1.msra.mxu0 0.0
    %439 = vmatprep.subr.mxu0 0.0
    %440 = vmatpush1.msra.mxu0 0.0
    %441 = vmatprep.subr.mxu0 0.0
    %442 = vmatpush1.msra.mxu0 0.0
    %443 = vmatprep.subr.mxu0 0.0
    %444 = vmatpush1.msra.mxu0 0.0
    %445 = vmatprep.subr.mxu0 0.0
    %446 = vmatpush1.msra.mxu0 0.0
    %447 = vmatprep.subr.mxu0 0.0
    %448 = vmatpush1.msra.mxu0 0.0
    %449 = vmatprep.subr.mxu0 0.0
    %450 = vmatpush1.msra.mxu0 0.0
    %451 = vmatprep.subr.mxu0 0.0
    %452 = vmatpush1.msra.mxu0 0.0
    %453 = vmatprep.subr.mxu0 0.0
    %454 = vmatpush1.msra.mxu0 0.0
    %455 = vmatprep.subr.mxu0 0.0
    %456 = vmatpush1.msra.mxu0 0.0
    %457 = vmatprep.subr.mxu0 0.0
    %458 = vmatpush1.msra.mxu0 0.0
    %459 = vmatprep.subr.mxu0 0.0
    %460 = vmatpush1.msra.mxu0 0.0
    %461 = vmatprep.subr.mxu0 0.0
    %462 = vmatpush1.msra.mxu0 0.0
    %463 = vmatprep.subr.mxu0 0.0
    %464 = vmatpush1.msra.mxu0 0.0
    %465 = vmatprep.subr.mxu0 0.0
    %466 = vmatpush1.msra.mxu0 0.0
    %467 = vmatprep.mubr.f32.mxu0 0.0
    %468 = vmatmul.mubr.f32.gmra.mrb[0].mxu0 %v398
    %v469 = vpop.f32.mrb[0].mxu0
    %v470 = vadd.f32 0.0, %v469
    %v471 = vpop.f32.mrb[0].mxu0
    %472 = vmatprep.mubr.f32.mxu0 0.0
    %473 = vmatmul.mubr.f32.gmra.mrb[0].mxu0 %v401
    %v474 = vpop.f32.mrb[0].mxu0
    %v475 = vadd.f32 0.0, %v474
    %v476 = vpop.f32.mrb[0].mxu0
    %477 = vdwg.mxu0
    %478 = vrot.lane.b32.xlu0 %v270, 120
    %v479 = vpop.permute.xlu0 %478
    %480 = vrot.lane.b32.xlu0 %v275, 120
    %v481 = vpop.permute.xlu0 %480
    %482 = vrot.lane.b32.xlu0 %v270, 88
    %v483 = vpop.permute.xlu0 %482
    %484 = vrot.lane.b32.xlu0 %v275, 88
    %v485 = vpop.permute.xlu0 %484
    %v486 = vsel %vm284, %v479, 0
    %v488 = vsel %vm284, %v481, 0
    %v490 = vsel %vm284, %v483, 0
    %v492 = vsel %vm284, %v485, 0
    %494 = vmatprep.subr.mxu0 0.0
    %495 = vmatpush1.xpose.msra.mxu0 %v490
    %496 = vmatprep.subr.mxu0 0.0
    %497 = vmatpush1.xpose.msra.mxu0 %v492
    %498 = vmatprep.subr.mxu0 0.0
    %499 = vmatpush1.xpose.msra.mxu0 0.0
    %500 = vmatprep.subr.mxu0 0.0
    %501 = vmatpush1.xpose.msra.mxu0 0.0
    %502 = vmatprep.subr.mxu0 0.0
    %503 = vmatpush1.xpose.msra.mxu0 0.0
    %504 = vmatprep.subr.mxu0 0.0
    %505 = vmatpush1.xpose.msra.mxu0 0.0
    %506 = vmatprep.subr.mxu0 0.0
    %507 = vmatpush1.xpose.msra.mxu0 0.0
    %508 = vmatprep.subr.mxu0 0.0
    %509 = vmatpush1.xpose.msra.mxu0 0.0
    %510 = vmatprep.subr.mxu0 0.0
    %511 = vmatpush1.xpose.msra.mxu0 0.0
    %512 = vmatprep.subr.mxu0 0.0
    %513 = vmatpush1.xpose.msra.mxu0 0.0
    %514 = vmatprep.subr.mxu0 0.0
    %515 = vmatpush1.xpose.msra.mxu0 0.0
    %516 = vmatprep.subr.mxu0 0.0
    %517 = vmatpush1.xpose.msra.mxu0 0.0
    %518 = vmatprep.subr.mxu0 0.0
    %519 = vmatpush1.xpose.msra.mxu0 0.0
    %520 = vmatprep.subr.mxu0 0.0
    %521 = vmatpush1.xpose.msra.mxu0 0.0
    %522 = vmatprep.subr.mxu0 0.0
    %523 = vmatpush1.xpose.msra.mxu0 0.0
    %524 = vmatprep.subr.mxu0 0.0
    %525 = vmatpush1.xpose.msra.mxu0 0.0
    %526 = vmatprep.subr.mxu0 0.0
    %527 = vmatpush1.xpose.msra.mxu0 0.0
    %528 = vmatprep.subr.mxu0 0.0
    %529 = vmatpush1.xpose.msra.mxu0 0.0
    %530 = vmatprep.subr.mxu0 0.0
    %531 = vmatpush1.xpose.msra.mxu0 0.0
    %532 = vmatprep.subr.mxu0 0.0
    %533 = vmatpush1.xpose.msra.mxu0 0.0
    %534 = vmatprep.subr.mxu0 0.0
    %535 = vmatpush1.xpose.msra.mxu0 0.0
    %536 = vmatprep.subr.mxu0 0.0
    %537 = vmatpush1.xpose.msra.mxu0 0.0
    %538 = vmatprep.subr.mxu0 0.0
    %539 = vmatpush1.xpose.msra.mxu0 0.0
    %540 = vmatprep.subr.mxu0 0.0
    %541 = vmatpush1.xpose.msra.mxu0 0.0
    %542 = vmatprep.subr.mxu0 0.0
    %543 = vmatpush1.xpose.msra.mxu0 0.0
    %544 = vmatprep.subr.mxu0 0.0
    %545 = vmatpush1.xpose.msra.mxu0 0.0
    %546 = vmatprep.subr.mxu0 0.0
    %547 = vmatpush1.xpose.msra.mxu0 0.0
    %548 = vmatprep.subr.mxu0 0.0
    %549 = vmatpush1.xpose.msra.mxu0 0.0
    %550 = vmatprep.subr.mxu0 0.0
    %551 = vmatpush1.xpose.msra.mxu0 0.0
    %552 = vmatprep.subr.mxu0 0.0
    %553 = vmatpush1.xpose.msra.mxu0 0.0
    %554 = vmatprep.subr.mxu0 0.0
    %555 = vmatpush1.xpose.msra.mxu0 0.0
    %556 = vmatprep.subr.mxu0 0.0
    %557 = vmatpush1.xpose.msra.mxu0 0.0
    %558 = vmatprep.mubr.f32.mxu0 0.0
    %559 = vmatmul.mubr.f32.gmra.mrb[0].mxu0 %v486
    %v560 = vpop.f32.mrb[0].mxu0
    %v561 = vadd.f32 %v160, %v560
    %v562 = vpop.f32.mrb[0].mxu0
    %563 = vmatprep.mubr.f32.mxu0 0.0
    %564 = vmatmul.mubr.f32.gmra.mrb[0].mxu0 %v488
    %v565 = vpop.f32.mrb[0].mxu0
    %v566 = vadd.f32 %v161, %v565
    %v567 = vpop.f32.mrb[0].mxu0
    %568 = vdwg.mxu0
    %v569 = vsel %vm368, %v561, -inf
    %570 = vmax.xlane.f32.xlu0 %v569
    %v571 = vpop.xlane.xlu0 %570
    %v572 = vsel %vm368, %v566, -inf
    %573 = vmax.xlane.f32.xlu0 %v572
    %v574 = vpop.xlane.xlu0 %573
    %v575 = vsub.f32 %v561, %v571
    %v576 = vsub.f32 %v566, %v574
    %v577 = vmul.f32 %v575, 1.442695
    %v578 = vpow.pop %v577
    %v579 = vmul.f32 %v576, 1.442695
    %v580 = vpow.pop %v579
    %v581 = vsel %vm368, %v578, 0.0
    %582 = vadd.xlane.f32.xlu0 %v581
    %v583 = vpop.xlane.xlu0 %582
    %v584 = vsel %vm368, %v580, 0.0
    %585 = vadd.xlane.f32.xlu0 %v584
    %v586 = vpop.xlane.xlu0 %585
    %v587 = vrcp.pop %v583
    %v588 = vrcp.pop %v586
    %v589 = vmul.f32 %v578, %v587
    %v590 = vmul.f32 %v580, %v588
    %591 = vrot.lane.b32.xlu0 %v270, 56
    %v592 = vpop.permute.xlu0 %591
    %593 = vrot.lane.b32.xlu0 %v275, 56
    %v594 = vpop.permute.xlu0 %593
    %v598 = vsel %vm368, %v589, 0
    %v601 = vsel %vm368, %v590, 0
    %603 = vmatprep.subr.mxu0 0.0
    %604 = vmatpush1.msra.mxu0 %v592
    %605 = vmatprep.subr.mxu0 0.0
    %606 = vmatpush1.msra.mxu0 %v594
    %607 = vmatprep.subr.mxu0 0.0
    %608 = vmatpush1.msra.mxu0 0.0
    %609 = vmatprep.subr.mxu0 0.0
    %610 = vmatpush1.msra.mxu0 0.0
    %611 = vmatprep.subr.mxu0 0.0
    %612 = vmatpush1.msra.mxu0 0.0
    %613 = vmatprep.subr.mxu0 0.0
    %614 = vmatpush1.msra.mxu0 0.0
    %615 = vmatprep.subr.mxu0 0.0
    %616 = vmatpush1.msra.mxu0 0.0
    %617 = vmatprep.subr.mxu0 0.0
    %618 = vmatpush1.msra.mxu0 0.0
    %619 = vmatprep.subr.mxu0 0.0
    %620 = vmatpush1.msra.mxu0 0.0
    %621 = vmatprep.subr.mxu0 0.0
    %622 = vmatpush1.msra.mxu0 0.0
    %623 = vmatprep.subr.mxu0 0.0
    %624 = vmatpush1.msra.mxu0 0.0
    %625 = vmatprep.subr.mxu0 0.0
    %626 = vmatpush1.msra.mxu0 0.0
    %627 = vmatprep.subr.mxu0 0.0
    %628 = vmatpush1.msra.mxu0 0.0
    %629 = vmatprep.subr.mxu0 0.0
    %630 = vmatpush1.msra.mxu0 0.0
    %631 = vmatprep.subr.mxu0 0.0
    %632 = vmatpush1.msra.mxu0 0.0
    %633 = vmatprep.subr.mxu0 0.0
    %634 = vmatpush1.msra.mxu0 0.0
    %635 = vmatprep.subr.mxu0 0.0
    %636 = vmatpush1.msra.mxu0 0.0
    %637 = vmatprep.subr.mxu0 0.0
    %638 = vmatpush1.msra.mxu0 0.0
    %639 = vmatprep.subr.mxu0 0.0
    %640 = vmatpush1.msra.mxu0 0.0
    %641 = vmatprep.subr.mxu0 0.0
    %642 = vmatpush1.msra.mxu0 0.0
    %643 = vmatprep.subr.mxu0 0.0
    %644 = vmatpush1.msra.mxu0 0.0
    %645 = vmatprep.subr.mxu0 0.0
    %646 = vmatpush1.msra.mxu0 0.0
    %647 = vmatprep.subr.mxu0 0.0
    %648 = vmatpush1.msra.mxu0 0.0
    %649 = vmatprep.subr.mxu0 0.0
    %650 = vmatpush1.msra.mxu0 0.0
    %651 = vmatprep.subr.mxu0 0.0
    %652 = vmatpush1.msra.mxu0 0.0
    %653 = vmatprep.subr.mxu0 0.0
    %654 = vmatpush1.msra.mxu0 0.0
    %655 = vmatprep.subr.mxu0 0.0
    %656 = vmatpush1.msra.mxu0 0.0
    %657 = vmatprep.subr.mxu0 0.0
    %658 = vmatpush1.msra.mxu0 0.0
    %659 = vmatprep.subr.mxu0 0.0
    %660 = vmatpush1.msra.mxu0 0.0
    %661 = vmatprep.subr.mxu0 0.0
    %662 = vmatpush1.msra.mxu0 0.0
    %663 = vmatprep.subr.mxu0 0.0
    %664 = vmatpush1.msra.mxu0 0.0
    %665 = vmatprep.subr.mxu0 0.0
    %666 = vmatpush1.msra.mxu0 0.0
    %667 = vmatprep.mubr.f32.mxu0 0.0
    %668 = vmatmul.mubr.f32.gmra.mrb[0].mxu0 %v598
    %v669 = vpop.f32.mrb[0].mxu0
    %v670 = vadd.f32 0.0, %v669
    %v671 = vpop.f32.mrb[0].mxu0
    %672 = vmatprep.mubr.f32.mxu0 0.0
    %673 = vmatmul.mubr.f32.gmra.mrb[0].mxu0 %v601
    %v674 = vpop.f32.mrb[0].mxu0
    %v675 = vadd.f32 0.0, %v674
    %v676 = vpop.f32.mrb[0].mxu0
    %677 = vdwg.mxu0
    %678 = vrot.lane.b32.xlu0 %v270, 112
    %v679 = vpop.permute.xlu0 %678
    %680 = vrot.lane.b32.xlu0 %v275, 112
    %v681 = vpop.permute.xlu0 %680
    %682 = vrot.lane.b32.xlu0 %v270, 80
    %v683 = vpop.permute.xlu0 %682
    %684 = vrot.lane.b32.xlu0 %v275, 80
    %v685 = vpop.permute.xlu0 %684
    %v686 = vsel %vm284, %v679, 0
    %v688 = vsel %vm284, %v681, 0
    %v690 = vsel %vm284, %v683, 0
    %v692 = vsel %vm284, %v685, 0
    %694 = vmatprep.subr.mxu0 0.0
    %695 = vmatpush1.xpose.msra.mxu0 %v690
    %696 = vmatprep.subr.mxu0 0.0
    %697 = vmatpush1.xpose.msra.mxu0 %v692
    %698 = vmatprep.subr.mxu0 0.0
    %699 = vmatpush1.xpose.msra.mxu0 0.0
    %700 = vmatprep.subr.mxu0 0.0
    %701 = vmatpush1.xpose.msra.mxu0 0.0
    %702 = vmatprep.subr.mxu0 0.0
    %703 = vmatpush1.xpose.msra.mxu0 0.0
    %704 = vmatprep.subr.mxu0 0.0
    %705 = vmatpush1.xpose.msra.mxu0 0.0
    %706 = vmatprep.subr.mxu0 0.0
    %707 = vmatpush1.xpose.msra.mxu0 0.0
    %708 = vmatprep.subr.mxu0 0.0
    %709 = vmatpush1.xpose.msra.mxu0 0.0
    %710 = vmatprep.subr.mxu0 0.0
    %711 = vmatpush1.xpose.msra.mxu0 0.0
    %712 = vmatprep.subr.mxu0 0.0
    %713 = vmatpush1.xpose.msra.mxu0 0.0
    %714 = vmatprep.subr.mxu0 0.0
    %715 = vmatpush1.xpose.msra.mxu0 0.0
    %716 = vmatprep.subr.mxu0 0.0
    %717 = vmatpush1.xpose.msra.mxu0 0.0
    %718 = vmatprep.subr.mxu0 0.0
    %719 = vmatpush1.xpose.msra.mxu0 0.0
    %720 = vmatprep.subr.mxu0 0.0
    %721 = vmatpush1.xpose.msra.mxu0 0.0
    %722 = vmatprep.subr.mxu0 0.0
    %723 = vmatpush1.xpose.msra.mxu0 0.0
    %724 = vmatprep.subr.mxu0 0.0
    %725 = vmatpush1.xpose.msra.mxu0 0.0
    %726 = vmatprep.subr.mxu0 0.0
    %727 = vmatpush1.xpose.msra.mxu0 0.0
    %728 = vmatprep.subr.mxu0 0.0
    %729 = vmatpush1.xpose.msra.mxu0 0.0
    %730 = vmatprep.subr.mxu0 0.0
    %731 = vmatpush1.xpose.msra.mxu0 0.0
    %732 = vmatprep.subr.mxu0 0.0
    %733 = vmatpush1.xpose.msra.mxu0 0.0
    %734 = vmatprep.subr.mxu0 0.0
    %735 = vmatpush1.xpose.msra.mxu0 0.0
    %736 = vmatprep.subr.mxu0 0.0
    %737 = vmatpush1.xpose.msra.mxu0 0.0
    %738 = vmatprep.subr.mxu0 0.0
    %739 = vmatpush1.xpose.msra.mxu0 0.0
    %740 = vmatprep.subr.mxu0 0.0
    %741 = vmatpush1.xpose.msra.mxu0 0.0
    %742 = vmatprep.subr.mxu0 0.0
    %743 = vmatpush1.xpose.msra.mxu0 0.0
    %744 = vmatprep.subr.mxu0 0.0
    %745 = vmatpush1.xpose.msra.mxu0 0.0
    %746 = vmatprep.subr.mxu0 0.0
    %747 = vmatpush1.xpose.msra.mxu0 0.0
    %748 = vmatprep.subr.mxu0 0.0
    %749 = vmatpush1.xpose.msra.mxu0 0.0
    %750 = vmatprep.subr.mxu0 0.0
    %751 = vmatpush1.xpose.msra.mxu0 0.0
    %752 = vmatprep.subr.mxu0 0.0
    %753 = vmatpush1.xpose.msra.mxu0 0.0
    %754 = vmatprep.subr.mxu0 0.0
    %755 = vmatpush1.xpose.msra.mxu0 0.0
    %756 = vmatprep.subr.mxu0 0.0
    %757 = vmatpush1.xpose.msra.mxu0 0.0
    %758 = vmatprep.mubr.f32.mxu0 0.0
    %759 = vmatmul.mubr.f32.gmra.mrb[0].mxu0 %v686
    %v760 = vpop.f32.mrb[0].mxu0
    %v761 = vadd.f32 %v160, %v760
    %v762 = vpop.f32.mrb[0].mxu0
    %763 = vmatprep.mubr.f32.mxu0 0.0
    %764 = vmatmul.mubr.f32.gmra.mrb[0].mxu0 %v688
    %v765 = vpop.f32.mrb[0].mxu0
    %v766 = vadd.f32 %v161, %v765
    %v767 = vpop.f32.mrb[0].mxu0
    %768 = vdwg.mxu0
    %v769 = vsel %vm368, %v761, -inf
    %770 = vmax.xlane.f32.xlu0 %v769
    %v771 = vpop.xlane.xlu0 %770
    %v772 = vsel %vm368, %v766, -inf
    %773 = vmax.xlane.f32.xlu0 %v772
    %v774 = vpop.xlane.xlu0 %773
    %v775 = vsub.f32 %v761, %v771
    %v776 = vsub.f32 %v766, %v774
    %v777 = vmul.f32 %v775, 1.442695
    %v778 = vpow.pop %v777
    %v779 = vmul.f32 %v776, 1.442695
    %v780 = vpow.pop %v779
    %v781 = vsel %vm368, %v778, 0.0
    %782 = vadd.xlane.f32.xlu0 %v781
    %v783 = vpop.xlane.xlu0 %782
    %v784 = vsel %vm368, %v780, 0.0
    %785 = vadd.xlane.f32.xlu0 %v784
    %v786 = vpop.xlane.xlu0 %785
    %v787 = vrcp.pop %v783
    %v788 = vrcp.pop %v786
    %v789 = vmul.f32 %v778, %v787
    %v790 = vmul.f32 %v780, %v788
    %791 = vrot.lane.b32.xlu0 %v270, 48
    %v792 = vpop.permute.xlu0 %791
    %793 = vrot.lane.b32.xlu0 %v275, 48
    %v794 = vpop.permute.xlu0 %793
    %v798 = vsel %vm368, %v789, 0
    %v801 = vsel %vm368, %v790, 0
    %803 = vmatprep.subr.mxu0 0.0
    %804 = vmatpush1.msra.mxu0 %v792
    %805 = vmatprep.subr.mxu0 0.0
    %806 = vmatpush1.msra.mxu0 %v794
    %807 = vmatprep.subr.mxu0 0.0
    %808 = vmatpush1.msra.mxu0 0.0
    %809 = vmatprep.subr.mxu0 0.0
    %810 = vmatpush1.msra.mxu0 0.0
    %811 = vmatprep.subr.mxu0 0.0
    %812 = vmatpush1.msra.mxu0 0.0
    %813 = vmatprep.subr.mxu0 0.0
    %814 = vmatpush1.msra.mxu0 0.0
    %815 = vmatprep.subr.mxu0 0.0
    %816 = vmatpush1.msra.mxu0 0.0
    %817 = vmatprep.subr.mxu0 0.0
    %818 = vmatpush1.msra.mxu0 0.0
    %819 = vmatprep.subr.mxu0 0.0
    %820 = vmatpush1.msra.mxu0 0.0
    %821 = vmatprep.subr.mxu0 0.0
    %822 = vmatpush1.msra.mxu0 0.0
    %823 = vmatprep.subr.mxu0 0.0
    %824 = vmatpush1.msra.mxu0 0.0
    %825 = vmatprep.subr.mxu0 0.0
    %826 = vmatpush1.msra.mxu0 0.0
    %827 = vmatprep.subr.mxu0 0.0
    %828 = vmatpush1.msra.mxu0 0.0
    %829 = vmatprep.subr.mxu0 0.0
    %830 = vmatpush1.msra.mxu0 0.0
    %831 = vmatprep.subr.mxu0 0.0
    %832 = vmatpush1.msra.mxu0 0.0
    %833 = vmatprep.subr.mxu0 0.0
    %834 = vmatpush1.msra.mxu0 0.0
    %835 = vmatprep.subr.mxu0 0.0
    %836 = vmatpush1.msra.mxu0 0.0
    %837 = vmatprep.subr.mxu0 0.0
    %838 = vmatpush1.msra.mxu0 0.0
    %839 = vmatprep.subr.mxu0 0.0
    %840 = vmatpush1.msra.mxu0 0.0
    %841 = vmatprep.subr.mxu0 0.0
    %842 = vmatpush1.msra.mxu0 0.0
    %843 = vmatprep.subr.mxu0 0.0
    %844 = vmatpush1.msra.mxu0 0.0
    %845 = vmatprep.subr.mxu0 0.0
    %846 = vmatpush1.msra.mxu0 0.0
    %847 = vmatprep.subr.mxu0 0.0
    %848 = vmatpush1.msra.mxu0 0.0
    %849 = vmatprep.subr.mxu0 0.0
    %850 = vmatpush1.msra.mxu0 0.0
    %851 = vmatprep.subr.mxu0 0.0
    %852 = vmatpush1.msra.mxu0 0.0
    %853 = vmatprep.subr.mxu0 0.0
    %854 = vmatpush1.msra.mxu0 0.0
    %855 = vmatprep.subr.mxu0 0.0
    %856 = vmatpush1.msra.mxu0 0.0
    %857 = vmatprep.subr.mxu0 0.0
    %858 = vmatpush1.msra.mxu0 0.0
    %859 = vmatprep.subr.mxu0 0.0
    %860 = vmatpush1.msra.mxu0 0.0
    %861 = vmatprep.subr.mxu0 0.0
    %862 = vmatpush1.msra.mxu0 0.0
    %863 = vmatprep.subr.mxu0 0.0
    %864 = vmatpush1.msra.mxu0 0.0
    %865 = vmatprep.subr.mxu0 0.0
    %866 = vmatpush1.msra.mxu0 0.0
    %867 = vmatprep.mubr.f32.mxu0 0.0
    %868 = vmatmul.mubr.f32.gmra.mrb[0].mxu0 %v798
    %v869 = vpop.f32.mrb[0].mxu0
    %v870 = vadd.f32 0.0, %v869
    %v871 = vpop.f32.mrb[0].mxu0
    %872 = vmatprep.mubr.f32.mxu0 0.0
    %873 = vmatmul.mubr.f32.gmra.mrb[0].mxu0 %v801
    %v874 = vpop.f32.mrb[0].mxu0
    %v875 = vadd.f32 0.0, %v874
    %v876 = vpop.f32.mrb[0].mxu0
    %877 = vdwg.mxu0
    %878 = vrot.lane.b32.xlu0 %v270, 104
    %v879 = vpop.permute.xlu0 %878
    %880 = vrot.lane.b32.xlu0 %v275, 104
    %v881 = vpop.permute.xlu0 %880
    %882 = vrot.lane.b32.xlu0 %v270, 72
    %v883 = vpop.permute.xlu0 %882
    %884 = vrot.lane.b32.xlu0 %v275, 72
    %v885 = vpop.permute.xlu0 %884
    %v886 = vsel %vm284, %v879, 0
    %v888 = vsel %vm284, %v881, 0
    %v890 = vsel %vm284, %v883, 0
    %v892 = vsel %vm284, %v885, 0
    %894 = vmatprep.subr.mxu0 0.0
    %895 = vmatpush1.xpose.msra.mxu0 %v890
    %896 = vmatprep.subr.mxu0 0.0
    %897 = vmatpush1.xpose.msra.mxu0 %v892
    %898 = vmatprep.subr.mxu0 0.0
    %899 = vmatpush1.xpose.msra.mxu0 0.0
    %900 = vmatprep.subr.mxu0 0.0
    %901 = vmatpush1.xpose.msra.mxu0 0.0
    %902 = vmatprep.subr.mxu0 0.0
    %903 = vmatpush1.xpose.msra.mxu0 0.0
    %904 = vmatprep.subr.mxu0 0.0
    %905 = vmatpush1.xpose.msra.mxu0 0.0
    %906 = vmatprep.subr.mxu0 0.0
    %907 = vmatpush1.xpose.msra.mxu0 0.0
    %908 = vmatprep.subr.mxu0 0.0
    %909 = vmatpush1.xpose.msra.mxu0 0.0
    %910 = vmatprep.subr.mxu0 0.0
    %911 = vmatpush1.xpose.msra.mxu0 0.0
    %912 = vmatprep.subr.mxu0 0.0
    %913 = vmatpush1.xpose.msra.mxu0 0.0
    %914 = vmatprep.subr.mxu0 0.0
    %915 = vmatpush1.xpose.msra.mxu0 0.0
    %916 = vmatprep.subr.mxu0 0.0
    %917 = vmatpush1.xpose.msra.mxu0 0.0
    %918 = vmatprep.subr.mxu0 0.0
    %919 = vmatpush1.xpose.msra.mxu0 0.0
    %920 = vmatprep.subr.mxu0 0.0
    %921 = vmatpush1.xpose.msra.mxu0 0.0
    %922 = vmatprep.subr.mxu0 0.0
    %923 = vmatpush1.xpose.msra.mxu0 0.0
    %924 = vmatprep.subr.mxu0 0.0
    %925 = vmatpush1.xpose.msra.mxu0 0.0
    %926 = vmatprep.subr.mxu0 0.0
    %927 = vmatpush1.xpose.msra.mxu0 0.0
    %928 = vmatprep.subr.mxu0 0.0
    %929 = vmatpush1.xpose.msra.mxu0 0.0
    %930 = vmatprep.subr.mxu0 0.0
    %931 = vmatpush1.xpose.msra.mxu0 0.0
    %932 = vmatprep.subr.mxu0 0.0
    %933 = vmatpush1.xpose.msra.mxu0 0.0
    %934 = vmatprep.subr.mxu0 0.0
    %935 = vmatpush1.xpose.msra.mxu0 0.0
    %936 = vmatprep.subr.mxu0 0.0
    %937 = vmatpush1.xpose.msra.mxu0 0.0
    %938 = vmatprep.subr.mxu0 0.0
    %939 = vmatpush1.xpose.msra.mxu0 0.0
    %940 = vmatprep.subr.mxu0 0.0
    %941 = vmatpush1.xpose.msra.mxu0 0.0
    %942 = vmatprep.subr.mxu0 0.0
    %943 = vmatpush1.xpose.msra.mxu0 0.0
    %944 = vmatprep.subr.mxu0 0.0
    %945 = vmatpush1.xpose.msra.mxu0 0.0
    %946 = vmatprep.subr.mxu0 0.0
    %947 = vmatpush1.xpose.msra.mxu0 0.0
    %948 = vmatprep.subr.mxu0 0.0
    %949 = vmatpush1.xpose.msra.mxu0 0.0
    %950 = vmatprep.subr.mxu0 0.0
    %951 = vmatpush1.xpose.msra.mxu0 0.0
    %952 = vmatprep.subr.mxu0 0.0
    %953 = vmatpush1.xpose.msra.mxu0 0.0
    %954 = vmatprep.subr.mxu0 0.0
    %955 = vmatpush1.xpose.msra.mxu0 0.0
    %956 = vmatprep.subr.mxu0 0.0
    %957 = vmatpush1.xpose.msra.mxu0 0.0
    %958 = vmatprep.mubr.f32.mxu0 0.0
    %959 = vmatmul.mubr.f32.gmra.mrb[0].mxu0 %v886
    %v960 = vpop.f32.mrb[0].mxu0
    %v961 = vadd.f32 %v160, %v960
    %v962 = vpop.f32.mrb[0].mxu0
    %963 = vmatprep.mubr.f32.mxu0 0.0
    %964 = vmatmul.mubr.f32.gmra.mrb[0].mxu0 %v888
    %v965 = vpop.f32.mrb[0].mxu0
    %v966 = vadd.f32 %v161, %v965
    %v967 = vpop.f32.mrb[0].mxu0
    %968 = vdwg.mxu0
    %v969 = vsel %vm368, %v961, -inf
    %970 = vmax.xlane.f32.xlu0 %v969
    %v971 = vpop.xlane.xlu0 %970
    %v972 = vsel %vm368, %v966, -inf
    %973 = vmax.xlane.f32.xlu0 %v972
    %v974 = vpop.xlane.xlu0 %973
    %v975 = vsub.f32 %v961, %v971
    %v976 = vsub.f32 %v966, %v974
    %v977 = vmul.f32 %v975, 1.442695
    %v978 = vpow.pop %v977
    %v979 = vmul.f32 %v976, 1.442695
    %v980 = vpow.pop %v979
    %v981 = vsel %vm368, %v978, 0.0
    %982 = vadd.xlane.f32.xlu0 %v981
    %v983 = vpop.xlane.xlu0 %982
    %v984 = vsel %vm368, %v980, 0.0
    %985 = vadd.xlane.f32.xlu0 %v984
    %v986 = vpop.xlane.xlu0 %985
    %v987 = vrcp.pop %v983
    %v988 = vrcp.pop %v986
    %v989 = vmul.f32 %v978, %v987
    %v990 = vmul.f32 %v980, %v988
    %991 = vrot.lane.b32.xlu0 %v270, 40
    %v992 = vpop.permute.xlu0 %991
    %993 = vrot.lane.b32.xlu0 %v275, 40
    %v994 = vpop.permute.xlu0 %993
    %v998 = vsel %vm368, %v989, 0
    %v1001 = vsel %vm368, %v990, 0
    %1003 = vmatprep.subr.mxu0 0.0
    %1004 = vmatpush1.msra.mxu0 %v992
    %1005 = vmatprep.subr.mxu0 0.0
    %1006 = vmatpush1.msra.mxu0 %v994
    %1007 = vmatprep.subr.mxu0 0.0
    %1008 = vmatpush1.msra.mxu0 0.0
    %1009 = vmatprep.subr.mxu0 0.0
    %1010 = vmatpush1.msra.mxu0 0.0
    %1011 = vmatprep.subr.mxu0 0.0
    %1012 = vmatpush1.msra.mxu0 0.0
    %1013 = vmatprep.subr.mxu0 0.0
    %1014 = vmatpush1.msra.mxu0 0.0
    %1015 = vmatprep.subr.mxu0 0.0
    %1016 = vmatpush1.msra.mxu0 0.0
    %1017 = vmatprep.subr.mxu0 0.0
    %1018 = vmatpush1.msra.mxu0 0.0
    %1019 = vmatprep.subr.mxu0 0.0
    %1020 = vmatpush1.msra.mxu0 0.0
    %1021 = vmatprep.subr.mxu0 0.0
    %1022 = vmatpush1.msra.mxu0 0.0
    %1023 = vmatprep.subr.mxu0 0.0
    %1024 = vmatpush1.msra.mxu0 0.0
    %1025 = vmatprep.subr.mxu0 0.0
    %1026 = vmatpush1.msra.mxu0 0.0
    %1027 = vmatprep.subr.mxu0 0.0
    %1028 = vmatpush1.msra.mxu0 0.0
    %1029 = vmatprep.subr.mxu0 0.0
    %1030 = vmatpush1.msra.mxu0 0.0
    %1031 = vmatprep.subr.mxu0 0.0
    %1032 = vmatpush1.msra.mxu0 0.0
    %1033 = vmatprep.subr.mxu0 0.0
    %1034 = vmatpush1.msra.mxu0 0.0
    %1035 = vmatprep.subr.mxu0 0.0
    %1036 = vmatpush1.msra.mxu0 0.0
    %1037 = vmatprep.subr.mxu0 0.0
    %1038 = vmatpush1.msra.mxu0 0.0
    %1039 = vmatprep.subr.mxu0 0.0
    %1040 = vmatpush1.msra.mxu0 0.0
    %1041 = vmatprep.subr.mxu0 0.0
    %1042 = vmatpush1.msra.mxu0 0.0
    %1043 = vmatprep.subr.mxu0 0.0
    %1044 = vmatpush1.msra.mxu0 0.0
    %1045 = vmatprep.subr.mxu0 0.0
    %1046 = vmatpush1.msra.mxu0 0.0
    %1047 = vmatprep.subr.mxu0 0.0
    %1048 = vmatpush1.msra.mxu0 0.0
    %1049 = vmatprep.subr.mxu0 0.0
    %1050 = vmatpush1.msra.mxu0 0.0
    %1051 = vmatprep.subr.mxu0 0.0
    %1052 = vmatpush1.msra.mxu0 0.0
    %1053 = vmatprep.subr.mxu0 0.0
    %1054 = vmatpush1.msra.mxu0 0.0
    %1055 = vmatprep.subr.mxu0 0.0
    %1056 = vmatpush1.msra.mxu0 0.0
    %1057 = vmatprep.subr.mxu0 0.0
    %1058 = vmatpush1.msra.mxu0 0.0
    %1059 = vmatprep.subr.mxu0 0.0
    %1060 = vmatpush1.msra.mxu0 0.0
    %1061 = vmatprep.subr.mxu0 0.0
    %1062 = vmatpush1.msra.mxu0 0.0
    %1063 = vmatprep.subr.mxu0 0.0
    %1064 = vmatpush1.msra.mxu0 0.0
    %1065 = vmatprep.subr.mxu0 0.0
    %1066 = vmatpush1.msra.mxu0 0.0
    %1067 = vmatprep.mubr.f32.mxu0 0.0
    %1068 = vmatmul.mubr.f32.gmra.mrb[0].mxu0 %v998
    %v1069 = vpop.f32.mrb[0].mxu0
    %v1070 = vadd.f32 0.0, %v1069
    %v1071 = vpop.f32.mrb[0].mxu0
    %1072 = vmatprep.mubr.f32.mxu0 0.0
    %1073 = vmatmul.mubr.f32.gmra.mrb[0].mxu0 %v1001
    %v1074 = vpop.f32.mrb[0].mxu0
    %v1075 = vadd.f32 0.0, %v1074
    %v1076 = vpop.f32.mrb[0].mxu0
    %1077 = vdwg.mxu0
    %1080 = vrot.lane.b32.xlu0 %v670, 8
    %v1081 = vpop.permute.xlu0 %1080
    %1082 = vrot.lane.b32.xlu0 %v675, 8
    %v1083 = vpop.permute.xlu0 %1082
    %1088 = vrot.lane.b32.xlu0 %v870, 16
    %v1089 = vpop.permute.xlu0 %1088
    %1090 = vrot.lane.b32.xlu0 %v875, 16
    %v1091 = vpop.permute.xlu0 %1090
    %1096 = vrot.lane.b32.xlu0 %v1070, 24
    %v1097 = vpop.permute.xlu0 %1096
    %1098 = vrot.lane.b32.xlu0 %v1075, 24
    %v1099 = vpop.permute.xlu0 %1098
    %v1102 = vsel %vm284, %v470, %v1081
    %v1103 = vsel %vm284, %v475, %v1083
    %v1104 = vsel %vm368, %v1102, %v1089
    %v1105 = vsel %vm368, %v1103, %v1091
    %vm1106 = vcmask 195584
    %v1107 = vsel %vm1106, %v1104, %v1097
    %v1108 = vsel %vm1106, %v1105, %v1099
    %v1110 = vlaneseq
    %v1111 = vshrl.u32 %v1110, 7
    %v1112 = vsub.s32 0, %v1111
    %v1113 = vrot.slane %v171, %v1112
    %v1116 = vsel %vm196, %v1107, 0
    %v1119 = vsel %vm196, %v1108, 0
    %1121 = vmatprep.subr.mxu0 0.0
    %1122 = vmatpush1.msra.mxu0 %v167
    %1123 = vmatprep.subr.mxu0 0.0
    %1124 = vmatpush1.msra.mxu0 %v168
    %1125 = vmatprep.subr.mxu0 0.0
    %1126 = vmatpush1.msra.mxu0 %v169
    %1127 = vmatprep.subr.mxu0 0.0
    %1128 = vmatpush1.msra.mxu0 %v170
    %1129 = vmatprep.subr.mxu0 0.0
    %1130 = vmatpush1.msra.mxu0 0.0
    %1131 = vmatprep.subr.mxu0 0.0
    %1132 = vmatpush1.msra.mxu0 0.0
    %1133 = vmatprep.subr.mxu0 0.0
    %1134 = vmatpush1.msra.mxu0 0.0
    %1135 = vmatprep.subr.mxu0 0.0
    %1136 = vmatpush1.msra.mxu0 0.0
    %1137 = vmatprep.subr.mxu0 0.0
    %1138 = vmatpush1.msra.mxu0 0.0
    %1139 = vmatprep.subr.mxu0 0.0
    %1140 = vmatpush1.msra.mxu0 0.0
    %1141 = vmatprep.subr.mxu0 0.0
    %1142 = vmatpush1.msra.mxu0 0.0
    %1143 = vmatprep.subr.mxu0 0.0
    %1144 = vmatpush1.msra.mxu0 0.0
    %1145 = vmatprep.subr.mxu0 0.0
    %1146 = vmatpush1.msra.mxu0 0.0
    %1147 = vmatprep.subr.mxu0 0.0
    %1148 = vmatpush1.msra.mxu0 0.0
    %1149 = vmatprep.subr.mxu0 0.0
    %1150 = vmatpush1.msra.mxu0 0.0
    %1151 = vmatprep.subr.mxu0 0.0
    %1152 = vmatpush1.msra.mxu0 0.0
    %1153 = vmatprep.subr.mxu0 0.0
    %1154 = vmatpush1.msra.mxu0 0.0
    %1155 = vmatprep.subr.mxu0 0.0
    %1156 = vmatpush1.msra.mxu0 0.0
    %1157 = vmatprep.subr.mxu0 0.0
    %1158 = vmatpush1.msra.mxu0 0.0
    %1159 = vmatprep.subr.mxu0 0.0
    %1160 = vmatpush1.msra.mxu0 0.0
    %1161 = vmatprep.subr.mxu0 0.0
    %1162 = vmatpush1.msra.mxu0 0.0
    %1163 = vmatprep.subr.mxu0 0.0
    %1164 = vmatpush1.msra.mxu0 0.0
    %1165 = vmatprep.subr.mxu0 0.0
    %1166 = vmatpush1.msra.mxu0 0.0
    %1167 = vmatprep.subr.mxu0 0.0
    %1168 = vmatpush1.msra.mxu0 0.0
    %1169 = vmatprep.subr.mxu0 0.0
    %1170 = vmatpush1.msra.mxu0 0.0
    %1171 = vmatprep.subr.mxu0 0.0
    %1172 = vmatpush1.msra.mxu0 0.0
    %1173 = vmatprep.subr.mxu0 0.0
    %1174 = vmatpush1.msra.mxu0 0.0
    %1175 = vmatprep.subr.mxu0 0.0
    %1176 = vmatpush1.msra.mxu0 0.0
    %1177 = vmatprep.subr.mxu0 0.0
    %1178 = vmatpush1.msra.mxu0 0.0
    %1179 = vmatprep.subr.mxu0 0.0
    %1180 = vmatpush1.msra.mxu0 0.0
    %1181 = vmatprep.subr.mxu0 0.0
    %1182 = vmatpush1.msra.mxu0 0.0
    %1183 = vmatprep.subr.mxu0 0.0
    %1184 = vmatpush1.msra.mxu0 0.0
    %1185 = vmatprep.mubr.f32.mxu0 0.0
    %1186 = vmatmul.mubr.f32.gmra.mrb[0].mxu0 %v1116
    %v1187 = vpop.f32.mrb[0].mxu0
    %v1188 = vadd.f32 %v1113, %v1187
    %v1189 = vpop.f32.mrb[0].mxu0
    %1190 = vmatprep.mubr.f32.mxu0 0.0
    %1191 = vmatmul.mubr.f32.gmra.mrb[0].mxu0 %v1119
    %v1192 = vpop.f32.mrb[0].mxu0
    %v1193 = vadd.f32 %v1113, %v1192
    %v1194 = vpop.f32.mrb[0].mxu0
    %1195 = vdwg.mxu0
    %v1196 = vadd.f32 %v152, %v1188
    %v1197 = vadd.f32 %v157, %v1193
    %v1198 = vsel %vm196, %v1196, 0.0
    %1199 = vadd.xlane.f32.xlu0 %v1198
    %v1200 = vpop.xlane.xlu0 %1199
    %v1201 = vsel %vm196, %v1197, 0.0
    %1202 = vadd.xlane.f32.xlu0 %v1201
    %v1203 = vpop.xlane.xlu0 %1202
    %v1204 = vrcp.pop 32.0
    %v1205 = vmul.f32 %v1200, %v1204
    %v1206 = vmul.f32 %v1203, %v1204
    %v1207 = vsub.f32 %v1196, %v1205
    %v1208 = vsub.f32 %v1197, %v1206
    %v1209 = vmul.f32 %v1207, %v1207
    %v1210 = vmul.f32 %v1208, %v1208
    %v1211 = vsel %vm196, %v1209, 0.0
    %1212 = vadd.xlane.f32.xlu0 %v1211
    %v1213 = vpop.xlane.xlu0 %1212
    %v1214 = vsel %vm196, %v1210, 0.0
    %1215 = vadd.xlane.f32.xlu0 %v1214
    %v1216 = vpop.xlane.xlu0 %1215
    %v1217 = vmul.f32 %v1213, %v1204
    %v1218 = vmul.f32 %v1216, %v1204
    %v1219 = vadd.f32 %v1217, 1e-05
    %v1220 = vadd.f32 %v1218, 1e-05
    %v1221 = vrsqrt.pop %v1219
    %v1222 = vrsqrt.pop %v1220
    %v1223 = vmul.f32 %v1207, %v1221
    %v1224 = vmul.f32 %v1208, %v1222
    %v1226 = vlaneseq
    %v1227 = vshrl.u32 %v1226, 7
    %v1228 = vsub.s32 0, %v1227
    %v1229 = vrot.slane %v172, %v1228
    %v1231 = vmul.f32 %v1223, %v1229
    %v1232 = vmul.f32 %v1224, %v1229
    %v1234 = vlaneseq
    %v1235 = vshrl.u32 %v1234, 7
    %v1236 = vsub.s32 0, %v1235
    %v1237 = vrot.slane %v173, %v1236
    %v1239 = vadd.f32 %v1231, %v1237
    %v1240 = vadd.f32 %v1232, %v1237
    %v1242 = vlaneseq
    %v1243 = vshrl.u32 %v1242, 7
    %v1244 = vsub.s32 0, %v1243
    %v1245 = vrot.slane %v178, %v1244
    %v1248 = vsel %vm196, %v1239, 0
    %v1251 = vsel %vm196, %v1240, 0
    %1253 = vmatprep.subr.mxu0 0.0
    %1254 = vmatpush1.msra.mxu0 %v174
    %1255 = vmatprep.subr.mxu0 0.0
    %1256 = vmatpush1.msra.mxu0 %v175
    %1257 = vmatprep.subr.mxu0 0.0
    %1258 = vmatpush1.msra.mxu0 %v176
    %1259 = vmatprep.subr.mxu0 0.0
    %1260 = vmatpush1.msra.mxu0 %v177
    %1261 = vmatprep.subr.mxu0 0.0
    %1262 = vmatpush1.msra.mxu0 0.0
    %1263 = vmatprep.subr.mxu0 0.0
    %1264 = vmatpush1.msra.mxu0 0.0
    %1265 = vmatprep.subr.mxu0 0.0
    %1266 = vmatpush1.msra.mxu0 0.0
    %1267 = vmatprep.subr.mxu0 0.0
    %1268 = vmatpush1.msra.mxu0 0.0
    %1269 = vmatprep.subr.mxu0 0.0
    %1270 = vmatpush1.msra.mxu0 0.0
    %1271 = vmatprep.subr.mxu0 0.0
    %1272 = vmatpush1.msra.mxu0 0.0
    %1273 = vmatprep.subr.mxu0 0.0
    %1274 = vmatpush1.msra.mxu0 0.0
    %1275 = vmatprep.subr.mxu0 0.0
    %1276 = vmatpush1.msra.mxu0 0.0
    %1277 = vmatprep.subr.mxu0 0.0
    %1278 = vmatpush1.msra.mxu0 0.0
    %1279 = vmatprep.subr.mxu0 0.0
    %1280 = vmatpush1.msra.mxu0 0.0
    %1281 = vmatprep.subr.mxu0 0.0
    %1282 = vmatpush1.msra.mxu0 0.0
    %1283 = vmatprep.subr.mxu0 0.0
    %1284 = vmatpush1.msra.mxu0 0.0
    %1285 = vmatprep.subr.mxu0 0.0
    %1286 = vmatpush1.msra.mxu0 0.0
    %1287 = vmatprep.subr.mxu0 0.0
    %1288 = vmatpush1.msra.mxu0 0.0
    %1289 = vmatprep.subr.mxu0 0.0
    %1290 = vmatpush1.msra.mxu0 0.0
    %1291 = vmatprep.subr.mxu0 0.0
    %1292 = vmatpush1.msra.mxu0 0.0
    %1293 = vmatprep.subr.mxu0 0.0
    %1294 = vmatpush1.msra.mxu0 0.0
    %1295 = vmatprep.subr.mxu0 0.0
    %1296 = vmatpush1.msra.mxu0 0.0
    %1297 = vmatprep.subr.mxu0 0.0
    %1298 = vmatpush1.msra.mxu0 0.0
    %1299 = vmatprep.subr.mxu0 0.0
    %1300 = vmatpush1.msra.mxu0 0.0
    %1301 = vmatprep.subr.mxu0 0.0
    %1302 = vmatpush1.msra.mxu0 0.0
    %1303 = vmatprep.subr.mxu0 0.0
    %1304 = vmatpush1.msra.mxu0 0.0
    %1305 = vmatprep.subr.mxu0 0.0
    %1306 = vmatpush1.msra.mxu0 0.0
    %1307 = vmatprep.subr.mxu0 0.0
    %1308 = vmatpush1.msra.mxu0 0.0
    %1309 = vmatprep.subr.mxu0 0.0
    %1310 = vmatpush1.msra.mxu0 0.0
    %1311 = vmatprep.subr.mxu0 0.0
    %1312 = vmatpush1.msra.mxu0 0.0
    %1313 = vmatprep.subr.mxu0 0.0
    %1314 = vmatpush1.msra.mxu0 0.0
    %1315 = vmatprep.subr.mxu0 0.0
    %1316 = vmatpush1.msra.mxu0 0.0
    %1317 = vmatprep.mubr.f32.mxu0 0.0
    %1318 = vmatmul.mubr.f32.gmra.mrb[0].mxu0 %v1248
    %v1319 = vpop.f32.mrb[0].mxu0
    %v1320 = vadd.f32 %v1245, %v1319
    %v1321 = vpop.f32.mrb[0].mxu0
    %1322 = vmatprep.mubr.f32.mxu0 0.0
    %1323 = vmatmul.mubr.f32.gmra.mrb[0].mxu0 %v1251
    %v1324 = vpop.f32.mrb[0].mxu0
    %v1325 = vadd.f32 %v1245, %v1324
    %v1326 = vpop.f32.mrb[0].mxu0
    %1327 = vdwg.mxu0
    %v1328 = vmax.f32 %v1320, 0.0
    %v1329 = vmax.f32 %v1325, 0.0
    %v1331 = vlaneseq
    %v1332 = vshrl.u32 %v1331, 7
    %v1333 = vsub.s32 0, %v1332
    %v1334 = vrot.slane %v187, %v1333
    %vm1336 = vcmask 523264
    %v1338 = vsel %vm1336, %v1328, 0
    %v1341 = vsel %vm1336, %v1329, 0
    %1343 = vmatprep.subr.mxu0 0.0
    %1344 = vmatpush1.msra.mxu0 %v179
    %1345 = vmatprep.subr.mxu0 0.0
    %1346 = vmatpush1.msra.mxu0 %v180
    %1347 = vmatprep.subr.mxu0 0.0
    %1348 = vmatpush1.msra.mxu0 %v181
    %1349 = vmatprep.subr.mxu0 0.0
    %1350 = vmatpush1.msra.mxu0 %v182
    %1351 = vmatprep.subr.mxu0 0.0
    %1352 = vmatpush1.msra.mxu0 %v183
    %1353 = vmatprep.subr.mxu0 0.0
    %1354 = vmatpush1.msra.mxu0 %v184
    %1355 = vmatprep.subr.mxu0 0.0
    %1356 = vmatpush1.msra.mxu0 %v185
    %1357 = vmatprep.subr.mxu0 0.0
    %1358 = vmatpush1.msra.mxu0 %v186
    %1359 = vmatprep.subr.mxu0 0.0
    %1360 = vmatpush1.msra.mxu0 0.0
    %1361 = vmatprep.subr.mxu0 0.0
    %1362 = vmatpush1.msra.mxu0 0.0
    %1363 = vmatprep.subr.mxu0 0.0
    %1364 = vmatpush1.msra.mxu0 0.0
    %1365 = vmatprep.subr.mxu0 0.0
    %1366 = vmatpush1.msra.mxu0 0.0
    %1367 = vmatprep.subr.mxu0 0.0
    %1368 = vmatpush1.msra.mxu0 0.0
    %1369 = vmatprep.subr.mxu0 0.0
    %1370 = vmatpush1.msra.mxu0 0.0
    %1371 = vmatprep.subr.mxu0 0.0
    %1372 = vmatpush1.msra.mxu0 0.0
    %1373 = vmatprep.subr.mxu0 0.0
    %1374 = vmatpush1.msra.mxu0 0.0
    %1375 = vmatprep.subr.mxu0 0.0
    %1376 = vmatpush1.msra.mxu0 0.0
    %1377 = vmatprep.subr.mxu0 0.0
    %1378 = vmatpush1.msra.mxu0 0.0
    %1379 = vmatprep.subr.mxu0 0.0
    %1380 = vmatpush1.msra.mxu0 0.0
    %1381 = vmatprep.subr.mxu0 0.0
    %1382 = vmatpush1.msra.mxu0 0.0
    %1383 = vmatprep.subr.mxu0 0.0
    %1384 = vmatpush1.msra.mxu0 0.0
    %1385 = vmatprep.subr.mxu0 0.0
    %1386 = vmatpush1.msra.mxu0 0.0
    %1387 = vmatprep.subr.mxu0 0.0
    %1388 = vmatpush1.msra.mxu0 0.0
    %1389 = vmatprep.subr.mxu0 0.0
    %1390 = vmatpush1.msra.mxu0 0.0
    %1391 = vmatprep.subr.mxu0 0.0
    %1392 = vmatpush1.msra.mxu0 0.0
    %1393 = vmatprep.subr.mxu0 0.0
    %1394 = vmatpush1.msra.mxu0 0.0
    %1395 = vmatprep.subr.mxu0 0.0
    %1396 = vmatpush1.msra.mxu0 0.0
    %1397 = vmatprep.subr.mxu0 0.0
    %1398 = vmatpush1.msra.mxu0 0.0
    %1399 = vmatprep.subr.mxu0 0.0
    %1400 = vmatpush1.msra.mxu0 0.0
    %1401 = vmatprep.subr.mxu0 0.0
    %1402 = vmatpush1.msra.mxu0 0.0
    %1403 = vmatprep.subr.mxu0 0.0
    %1404 = vmatpush1.msra.mxu0 0.0
    %1405 = vmatprep.subr.mxu0 0.0
    %1406 = vmatpush1.msra.mxu0 0.0
    %1407 = vmatprep.mubr.f32.mxu0 0.0
    %1408 = vmatmul.mubr.f32.gmra.mrb[0].mxu0 %v1338
    %v1409 = vpop.f32.mrb[0].mxu0
    %v1410 = vadd.f32 %v1334, %v1409
    %v1411 = vpop.f32.mrb[0].mxu0
    %1412 = vmatprep.mubr.f32.mxu0 0.0
    %1413 = vmatmul.mubr.f32.gmra.mrb[0].mxu0 %v1341
    %v1414 = vpop.f32.mrb[0].mxu0
    %v1415 = vadd.f32 %v1334, %v1414
    %v1416 = vpop.f32.mrb[0].mxu0
    %1417 = vdwg.mxu0
    %v1418 = vadd.f32 %v1239, %v1410
    %v1419 = vadd.f32 %v1240, %v1415
    %v1420 = vsel %vm196, %v1418, 0.0
    %1421 = vadd.xlane.f32.xlu0 %v1420
    %v1422 = vpop.xlane.xlu0 %1421
    %v1423 = vsel %vm196, %v1419, 0.0
    %1424 = vadd.xlane.f32.xlu0 %v1423
    %v1425 = vpop.xlane.xlu0 %1424
    %v1426 = vmul.f32 %v1422, %v1204
    %v1427 = vmul.f32 %v1425, %v1204
    %v1428 = vsub.f32 %v1418, %v1426
    %v1429 = vsub.f32 %v1419, %v1427
    %v1430 = vmul.f32 %v1428, %v1428
    %v1431 = vmul.f32 %v1429, %v1429
    %v1432 = vsel %vm196, %v1430, 0.0
    %1433 = vadd.xlane.f32.xlu0 %v1432
    %v1434 = vpop.xlane.xlu0 %1433
    %v1435 = vsel %vm196, %v1431, 0.0
    %1436 = vadd.xlane.f32.xlu0 %v1435
    %v1437 = vpop.xlane.xlu0 %1436
    %v1438 = vmul.f32 %v1434, %v1204
    %v1439 = vmul.f32 %v1437, %v1204
    %v1440 = vadd.f32 %v1438, 1e-05
    %v1441 = vadd.f32 %v1439, 1e-05
    %v1442 = vrsqrt.pop %v1440
    %v1443 = vrsqrt.pop %v1441
    %v1444 = vmul.f32 %v1428, %v1442
    %v1445 = vmul.f32 %v1429, %v1443
    %v1447 = vlaneseq
    %v1448 = vshrl.u32 %v1447, 7
    %v1449 = vsub.s32 0, %v1448
    %v1450 = vrot.slane %v188, %v1449
    %v1452 = vmul.f32 %v1444, %v1450
    %v1453 = vmul.f32 %v1445, %v1450
    %v1455 = vlaneseq
    %v1456 = vshrl.u32 %v1455, 7
    %v1457 = vsub.s32 0, %v1456
    %v1458 = vrot.slane %v189, %v1457
    %v1460 = vadd.f32 %v1452, %v1458
    %v1461 = vadd.f32 %v1453, %v1458
    %s1462 = scalar_lea.vmem %s3, 32
    %v1463 = vld [vmem:[%s1462] sm:$0xff]
    %v1464 = vld [vmem:[%s1462 + $0x8] sm:$0xff]
    %v1465 = vld [vmem:[%s1462 + $0x10] sm:$0xff]
    %v1466 = vld [vmem:[%s1462 + $0x18] sm:$0xff]
    %s1467 = scalar_lea.vmem %s4, 1
    %v1468 = vld [vmem:[%s1467] sm:$0x1]
    %s1469 = scalar_lea.vmem %s5, 32
    %v1470 = vld [vmem:[%s1469] sm:$0xff]
    %v1471 = vld [vmem:[%s1469 + $0x8] sm:$0xff]
    %v1472 = vld [vmem:[%s1469 + $0x10] sm:$0xff]
    %v1473 = vld [vmem:[%s1469 + $0x18] sm:$0xff]
    %s1474 = scalar_lea.vmem %s6, 1
    %v1475 = vld [vmem:[%s1474] sm:$0x1]
    %s1476 = scalar_lea.vmem %s7, 1
    %v1477 = vld [vmem:[%s1476] sm:$0x1]
    %s1478 = scalar_lea.vmem %s8, 1
    %v1479 = vld [vmem:[%s1478] sm:$0x1]
    %s1480 = scalar_lea.vmem %s9, 32
    %v1481 = vld [vmem:[%s1480] sm:$0xff]
    %v1482 = vld [vmem:[%s1480 + $0x8] sm:$0xff]
    %v1483 = vld [vmem:[%s1480 + $0x10] sm:$0xff]
    %v1484 = vld [vmem:[%s1480 + $0x18] sm:$0xff]
    %s1485 = scalar_lea.vmem %s10, 1
    %v1486 = vld [vmem:[%s1485] sm:$0x1]
    %s1487 = scalar_lea.vmem %s11, 64
    %v1488 = vld [vmem:[%s1487] sm:$0xff]
    %v1489 = vld [vmem:[%s1487 + $0x8] sm:$0xff]
    %v1490 = vld [vmem:[%s1487 + $0x10] sm:$0xff]
    %v1491 = vld [vmem:[%s1487 + $0x18] sm:$0xff]
    %v1492 = vld [vmem:[%s1487 + $0x20] sm:$0xff]
    %v1493 = vld [vmem:[%s1487 + $0x28] sm:$0xff]
    %v1494 = vld [vmem:[%s1487 + $0x30] sm:$0xff]
    %v1495 = vld [vmem:[%s1487 + $0x38] sm:$0xff]
    %s1496 = scalar_lea.vmem %s12, 1
    %v1497 = vld [vmem:[%s1496] sm:$0x1]
    %s1498 = scalar_lea.vmem %s13, 1
    %v1499 = vld [vmem:[%s1498] sm:$0x1]
    %s1500 = scalar_lea.vmem %s14, 1
    %v1501 = vld [vmem:[%s1500] sm:$0x1]
    %v1503 = vlaneseq
    %v1504 = vshrl.u32 %v1503, 7
    %v1505 = vsub.s32 0, %v1504
    %v1506 = vrot.slane %v1468, %v1505
    %v1509 = vsel %vm196, %v1460, 0
    %v1512 = vsel %vm196, %v1461, 0
    %1514 = vmatprep.subr.mxu0 0.0
    %1515 = vmatpush1.msra.mxu0 %v1463
    %1516 = vmatprep.subr.mxu0 0.0
    %1517 = vmatpush1.msra.mxu0 %v1464
    %1518 = vmatprep.subr.mxu0 0.0
    %1519 = vmatpush1.msra.mxu0 %v1465
    %1520 = vmatprep.subr.mxu0 0.0
    %1521 = vmatpush1.msra.mxu0 %v1466
    %1522 = vmatprep.subr.mxu0 0.0
    %1523 = vmatpush1.msra.mxu0 0.0
    %1524 = vmatprep.subr.mxu0 0.0
    %1525 = vmatpush1.msra.mxu0 0.0
    %1526 = vmatprep.subr.mxu0 0.0
    %1527 = vmatpush1.msra.mxu0 0.0
    %1528 = vmatprep.subr.mxu0 0.0
    %1529 = vmatpush1.msra.mxu0 0.0
    %1530 = vmatprep.subr.mxu0 0.0
    %1531 = vmatpush1.msra.mxu0 0.0
    %1532 = vmatprep.subr.mxu0 0.0
    %1533 = vmatpush1.msra.mxu0 0.0
    %1534 = vmatprep.subr.mxu0 0.0
    %1535 = vmatpush1.msra.mxu0 0.0
    %1536 = vmatprep.subr.mxu0 0.0
    %1537 = vmatpush1.msra.mxu0 0.0
    %1538 = vmatprep.subr.mxu0 0.0
    %1539 = vmatpush1.msra.mxu0 0.0
    %1540 = vmatprep.subr.mxu0 0.0
    %1541 = vmatpush1.msra.mxu0 0.0
    %1542 = vmatprep.subr.mxu0 0.0
    %1543 = vmatpush1.msra.mxu0 0.0
    %1544 = vmatprep.subr.mxu0 0.0
    %1545 = vmatpush1.msra.mxu0 0.0
    %1546 = vmatprep.subr.mxu0 0.0
    %1547 = vmatpush1.msra.mxu0 0.0
    %1548 = vmatprep.subr.mxu0 0.0
    %1549 = vmatpush1.msra.mxu0 0.0
    %1550 = vmatprep.subr.mxu0 0.0
    %1551 = vmatpush1.msra.mxu0 0.0
    %1552 = vmatprep.subr.mxu0 0.0
    %1553 = vmatpush1.msra.mxu0 0.0
    %1554 = vmatprep.subr.mxu0 0.0
    %1555 = vmatpush1.msra.mxu0 0.0
    %1556 = vmatprep.subr.mxu0 0.0
    %1557 = vmatpush1.msra.mxu0 0.0
    %1558 = vmatprep.subr.mxu0 0.0
    %1559 = vmatpush1.msra.mxu0 0.0
    %1560 = vmatprep.subr.mxu0 0.0
    %1561 = vmatpush1.msra.mxu0 0.0
    %1562 = vmatprep.subr.mxu0 0.0
    %1563 = vmatpush1.msra.mxu0 0.0
    %1564 = vmatprep.subr.mxu0 0.0
    %1565 = vmatpush1.msra.mxu0 0.0
    %1566 = vmatprep.subr.mxu0 0.0
    %1567 = vmatpush1.msra.mxu0 0.0
    %1568 = vmatprep.subr.mxu0 0.0
    %1569 = vmatpush1.msra.mxu0 0.0
    %1570 = vmatprep.subr.mxu0 0.0
    %1571 = vmatpush1.msra.mxu0 0.0
    %1572 = vmatprep.subr.mxu0 0.0
    %1573 = vmatpush1.msra.mxu0 0.0
    %1574 = vmatprep.subr.mxu0 0.0
    %1575 = vmatpush1.msra.mxu0 0.0
    %1576 = vmatprep.subr.mxu0 0.0
    %1577 = vmatpush1.msra.mxu0 0.0
    %1578 = vmatprep.mubr.f32.mxu0 0.0
    %1579 = vmatmul.mubr.f32.gmra.mrb[0].mxu0 %v1509
    %v1580 = vpop.f32.mrb[0].mxu0
    %v1581 = vadd.f32 %v1506, %v1580
    %v1582 = vpop.f32.mrb[0].mxu0
    %1583 = vmatprep.mubr.f32.mxu0 0.0
    %1584 = vmatmul.mubr.f32.gmra.mrb[0].mxu0 %v1512
    %v1585 = vpop.f32.mrb[0].mxu0
    %v1586 = vadd.f32 %v1506, %v1585
    %v1587 = vpop.f32.mrb[0].mxu0
    %1588 = vdwg.mxu0
    %1591 = vrot.lane.b32.xlu0 %v1581, 96
    %v1592 = vpop.permute.xlu0 %1591
    %1593 = vrot.lane.b32.xlu0 %v1586, 96
    %v1594 = vpop.permute.xlu0 %1593
    %v1595 = vsel %vm284, %v1581, 0
    %v1597 = vsel %vm284, %v1586, 0
    %v1599 = vsel %vm284, %v1592, 0
    %v1601 = vsel %vm284, %v1594, 0
    %1603 = vmatprep.subr.mxu0 0.0
    %1604 = vmatpush1.xpose.msra.mxu0 %v1599
    %1605 = vmatprep.subr.mxu0 0.0
    %1606 = vmatpush1.xpose.msra.mxu0 %v1601
    %1607 = vmatprep.subr.mxu0 0.0
    %1608 = vmatpush1.xpose.msra.mxu0 0.0
    %1609 = vmatprep.subr.mxu0 0.0
    %1610 = vmatpush1.xpose.msra.mxu0 0.0
    %1611 = vmatprep.subr.mxu0 0.0
    %1612 = vmatpush1.xpose.msra.mxu0 0.0
    %1613 = vmatprep.subr.mxu0 0.0
    %1614 = vmatpush1.xpose.msra.mxu0 0.0
    %1615 = vmatprep.subr.mxu0 0.0
    %1616 = vmatpush1.xpose.msra.mxu0 0.0
    %1617 = vmatprep.subr.mxu0 0.0
    %1618 = vmatpush1.xpose.msra.mxu0 0.0
    %1619 = vmatprep.subr.mxu0 0.0
    %1620 = vmatpush1.xpose.msra.mxu0 0.0
    %1621 = vmatprep.subr.mxu0 0.0
    %1622 = vmatpush1.xpose.msra.mxu0 0.0
    %1623 = vmatprep.subr.mxu0 0.0
    %1624 = vmatpush1.xpose.msra.mxu0 0.0
    %1625 = vmatprep.subr.mxu0 0.0
    %1626 = vmatpush1.xpose.msra.mxu0 0.0
    %1627 = vmatprep.subr.mxu0 0.0
    %1628 = vmatpush1.xpose.msra.mxu0 0.0
    %1629 = vmatprep.subr.mxu0 0.0
    %1630 = vmatpush1.xpose.msra.mxu0 0.0
    %1631 = vmatprep.subr.mxu0 0.0
    %1632 = vmatpush1.xpose.msra.mxu0 0.0
    %1633 = vmatprep.subr.mxu0 0.0
    %1634 = vmatpush1.xpose.msra.mxu0 0.0
    %1635 = vmatprep.subr.mxu0 0.0
    %1636 = vmatpush1.xpose.msra.mxu0 0.0
    %1637 = vmatprep.subr.mxu0 0.0
    %1638 = vmatpush1.xpose.msra.mxu0 0.0
    %1639 = vmatprep.subr.mxu0 0.0
    %1640 = vmatpush1.xpose.msra.mxu0 0.0
    %1641 = vmatprep.subr.mxu0 0.0
    %1642 = vmatpush1.xpose.msra.mxu0 0.0
    %1643 = vmatprep.subr.mxu0 0.0
    %1644 = vmatpush1.xpose.msra.mxu0 0.0
    %1645 = vmatprep.subr.mxu0 0.0
    %1646 = vmatpush1.xpose.msra.mxu0 0.0
    %1647 = vmatprep.subr.mxu0 0.0
    %1648 = vmatpush1.xpose.msra.mxu0 0.0
    %1649 = vmatprep.subr.mxu0 0.0
    %1650 = vmatpush1.xpose.msra.mxu0 0.0
    %1651 = vmatprep.subr.mxu0 0.0
    %1652 = vmatpush1.xpose.msra.mxu0 0.0
    %1653 = vmatprep.subr.mxu0 0.0
    %1654 = vmatpush1.xpose.msra.mxu0 0.0
    %1655 = vmatprep.subr.mxu0 0.0
    %1656 = vmatpush1.xpose.msra.mxu0 0.0
    %1657 = vmatprep.subr.mxu0 0.0
    %1658 = vmatpush1.xpose.msra.mxu0 0.0
    %1659 = vmatprep.subr.mxu0 0.0
    %1660 = vmatpush1.xpose.msra.mxu0 0.0
    %1661 = vmatprep.subr.mxu0 0.0
    %1662 = vmatpush1.xpose.msra.mxu0 0.0
    %1663 = vmatprep.subr.mxu0 0.0
    %1664 = vmatpush1.xpose.msra.mxu0 0.0
    %1665 = vmatprep.subr.mxu0 0.0
    %1666 = vmatpush1.xpose.msra.mxu0 0.0
    %1667 = vmatprep.mubr.f32.mxu0 0.0
    %1668 = vmatmul.mubr.f32.gmra.mrb[0].mxu0 %v1595
    %v1669 = vpop.f32.mrb[0].mxu0
    %v1670 = vadd.f32 %v160, %v1669
    %v1671 = vpop.f32.mrb[0].mxu0
    %1672 = vmatprep.mubr.f32.mxu0 0.0
    %1673 = vmatmul.mubr.f32.gmra.mrb[0].mxu0 %v1597
    %v1674 = vpop.f32.mrb[0].mxu0
    %v1675 = vadd.f32 %v161, %v1674
    %v1676 = vpop.f32.mrb[0].mxu0
    %1677 = vdwg.mxu0
    %v1678 = vsel %vm368, %v1670, -inf
    %1679 = vmax.xlane.f32.xlu0 %v1678
    %v1680 = vpop.xlane.xlu0 %1679
    %v1681 = vsel %vm368, %v1675, -inf
    %1682 = vmax.xlane.f32.xlu0 %v1681
    %v1683 = vpop.xlane.xlu0 %1682
    %v1684 = vsub.f32 %v1670, %v1680
    %v1685 = vsub.f32 %v1675, %v1683
    %v1686 = vmul.f32 %v1684, 1.442695
    %v1687 = vpow.pop %v1686
    %v1688 = vmul.f32 %v1685, 1.442695
    %v1689 = vpow.pop %v1688
    %v1690 = vsel %vm368, %v1687, 0.0
    %1691 = vadd.xlane.f32.xlu0 %v1690
    %v1692 = vpop.xlane.xlu0 %1691
    %v1693 = vsel %vm368, %v1689, 0.0
    %1694 = vadd.xlane.f32.xlu0 %v1693
    %v1695 = vpop.xlane.xlu0 %1694
    %v1696 = vrcp.pop %v1692
    %v1697 = vrcp.pop %v1695
    %v1698 = vmul.f32 %v1687, %v1696
    %v1699 = vmul.f32 %v1689, %v1697
    %1700 = vrot.lane.b32.xlu0 %v1581, 64
    %v1701 = vpop.permute.xlu0 %1700
    %1702 = vrot.lane.b32.xlu0 %v1586, 64
    %v1703 = vpop.permute.xlu0 %1702
    %v1707 = vsel %vm368, %v1698, 0
    %v1710 = vsel %vm368, %v1699, 0
    %1712 = vmatprep.subr.mxu0 0.0
    %1713 = vmatpush1.msra.mxu0 %v1701
    %1714 = vmatprep.subr.mxu0 0.0
    %1715 = vmatpush1.msra.mxu0 %v1703
    %1716 = vmatprep.subr.mxu0 0.0
    %1717 = vmatpush1.msra.mxu0 0.0
    %1718 = vmatprep.subr.mxu0 0.0
    %1719 = vmatpush1.msra.mxu0 0.0
    %1720 = vmatprep.subr.mxu0 0.0
    %1721 = vmatpush1.msra.mxu0 0.0
    %1722 = vmatprep.subr.mxu0 0.0
    %1723 = vmatpush1.msra.mxu0 0.0
    %1724 = vmatprep.subr.mxu0 0.0
    %1725 = vmatpush1.msra.mxu0 0.0
    %1726 = vmatprep.subr.mxu0 0.0
    %1727 = vmatpush1.msra.mxu0 0.0
    %1728 = vmatprep.subr.mxu0 0.0
    %1729 = vmatpush1.msra.mxu0 0.0
    %1730 = vmatprep.subr.mxu0 0.0
    %1731 = vmatpush1.msra.mxu0 0.0
    %1732 = vmatprep.subr.mxu0 0.0
    %1733 = vmatpush1.msra.mxu0 0.0
    %1734 = vmatprep.subr.mxu0 0.0
    %1735 = vmatpush1.msra.mxu0 0.0
    %1736 = vmatprep.subr.mxu0 0.0
    %1737 = vmatpush1.msra.mxu0 0.0
    %1738 = vmatprep.subr.mxu0 0.0
    %1739 = vmatpush1.msra.mxu0 0.0
    %1740 = vmatprep.subr.mxu0 0.0
    %1741 = vmatpush1.msra.mxu0 0.0
    %1742 = vmatprep.subr.mxu0 0.0
    %1743 = vmatpush1.msra.mxu0 0.0
    %1744 = vmatprep.subr.mxu0 0.0
    %1745 = vmatpush1.msra.mxu0 0.0
    %1746 = vmatprep.subr.mxu0 0.0
    %1747 = vmatpush1.msra.mxu0 0.0
    %1748 = vmatprep.subr.mxu0 0.0
    %1749 = vmatpush1.msra.mxu0 0.0
    %1750 = vmatprep.subr.mxu0 0.0
    %1751 = vmatpush1.msra.mxu0 0.0
    %1752 = vmatprep.subr.mxu0 0.0
    %1753 = vmatpush1.msra.mxu0 0.0
    %1754 = vmatprep.subr.mxu0 0.0
    %1755 = vmatpush1.msra.mxu0 0.0
    %1756 = vmatprep.subr.mxu0 0.0
    %1757 = vmatpush1.msra.mxu0 0.0
    %1758 = vmatprep.subr.mxu0 0.0
    %1759 = vmatpush1.msra.mxu0 0.0
    %1760 = vmatprep.subr.mxu0 0.0
    %1761 = vmatpush1.msra.mxu0 0.0
    %1762 = vmatprep.subr.mxu0 0.0
    %1763 = vmatpush1.msra.mxu0 0.0
    %1764 = vmatprep.subr.mxu0 0.0
    %1765 = vmatpush1.msra.mxu0 0.0
    %1766 = vmatprep.subr.mxu0 0.0
    %1767 = vmatpush1.msra.mxu0 0.0
    %1768 = vmatprep.subr.mxu0 0.0
    %1769 = vmatpush1.msra.mxu0 0.0
    %1770 = vmatprep.subr.mxu0 0.0
    %1771 = vmatpush1.msra.mxu0 0.0
    %1772 = vmatprep.subr.mxu0 0.0
    %1773 = vmatpush1.msra.mxu0 0.0
    %1774 = vmatprep.subr.mxu0 0.0
    %1775 = vmatpush1.msra.mxu0 0.0
    %1776 = vmatprep.mubr.f32.mxu0 0.0
    %1777 = vmatmul.mubr.f32.gmra.mrb[0].mxu0 %v1707
    %v1778 = vpop.f32.mrb[0].mxu0
    %v1779 = vadd.f32 0.0, %v1778
    %v1780 = vpop.f32.mrb[0].mxu0
    %1781 = vmatprep.mubr.f32.mxu0 0.0
    %1782 = vmatmul.mubr.f32.gmra.mrb[0].mxu0 %v1710
    %v1783 = vpop.f32.mrb[0].mxu0
    %v1784 = vadd.f32 0.0, %v1783
    %v1785 = vpop.f32.mrb[0].mxu0
    %1786 = vdwg.mxu0
    %1787 = vrot.lane.b32.xlu0 %v1581, 120
    %v1788 = vpop.permute.xlu0 %1787
    %1789 = vrot.lane.b32.xlu0 %v1586, 120
    %v1790 = vpop.permute.xlu0 %1789
    %1791 = vrot.lane.b32.xlu0 %v1581, 88
    %v1792 = vpop.permute.xlu0 %1791
    %1793 = vrot.lane.b32.xlu0 %v1586, 88
    %v1794 = vpop.permute.xlu0 %1793
    %v1795 = vsel %vm284, %v1788, 0
    %v1797 = vsel %vm284, %v1790, 0
    %v1799 = vsel %vm284, %v1792, 0
    %v1801 = vsel %vm284, %v1794, 0
    %1803 = vmatprep.subr.mxu0 0.0
    %1804 = vmatpush1.xpose.msra.mxu0 %v1799
    %1805 = vmatprep.subr.mxu0 0.0
    %1806 = vmatpush1.xpose.msra.mxu0 %v1801
    %1807 = vmatprep.subr.mxu0 0.0
    %1808 = vmatpush1.xpose.msra.mxu0 0.0
    %1809 = vmatprep.subr.mxu0 0.0
    %1810 = vmatpush1.xpose.msra.mxu0 0.0
    %1811 = vmatprep.subr.mxu0 0.0
    %1812 = vmatpush1.xpose.msra.mxu0 0.0
    %1813 = vmatprep.subr.mxu0 0.0
    %1814 = vmatpush1.xpose.msra.mxu0 0.0
    %1815 = vmatprep.subr.mxu0 0.0
    %1816 = vmatpush1.xpose.msra.mxu0 0.0
    %1817 = vmatprep.subr.mxu0 0.0
    %1818 = vmatpush1.xpose.msra.mxu0 0.0
    %1819 = vmatprep.subr.mxu0 0.0
    %1820 = vmatpush1.xpose.msra.mxu0 0.0
    %1821 = vmatprep.subr.mxu0 0.0
    %1822 = vmatpush1.xpose.msra.mxu0 0.0
    %1823 = vmatprep.subr.mxu0 0.0
    %1824 = vmatpush1.xpose.msra.mxu0 0.0
    %1825 = vmatprep.subr.mxu0 0.0
    %1826 = vmatpush1.xpose.msra.mxu0 0.0
    %1827 = vmatprep.subr.mxu0 0.0
    %1828 = vmatpush1.xpose.msra.mxu0 0.0
    %1829 = vmatprep.subr.mxu0 0.0
    %1830 = vmatpush1.xpose.msra.mxu0 0.0
    %1831 = vmatprep.subr.mxu0 0.0
    %1832 = vmatpush1.xpose.msra.mxu0 0.0
    %1833 = vmatprep.subr.mxu0 0.0
    %1834 = vmatpush1.xpose.msra.mxu0 0.0
    %1835 = vmatprep.subr.mxu0 0.0
    %1836 = vmatpush1.xpose.msra.mxu0 0.0
    %1837 = vmatprep.subr.mxu0 0.0
    %1838 = vmatpush1.xpose.msra.mxu0 0.0
    %1839 = vmatprep.subr.mxu0 0.0
    %1840 = vmatpush1.xpose.msra.mxu0 0.0
    %1841 = vmatprep.subr.mxu0 0.0
    %1842 = vmatpush1.xpose.msra.mxu0 0.0
    %1843 = vmatprep.subr.mxu0 0.0
    %1844 = vmatpush1.xpose.msra.mxu0 0.0
    %1845 = vmatprep.subr.mxu0 0.0
    %1846 = vmatpush1.xpose.msra.mxu0 0.0
    %1847 = vmatprep.subr.mxu0 0.0
    %1848 = vmatpush1.xpose.msra.mxu0 0.0
    %1849 = vmatprep.subr.mxu0 0.0
    %1850 = vmatpush1.xpose.msra.mxu0 0.0
    %1851 = vmatprep.subr.mxu0 0.0
    %1852 = vmatpush1.xpose.msra.mxu0 0.0
    %1853 = vmatprep.subr.mxu0 0.0
    %1854 = vmatpush1.xpose.msra.mxu0 0.0
    %1855 = vmatprep.subr.mxu0 0.0
    %1856 = vmatpush1.xpose.msra.mxu0 0.0
    %1857 = vmatprep.subr.mxu0 0.0
    %1858 = vmatpush1.xpose.msra.mxu0 0.0
    %1859 = vmatprep.subr.mxu0 0.0
    %1860 = vmatpush1.xpose.msra.mxu0 0.0
    %1861 = vmatprep.subr.mxu0 0.0
    %1862 = vmatpush1.xpose.msra.mxu0 0.0
    %1863 = vmatprep.subr.mxu0 0.0
    %1864 = vmatpush1.xpose.msra.mxu0 0.0
    %1865 = vmatprep.subr.mxu0 0.0
    %1866 = vmatpush1.xpose.msra.mxu0 0.0
    %1867 = vmatprep.mubr.f32.mxu0 0.0
    %1868 = vmatmul.mubr.f32.gmra.mrb[0].mxu0 %v1795
    %v1869 = vpop.f32.mrb[0].mxu0
    %v1870 = vadd.f32 %v160, %v1869
    %v1871 = vpop.f32.mrb[0].mxu0
    %1872 = vmatprep.mubr.f32.mxu0 0.0
    %1873 = vmatmul.mubr.f32.gmra.mrb[0].mxu0 %v1797
    %v1874 = vpop.f32.mrb[0].mxu0
    %v1875 = vadd.f32 %v161, %v1874
    %v1876 = vpop.f32.mrb[0].mxu0
    %1877 = vdwg.mxu0
    %v1878 = vsel %vm368, %v1870, -inf
    %1879 = vmax.xlane.f32.xlu0 %v1878
    %v1880 = vpop.xlane.xlu0 %1879
    %v1881 = vsel %vm368, %v1875, -inf
    %1882 = vmax.xlane.f32.xlu0 %v1881
    %v1883 = vpop.xlane.xlu0 %1882
    %v1884 = vsub.f32 %v1870, %v1880
    %v1885 = vsub.f32 %v1875, %v1883
    %v1886 = vmul.f32 %v1884, 1.442695
    %v1887 = vpow.pop %v1886
    %v1888 = vmul.f32 %v1885, 1.442695
    %v1889 = vpow.pop %v1888
    %v1890 = vsel %vm368, %v1887, 0.0
    %1891 = vadd.xlane.f32.xlu0 %v1890
    %v1892 = vpop.xlane.xlu0 %1891
    %v1893 = vsel %vm368, %v1889, 0.0
    %1894 = vadd.xlane.f32.xlu0 %v1893
    %v1895 = vpop.xlane.xlu0 %1894
    %v1896 = vrcp.pop %v1892
    %v1897 = vrcp.pop %v1895
    %v1898 = vmul.f32 %v1887, %v1896
    %v1899 = vmul.f32 %v1889, %v1897
    %1900 = vrot.lane.b32.xlu0 %v1581, 56
    %v1901 = vpop.permute.xlu0 %1900
    %1902 = vrot.lane.b32.xlu0 %v1586, 56
    %v1903 = vpop.permute.xlu0 %1902
    %v1907 = vsel %vm368, %v1898, 0
    %v1910 = vsel %vm368, %v1899, 0
    %1912 = vmatprep.subr.mxu0 0.0
    %1913 = vmatpush1.msra.mxu0 %v1901
    %1914 = vmatprep.subr.mxu0 0.0
    %1915 = vmatpush1.msra.mxu0 %v1903
    %1916 = vmatprep.subr.mxu0 0.0
    %1917 = vmatpush1.msra.mxu0 0.0
    %1918 = vmatprep.subr.mxu0 0.0
    %1919 = vmatpush1.msra.mxu0 0.0
    %1920 = vmatprep.subr.mxu0 0.0
    %1921 = vmatpush1.msra.mxu0 0.0
    %1922 = vmatprep.subr.mxu0 0.0
    %1923 = vmatpush1.msra.mxu0 0.0
    %1924 = vmatprep.subr.mxu0 0.0
    %1925 = vmatpush1.msra.mxu0 0.0
    %1926 = vmatprep.subr.mxu0 0.0
    %1927 = vmatpush1.msra.mxu0 0.0
    %1928 = vmatprep.subr.mxu0 0.0
    %1929 = vmatpush1.msra.mxu0 0.0
    %1930 = vmatprep.subr.mxu0 0.0
    %1931 = vmatpush1.msra.mxu0 0.0
    %1932 = vmatprep.subr.mxu0 0.0
    %1933 = vmatpush1.msra.mxu0 0.0
    %1934 = vmatprep.subr.mxu0 0.0
    %1935 = vmatpush1.msra.mxu0 0.0
    %1936 = vmatprep.subr.mxu0 0.0
    %1937 = vmatpush1.msra.mxu0 0.0
    %1938 = vmatprep.subr.mxu0 0.0
    %1939 = vmatpush1.msra.mxu0 0.0
    %1940 = vmatprep.subr.mxu0 0.0
    %1941 = vmatpush1.msra.mxu0 0.0
    %1942 = vmatprep.subr.mxu0 0.0
    %1943 = vmatpush1.msra.mxu0 0.0
    %1944 = vmatprep.subr.mxu0 0.0
    %1945 = vmatpush1.msra.mxu0 0.0
    %1946 = vmatprep.subr.mxu0 0.0
    %1947 = vmatpush1.msra.mxu0 0.0
    %1948 = vmatprep.subr.mxu0 0.0
    %1949 = vmatpush1.msra.mxu0 0.0
    %1950 = vmatprep.subr.mxu0 0.0
    %1951 = vmatpush1.msra.mxu0 0.0
    %1952 = vmatprep.subr.mxu0 0.0
    %1953 = vmatpush1.msra.mxu0 0.0
    %1954 = vmatprep.subr.mxu0 0.0
    %1955 = vmatpush1.msra.mxu0 0.0
    %1956 = vmatprep.subr.mxu0 0.0
    %1957 = vmatpush1.msra.mxu0 0.0
    %1958 = vmatprep.subr.mxu0 0.0
    %1959 = vmatpush1.msra.mxu0 0.0
    %1960 = vmatprep.subr.mxu0 0.0
    %1961 = vmatpush1.msra.mxu0 0.0
    %1962 = vmatprep.subr.mxu0 0.0
    %1963 = vmatpush1.msra.mxu0 0.0
    %1964 = vmatprep.subr.mxu0 0.0
    %1965 = vmatpush1.msra.mxu0 0.0
    %1966 = vmatprep.subr.mxu0 0.0
    %1967 = vmatpush1.msra.mxu0 0.0
    %1968 = vmatprep.subr.mxu0 0.0
    %1969 = vmatpush1.msra.mxu0 0.0
    %1970 = vmatprep.subr.mxu0 0.0
    %1971 = vmatpush1.msra.mxu0 0.0
    %1972 = vmatprep.subr.mxu0 0.0
    %1973 = vmatpush1.msra.mxu0 0.0
    %1974 = vmatprep.subr.mxu0 0.0
    %1975 = vmatpush1.msra.mxu0 0.0
    %1976 = vmatprep.mubr.f32.mxu0 0.0
    %1977 = vmatmul.mubr.f32.gmra.mrb[0].mxu0 %v1907
    %v1978 = vpop.f32.mrb[0].mxu0
    %v1979 = vadd.f32 0.0, %v1978
    %v1980 = vpop.f32.mrb[0].mxu0
    %1981 = vmatprep.mubr.f32.mxu0 0.0
    %1982 = vmatmul.mubr.f32.gmra.mrb[0].mxu0 %v1910
    %v1983 = vpop.f32.mrb[0].mxu0
    %v1984 = vadd.f32 0.0, %v1983
    %v1985 = vpop.f32.mrb[0].mxu0
    %1986 = vdwg.mxu0
    %1987 = vrot.lane.b32.xlu0 %v1581, 112
    %v1988 = vpop.permute.xlu0 %1987
    %1989 = vrot.lane.b32.xlu0 %v1586, 112
    %v1990 = vpop.permute.xlu0 %1989
    %1991 = vrot.lane.b32.xlu0 %v1581, 80
    %v1992 = vpop.permute.xlu0 %1991
    %1993 = vrot.lane.b32.xlu0 %v1586, 80
    %v1994 = vpop.permute.xlu0 %1993
    %v1995 = vsel %vm284, %v1988, 0
    %v1997 = vsel %vm284, %v1990, 0
    %v1999 = vsel %vm284, %v1992, 0
    %v2001 = vsel %vm284, %v1994, 0
    %2003 = vmatprep.subr.mxu0 0.0
    %2004 = vmatpush1.xpose.msra.mxu0 %v1999
    %2005 = vmatprep.subr.mxu0 0.0
    %2006 = vmatpush1.xpose.msra.mxu0 %v2001
    %2007 = vmatprep.subr.mxu0 0.0
    %2008 = vmatpush1.xpose.msra.mxu0 0.0
    %2009 = vmatprep.subr.mxu0 0.0
    %2010 = vmatpush1.xpose.msra.mxu0 0.0
    %2011 = vmatprep.subr.mxu0 0.0
    %2012 = vmatpush1.xpose.msra.mxu0 0.0
    %2013 = vmatprep.subr.mxu0 0.0
    %2014 = vmatpush1.xpose.msra.mxu0 0.0
    %2015 = vmatprep.subr.mxu0 0.0
    %2016 = vmatpush1.xpose.msra.mxu0 0.0
    %2017 = vmatprep.subr.mxu0 0.0
    %2018 = vmatpush1.xpose.msra.mxu0 0.0
    %2019 = vmatprep.subr.mxu0 0.0
    %2020 = vmatpush1.xpose.msra.mxu0 0.0
    %2021 = vmatprep.subr.mxu0 0.0
    %2022 = vmatpush1.xpose.msra.mxu0 0.0
    %2023 = vmatprep.subr.mxu0 0.0
    %2024 = vmatpush1.xpose.msra.mxu0 0.0
    %2025 = vmatprep.subr.mxu0 0.0
    %2026 = vmatpush1.xpose.msra.mxu0 0.0
    %2027 = vmatprep.subr.mxu0 0.0
    %2028 = vmatpush1.xpose.msra.mxu0 0.0
    %2029 = vmatprep.subr.mxu0 0.0
    %2030 = vmatpush1.xpose.msra.mxu0 0.0
    %2031 = vmatprep.subr.mxu0 0.0
    %2032 = vmatpush1.xpose.msra.mxu0 0.0
    %2033 = vmatprep.subr.mxu0 0.0
    %2034 = vmatpush1.xpose.msra.mxu0 0.0
    %2035 = vmatprep.subr.mxu0 0.0
    %2036 = vmatpush1.xpose.msra.mxu0 0.0
    %2037 = vmatprep.subr.mxu0 0.0
    %2038 = vmatpush1.xpose.msra.mxu0 0.0
    %2039 = vmatprep.subr.mxu0 0.0
    %2040 = vmatpush1.xpose.msra.mxu0 0.0
    %2041 = vmatprep.subr.mxu0 0.0
    %2042 = vmatpush1.xpose.msra.mxu0 0.0
    %2043 = vmatprep.subr.mxu0 0.0
    %2044 = vmatpush1.xpose.msra.mxu0 0.0
    %2045 = vmatprep.subr.mxu0 0.0
    %2046 = vmatpush1.xpose.msra.mxu0 0.0
    %2047 = vmatprep.subr.mxu0 0.0
    %2048 = vmatpush1.xpose.msra.mxu0 0.0
    %2049 = vmatprep.subr.mxu0 0.0
    %2050 = vmatpush1.xpose.msra.mxu0 0.0
    %2051 = vmatprep.subr.mxu0 0.0
    %2052 = vmatpush1.xpose.msra.mxu0 0.0
    %2053 = vmatprep.subr.mxu0 0.0
    %2054 = vmatpush1.xpose.msra.mxu0 0.0
    %2055 = vmatprep.subr.mxu0 0.0
    %2056 = vmatpush1.xpose.msra.mxu0 0.0
    %2057 = vmatprep.subr.mxu0 0.0
    %2058 = vmatpush1.xpose.msra.mxu0 0.0
    %2059 = vmatprep.subr.mxu0 0.0
    %2060 = vmatpush1.xpose.msra.mxu0 0.0
    %2061 = vmatprep.subr.mxu0 0.0
    %2062 = vmatpush1.xpose.msra.mxu0 0.0
    %2063 = vmatprep.subr.mxu0 0.0
    %2064 = vmatpush1.xpose.msra.mxu0 0.0
    %2065 = vmatprep.subr.mxu0 0.0
    %2066 = vmatpush1.xpose.msra.mxu0 0.0
    %2067 = vmatprep.mubr.f32.mxu0 0.0
    %2068 = vmatmul.mubr.f32.gmra.mrb[0].mxu0 %v1995
    %v2069 = vpop.f32.mrb[0].mxu0
    %v2070 = vadd.f32 %v160, %v2069
    %v2071 = vpop.f32.mrb[0].mxu0
    %2072 = vmatprep.mubr.f32.mxu0 0.0
    %2073 = vmatmul.mubr.f32.gmra.mrb[0].mxu0 %v1997
    %v2074 = vpop.f32.mrb[0].mxu0
    %v2075 = vadd.f32 %v161, %v2074
    %v2076 = vpop.f32.mrb[0].mxu0
    %2077 = vdwg.mxu0
    %v2078 = vsel %vm368, %v2070, -inf
    %2079 = vmax.xlane.f32.xlu0 %v2078
    %v2080 = vpop.xlane.xlu0 %2079
    %v2081 = vsel %vm368, %v2075, -inf
    %2082 = vmax.xlane.f32.xlu0 %v2081
    %v2083 = vpop.xlane.xlu0 %2082
    %v2084 = vsub.f32 %v2070, %v2080
    %v2085 = vsub.f32 %v2075, %v2083
    %v2086 = vmul.f32 %v2084, 1.442695
    %v2087 = vpow.pop %v2086
    %v2088 = vmul.f32 %v2085, 1.442695
    %v2089 = vpow.pop %v2088
    %v2090 = vsel %vm368, %v2087, 0.0
    %2091 = vadd.xlane.f32.xlu0 %v2090
    %v2092 = vpop.xlane.xlu0 %2091
    %v2093 = vsel %vm368, %v2089, 0.0
    %2094 = vadd.xlane.f32.xlu0 %v2093
    %v2095 = vpop.xlane.xlu0 %2094
    %v2096 = vrcp.pop %v2092
    %v2097 = vrcp.pop %v2095
    %v2098 = vmul.f32 %v2087, %v2096
    %v2099 = vmul.f32 %v2089, %v2097
    %2100 = vrot.lane.b32.xlu0 %v1581, 48
    %v2101 = vpop.permute.xlu0 %2100
    %2102 = vrot.lane.b32.xlu0 %v1586, 48
    %v2103 = vpop.permute.xlu0 %2102
    %v2107 = vsel %vm368, %v2098, 0
    %v2110 = vsel %vm368, %v2099, 0
    %2112 = vmatprep.subr.mxu0 0.0
    %2113 = vmatpush1.msra.mxu0 %v2101
    %2114 = vmatprep.subr.mxu0 0.0
    %2115 = vmatpush1.msra.mxu0 %v2103
    %2116 = vmatprep.subr.mxu0 0.0
    %2117 = vmatpush1.msra.mxu0 0.0
    %2118 = vmatprep.subr.mxu0 0.0
    %2119 = vmatpush1.msra.mxu0 0.0
    %2120 = vmatprep.subr.mxu0 0.0
    %2121 = vmatpush1.msra.mxu0 0.0
    %2122 = vmatprep.subr.mxu0 0.0
    %2123 = vmatpush1.msra.mxu0 0.0
    %2124 = vmatprep.subr.mxu0 0.0
    %2125 = vmatpush1.msra.mxu0 0.0
    %2126 = vmatprep.subr.mxu0 0.0
    %2127 = vmatpush1.msra.mxu0 0.0
    %2128 = vmatprep.subr.mxu0 0.0
    %2129 = vmatpush1.msra.mxu0 0.0
    %2130 = vmatprep.subr.mxu0 0.0
    %2131 = vmatpush1.msra.mxu0 0.0
    %2132 = vmatprep.subr.mxu0 0.0
    %2133 = vmatpush1.msra.mxu0 0.0
    %2134 = vmatprep.subr.mxu0 0.0
    %2135 = vmatpush1.msra.mxu0 0.0
    %2136 = vmatprep.subr.mxu0 0.0
    %2137 = vmatpush1.msra.mxu0 0.0
    %2138 = vmatprep.subr.mxu0 0.0
    %2139 = vmatpush1.msra.mxu0 0.0
    %2140 = vmatprep.subr.mxu0 0.0
    %2141 = vmatpush1.msra.mxu0 0.0
    %2142 = vmatprep.subr.mxu0 0.0
    %2143 = vmatpush1.msra.mxu0 0.0
    %2144 = vmatprep.subr.mxu0 0.0
    %2145 = vmatpush1.msra.mxu0 0.0
    %2146 = vmatprep.subr.mxu0 0.0
    %2147 = vmatpush1.msra.mxu0 0.0
    %2148 = vmatprep.subr.mxu0 0.0
    %2149 = vmatpush1.msra.mxu0 0.0
    %2150 = vmatprep.subr.mxu0 0.0
    %2151 = vmatpush1.msra.mxu0 0.0
    %2152 = vmatprep.subr.mxu0 0.0
    %2153 = vmatpush1.msra.mxu0 0.0
    %2154 = vmatprep.subr.mxu0 0.0
    %2155 = vmatpush1.msra.mxu0 0.0
    %2156 = vmatprep.subr.mxu0 0.0
    %2157 = vmatpush1.msra.mxu0 0.0
    %2158 = vmatprep.subr.mxu0 0.0
    %2159 = vmatpush1.msra.mxu0 0.0
    %2160 = vmatprep.subr.mxu0 0.0
    %2161 = vmatpush1.msra.mxu0 0.0
    %2162 = vmatprep.subr.mxu0 0.0
    %2163 = vmatpush1.msra.mxu0 0.0
    %2164 = vmatprep.subr.mxu0 0.0
    %2165 = vmatpush1.msra.mxu0 0.0
    %2166 = vmatprep.subr.mxu0 0.0
    %2167 = vmatpush1.msra.mxu0 0.0
    %2168 = vmatprep.subr.mxu0 0.0
    %2169 = vmatpush1.msra.mxu0 0.0
    %2170 = vmatprep.subr.mxu0 0.0
    %2171 = vmatpush1.msra.mxu0 0.0
    %2172 = vmatprep.subr.mxu0 0.0
    %2173 = vmatpush1.msra.mxu0 0.0
    %2174 = vmatprep.subr.mxu0 0.0
    %2175 = vmatpush1.msra.mxu0 0.0
    %2176 = vmatprep.mubr.f32.mxu0 0.0
    %2177 = vmatmul.mubr.f32.gmra.mrb[0].mxu0 %v2107
    %v2178 = vpop.f32.mrb[0].mxu0
    %v2179 = vadd.f32 0.0, %v2178
    %v2180 = vpop.f32.mrb[0].mxu0
    %2181 = vmatprep.mubr.f32.mxu0 0.0
    %2182 = vmatmul.mubr.f32.gmra.mrb[0].mxu0 %v2110
    %v2183 = vpop.f32.mrb[0].mxu0
    %v2184 = vadd.f32 0.0, %v2183
    %v2185 = vpop.f32.mrb[0].mxu0
    %2186 = vdwg.mxu0
    %2187 = vrot.lane.b32.xlu0 %v1581, 104
    %v2188 = vpop.permute.xlu0 %2187
    %2189 = vrot.lane.b32.xlu0 %v1586, 104
    %v2190 = vpop.permute.xlu0 %2189
    %2191 = vrot.lane.b32.xlu0 %v1581, 72
    %v2192 = vpop.permute.xlu0 %2191
    %2193 = vrot.lane.b32.xlu0 %v1586, 72
    %v2194 = vpop.permute.xlu0 %2193
    %v2195 = vsel %vm284, %v2188, 0
    %v2197 = vsel %vm284, %v2190, 0
    %v2199 = vsel %vm284, %v2192, 0
    %v2201 = vsel %vm284, %v2194, 0
    %2203 = vmatprep.subr.mxu0 0.0
    %2204 = vmatpush1.xpose.msra.mxu0 %v2199
    %2205 = vmatprep.subr.mxu0 0.0
    %2206 = vmatpush1.xpose.msra.mxu0 %v2201
    %2207 = vmatprep.subr.mxu0 0.0
    %2208 = vmatpush1.xpose.msra.mxu0 0.0
    %2209 = vmatprep.subr.mxu0 0.0
    %2210 = vmatpush1.xpose.msra.mxu0 0.0
    %2211 = vmatprep.subr.mxu0 0.0
    %2212 = vmatpush1.xpose.msra.mxu0 0.0
    %2213 = vmatprep.subr.mxu0 0.0
    %2214 = vmatpush1.xpose.msra.mxu0 0.0
    %2215 = vmatprep.subr.mxu0 0.0
    %2216 = vmatpush1.xpose.msra.mxu0 0.0
    %2217 = vmatprep.subr.mxu0 0.0
    %2218 = vmatpush1.xpose.msra.mxu0 0.0
    %2219 = vmatprep.subr.mxu0 0.0
    %2220 = vmatpush1.xpose.msra.mxu0 0.0
    %2221 = vmatprep.subr.mxu0 0.0
    %2222 = vmatpush1.xpose.msra.mxu0 0.0
    %2223 = vmatprep.subr.mxu0 0.0
    %2224 = vmatpush1.xpose.msra.mxu0 0.0
    %2225 = vmatprep.subr.mxu0 0.0
    %2226 = vmatpush1.xpose.msra.mxu0 0.0
    %2227 = vmatprep.subr.mxu0 0.0
    %2228 = vmatpush1.xpose.msra.mxu0 0.0
    %2229 = vmatprep.subr.mxu0 0.0
    %2230 = vmatpush1.xpose.msra.mxu0 0.0
    %2231 = vmatprep.subr.mxu0 0.0
    %2232 = vmatpush1.xpose.msra.mxu0 0.0
    %2233 = vmatprep.subr.mxu0 0.0
    %2234 = vmatpush1.xpose.msra.mxu0 0.0
    %2235 = vmatprep.subr.mxu0 0.0
    %2236 = vmatpush1.xpose.msra.mxu0 0.0
    %2237 = vmatprep.subr.mxu0 0.0
    %2238 = vmatpush1.xpose.msra.mxu0 0.0
    %2239 = vmatprep.subr.mxu0 0.0
    %2240 = vmatpush1.xpose.msra.mxu0 0.0
    %2241 = vmatprep.subr.mxu0 0.0
    %2242 = vmatpush1.xpose.msra.mxu0 0.0
    %2243 = vmatprep.subr.mxu0 0.0
    %2244 = vmatpush1.xpose.msra.mxu0 0.0
    %2245 = vmatprep.subr.mxu0 0.0
    %2246 = vmatpush1.xpose.msra.mxu0 0.0
    %2247 = vmatprep.subr.mxu0 0.0
    %2248 = vmatpush1.xpose.msra.mxu0 0.0
    %2249 = vmatprep.subr.mxu0 0.0
    %2250 = vmatpush1.xpose.msra.mxu0 0.0
    %2251 = vmatprep.subr.mxu0 0.0
    %2252 = vmatpush1.xpose.msra.mxu0 0.0
    %2253 = vmatprep.subr.mxu0 0.0
    %2254 = vmatpush1.xpose.msra.mxu0 0.0
    %2255 = vmatprep.subr.mxu0 0.0
    %2256 = vmatpush1.xpose.msra.mxu0 0.0
    %2257 = vmatprep.subr.mxu0 0.0
    %2258 = vmatpush1.xpose.msra.mxu0 0.0
    %2259 = vmatprep.subr.mxu0 0.0
    %2260 = vmatpush1.xpose.msra.mxu0 0.0
    %2261 = vmatprep.subr.mxu0 0.0
    %2262 = vmatpush1.xpose.msra.mxu0 0.0
    %2263 = vmatprep.subr.mxu0 0.0
    %2264 = vmatpush1.xpose.msra.mxu0 0.0
    %2265 = vmatprep.subr.mxu0 0.0
    %2266 = vmatpush1.xpose.msra.mxu0 0.0
    %2267 = vmatprep.mubr.f32.mxu0 0.0
    %2268 = vmatmul.mubr.f32.gmra.mrb[0].mxu0 %v2195
    %v2269 = vpop.f32.mrb[0].mxu0
    %v2270 = vadd.f32 %v160, %v2269
    %v2271 = vpop.f32.mrb[0].mxu0
    %2272 = vmatprep.mubr.f32.mxu0 0.0
    %2273 = vmatmul.mubr.f32.gmra.mrb[0].mxu0 %v2197
    %v2274 = vpop.f32.mrb[0].mxu0
    %v2275 = vadd.f32 %v161, %v2274
    %v2276 = vpop.f32.mrb[0].mxu0
    %2277 = vdwg.mxu0
    %v2278 = vsel %vm368, %v2270, -inf
    %2279 = vmax.xlane.f32.xlu0 %v2278
    %v2280 = vpop.xlane.xlu0 %2279
    %v2281 = vsel %vm368, %v2275, -inf
    %2282 = vmax.xlane.f32.xlu0 %v2281
    %v2283 = vpop.xlane.xlu0 %2282
    %v2284 = vsub.f32 %v2270, %v2280
    %v2285 = vsub.f32 %v2275, %v2283
    %v2286 = vmul.f32 %v2284, 1.442695
    %v2287 = vpow.pop %v2286
    %v2288 = vmul.f32 %v2285, 1.442695
    %v2289 = vpow.pop %v2288
    %v2290 = vsel %vm368, %v2287, 0.0
    %2291 = vadd.xlane.f32.xlu0 %v2290
    %v2292 = vpop.xlane.xlu0 %2291
    %v2293 = vsel %vm368, %v2289, 0.0
    %2294 = vadd.xlane.f32.xlu0 %v2293
    %v2295 = vpop.xlane.xlu0 %2294
    %v2296 = vrcp.pop %v2292
    %v2297 = vrcp.pop %v2295
    %v2298 = vmul.f32 %v2287, %v2296
    %v2299 = vmul.f32 %v2289, %v2297
    %2300 = vrot.lane.b32.xlu0 %v1581, 40
    %v2301 = vpop.permute.xlu0 %2300
    %2302 = vrot.lane.b32.xlu0 %v1586, 40
    %v2303 = vpop.permute.xlu0 %2302
    %v2307 = vsel %vm368, %v2298, 0
    %v2310 = vsel %vm368, %v2299, 0
    %2312 = vmatprep.subr.mxu0 0.0
    %2313 = vmatpush1.msra.mxu0 %v2301
    %2314 = vmatprep.subr.mxu0 0.0
    %2315 = vmatpush1.msra.mxu0 %v2303
    %2316 = vmatprep.subr.mxu0 0.0
    %2317 = vmatpush1.msra.mxu0 0.0
    %2318 = vmatprep.subr.mxu0 0.0
    %2319 = vmatpush1.msra.mxu0 0.0
    %2320 = vmatprep.subr.mxu0 0.0
    %2321 = vmatpush1.msra.mxu0 0.0
    %2322 = vmatprep.subr.mxu0 0.0
    %2323 = vmatpush1.msra.mxu0 0.0
    %2324 = vmatprep.subr.mxu0 0.0
    %2325 = vmatpush1.msra.mxu0 0.0
    %2326 = vmatprep.subr.mxu0 0.0
    %2327 = vmatpush1.msra.mxu0 0.0
    %2328 = vmatprep.subr.mxu0 0.0
    %2329 = vmatpush1.msra.mxu0 0.0
    %2330 = vmatprep.subr.mxu0 0.0
    %2331 = vmatpush1.msra.mxu0 0.0
    %2332 = vmatprep.subr.mxu0 0.0
    %2333 = vmatpush1.msra.mxu0 0.0
    %2334 = vmatprep.subr.mxu0 0.0
    %2335 = vmatpush1.msra.mxu0 0.0
    %2336 = vmatprep.subr.mxu0 0.0
    %2337 = vmatpush1.msra.mxu0 0.0
    %2338 = vmatprep.subr.mxu0 0.0
    %2339 = vmatpush1.msra.mxu0 0.0
    %2340 = vmatprep.subr.mxu0 0.0
    %2341 = vmatpush1.msra.mxu0 0.0
    %2342 = vmatprep.subr.mxu0 0.0
    %2343 = vmatpush1.msra.mxu0 0.0
    %2344 = vmatprep.subr.mxu0 0.0
    %2345 = vmatpush1.msra.mxu0 0.0
    %2346 = vmatprep.subr.mxu0 0.0
    %2347 = vmatpush1.msra.mxu0 0.0
    %2348 = vmatprep.subr.mxu0 0.0
    %2349 = vmatpush1.msra.mxu0 0.0
    %2350 = vmatprep.subr.mxu0 0.0
    %2351 = vmatpush1.msra.mxu0 0.0
    %2352 = vmatprep.subr.mxu0 0.0
    %2353 = vmatpush1.msra.mxu0 0.0
    %2354 = vmatprep.subr.mxu0 0.0
    %2355 = vmatpush1.msra.mxu0 0.0
    %2356 = vmatprep.subr.mxu0 0.0
    %2357 = vmatpush1.msra.mxu0 0.0
    %2358 = vmatprep.subr.mxu0 0.0
    %2359 = vmatpush1.msra.mxu0 0.0
    %2360 = vmatprep.subr.mxu0 0.0
    %2361 = vmatpush1.msra.mxu0 0.0
    %2362 = vmatprep.subr.mxu0 0.0
    %2363 = vmatpush1.msra.mxu0 0.0
    %2364 = vmatprep.subr.mxu0 0.0
    %2365 = vmatpush1.msra.mxu0 0.0
    %2366 = vmatprep.subr.mxu0 0.0
    %2367 = vmatpush1.msra.mxu0 0.0
    %2368 = vmatprep.subr.mxu0 0.0
    %2369 = vmatpush1.msra.mxu0 0.0
    %2370 = vmatprep.subr.mxu0 0.0
    %2371 = vmatpush1.msra.mxu0 0.0
    %2372 = vmatprep.subr.mxu0 0.0
    %2373 = vmatpush1.msra.mxu0 0.0
    %2374 = vmatprep.subr.mxu0 0.0
    %2375 = vmatpush1.msra.mxu0 0.0
    %2376 = vmatprep.mubr.f32.mxu0 0.0
    %2377 = vmatmul.mubr.f32.gmra.mrb[0].mxu0 %v2307
    %v2378 = vpop.f32.mrb[0].mxu0
    %v2379 = vadd.f32 0.0, %v2378
    %v2380 = vpop.f32.mrb[0].mxu0
    %2381 = vmatprep.mubr.f32.mxu0 0.0
    %2382 = vmatmul.mubr.f32.gmra.mrb[0].mxu0 %v2310
    %v2383 = vpop.f32.mrb[0].mxu0
    %v2384 = vadd.f32 0.0, %v2383
    %v2385 = vpop.f32.mrb[0].mxu0
    %2386 = vdwg.mxu0
    %2389 = vrot.lane.b32.xlu0 %v1979, 8
    %v2390 = vpop.permute.xlu0 %2389
    %2391 = vrot.lane.b32.xlu0 %v1984, 8
    %v2392 = vpop.permute.xlu0 %2391
    %2397 = vrot.lane.b32.xlu0 %v2179, 16
    %v2398 = vpop.permute.xlu0 %2397
    %2399 = vrot.lane.b32.xlu0 %v2184, 16
    %v2400 = vpop.permute.xlu0 %2399
    %2405 = vrot.lane.b32.xlu0 %v2379, 24
    %v2406 = vpop.permute.xlu0 %2405
    %2407 = vrot.lane.b32.xlu0 %v2384, 24
    %v2408 = vpop.permute.xlu0 %2407
    %v2411 = vsel %vm284, %v1779, %v2390
    %v2412 = vsel %vm284, %v1784, %v2392
    %v2413 = vsel %vm368, %v2411, %v2398
    %v2414 = vsel %vm368, %v2412, %v2400
    %v2415 = vsel %vm1106, %v2413, %v2406
    %v2416 = vsel %vm1106, %v2414, %v2408
    %v2418 = vlaneseq
    %v2419 = vshrl.u32 %v2418, 7
    %v2420 = vsub.s32 0, %v2419
    %v2421 = vrot.slane %v1475, %v2420
    %v2424 = vsel %vm196, %v2415, 0
    %v2427 = vsel %vm196, %v2416, 0
    %2429 = vmatprep.subr.mxu0 0.0
    %2430 = vmatpush1.msra.mxu0 %v1470
    %2431 = vmatprep.subr.mxu0 0.0
    %2432 = vmatpush1.msra.mxu0 %v1471
    %2433 = vmatprep.subr.mxu0 0.0
    %2434 = vmatpush1.msra.mxu0 %v1472
    %2435 = vmatprep.subr.mxu0 0.0
    %2436 = vmatpush1.msra.mxu0 %v1473
    %2437 = vmatprep.subr.mxu0 0.0
    %2438 = vmatpush1.msra.mxu0 0.0
    %2439 = vmatprep.subr.mxu0 0.0
    %2440 = vmatpush1.msra.mxu0 0.0
    %2441 = vmatprep.subr.mxu0 0.0
    %2442 = vmatpush1.msra.mxu0 0.0
    %2443 = vmatprep.subr.mxu0 0.0
    %2444 = vmatpush1.msra.mxu0 0.0
    %2445 = vmatprep.subr.mxu0 0.0
    %2446 = vmatpush1.msra.mxu0 0.0
    %2447 = vmatprep.subr.mxu0 0.0
    %2448 = vmatpush1.msra.mxu0 0.0
    %2449 = vmatprep.subr.mxu0 0.0
    %2450 = vmatpush1.msra.mxu0 0.0
    %2451 = vmatprep.subr.mxu0 0.0
    %2452 = vmatpush1.msra.mxu0 0.0
    %2453 = vmatprep.subr.mxu0 0.0
    %2454 = vmatpush1.msra.mxu0 0.0
    %2455 = vmatprep.subr.mxu0 0.0
    %2456 = vmatpush1.msra.mxu0 0.0
    %2457 = vmatprep.subr.mxu0 0.0
    %2458 = vmatpush1.msra.mxu0 0.0
    %2459 = vmatprep.subr.mxu0 0.0
    %2460 = vmatpush1.msra.mxu0 0.0
    %2461 = vmatprep.subr.mxu0 0.0
    %2462 = vmatpush1.msra.mxu0 0.0
    %2463 = vmatprep.subr.mxu0 0.0
    %2464 = vmatpush1.msra.mxu0 0.0
    %2465 = vmatprep.subr.mxu0 0.0
    %2466 = vmatpush1.msra.mxu0 0.0
    %2467 = vmatprep.subr.mxu0 0.0
    %2468 = vmatpush1.msra.mxu0 0.0
    %2469 = vmatprep.subr.mxu0 0.0
    %2470 = vmatpush1.msra.mxu0 0.0
    %2471 = vmatprep.subr.mxu0 0.0
    %2472 = vmatpush1.msra.mxu0 0.0
    %2473 = vmatprep.subr.mxu0 0.0
    %2474 = vmatpush1.msra.mxu0 0.0
    %2475 = vmatprep.subr.mxu0 0.0
    %2476 = vmatpush1.msra.mxu0 0.0
    %2477 = vmatprep.subr.mxu0 0.0
    %2478 = vmatpush1.msra.mxu0 0.0
    %2479 = vmatprep.subr.mxu0 0.0
    %2480 = vmatpush1.msra.mxu0 0.0
    %2481 = vmatprep.subr.mxu0 0.0
    %2482 = vmatpush1.msra.mxu0 0.0
    %2483 = vmatprep.subr.mxu0 0.0
    %2484 = vmatpush1.msra.mxu0 0.0
    %2485 = vmatprep.subr.mxu0 0.0
    %2486 = vmatpush1.msra.mxu0 0.0
    %2487 = vmatprep.subr.mxu0 0.0
    %2488 = vmatpush1.msra.mxu0 0.0
    %2489 = vmatprep.subr.mxu0 0.0
    %2490 = vmatpush1.msra.mxu0 0.0
    %2491 = vmatprep.subr.mxu0 0.0
    %2492 = vmatpush1.msra.mxu0 0.0
    %2493 = vmatprep.mubr.f32.mxu0 0.0
    %2494 = vmatmul.mubr.f32.gmra.mrb[0].mxu0 %v2424
    %v2495 = vpop.f32.mrb[0].mxu0
    %v2496 = vadd.f32 %v2421, %v2495
    %v2497 = vpop.f32.mrb[0].mxu0
    %2498 = vmatprep.mubr.f32.mxu0 0.0
    %2499 = vmatmul.mubr.f32.gmra.mrb[0].mxu0 %v2427
    %v2500 = vpop.f32.mrb[0].mxu0
    %v2501 = vadd.f32 %v2421, %v2500
    %v2502 = vpop.f32.mrb[0].mxu0
    %2503 = vdwg.mxu0
    %v2504 = vadd.f32 %v1460, %v2496
    %v2505 = vadd.f32 %v1461, %v2501
    %v2506 = vsel %vm196, %v2504, 0.0
    %2507 = vadd.xlane.f32.xlu0 %v2506
    %v2508 = vpop.xlane.xlu0 %2507
    %v2509 = vsel %vm196, %v2505, 0.0
    %2510 = vadd.xlane.f32.xlu0 %v2509
    %v2511 = vpop.xlane.xlu0 %2510
    %v2512 = vmul.f32 %v2508, %v1204
    %v2513 = vmul.f32 %v2511, %v1204
    %v2514 = vsub.f32 %v2504, %v2512
    %v2515 = vsub.f32 %v2505, %v2513
    %v2516 = vmul.f32 %v2514, %v2514
    %v2517 = vmul.f32 %v2515, %v2515
    %v2518 = vsel %vm196, %v2516, 0.0
    %2519 = vadd.xlane.f32.xlu0 %v2518
    %v2520 = vpop.xlane.xlu0 %2519
    %v2521 = vsel %vm196, %v2517, 0.0
    %2522 = vadd.xlane.f32.xlu0 %v2521
    %v2523 = vpop.xlane.xlu0 %2522
    %v2524 = vmul.f32 %v2520, %v1204
    %v2525 = vmul.f32 %v2523, %v1204
    %v2526 = vadd.f32 %v2524, 1e-05
    %v2527 = vadd.f32 %v2525, 1e-05
    %v2528 = vrsqrt.pop %v2526
    %v2529 = vrsqrt.pop %v2527
    %v2530 = vmul.f32 %v2514, %v2528
    %v2531 = vmul.f32 %v2515, %v2529
    %v2533 = vlaneseq
    %v2534 = vshrl.u32 %v2533, 7
    %v2535 = vsub.s32 0, %v2534
    %v2536 = vrot.slane %v1477, %v2535
    %v2538 = vmul.f32 %v2530, %v2536
    %v2539 = vmul.f32 %v2531, %v2536
    %v2541 = vlaneseq
    %v2542 = vshrl.u32 %v2541, 7
    %v2543 = vsub.s32 0, %v2542
    %v2544 = vrot.slane %v1479, %v2543
    %v2546 = vadd.f32 %v2538, %v2544
    %v2547 = vadd.f32 %v2539, %v2544
    %v2549 = vlaneseq
    %v2550 = vshrl.u32 %v2549, 7
    %v2551 = vsub.s32 0, %v2550
    %v2552 = vrot.slane %v1486, %v2551
    %v2555 = vsel %vm196, %v2546, 0
    %v2558 = vsel %vm196, %v2547, 0
    %2560 = vmatprep.subr.mxu0 0.0
    %2561 = vmatpush1.msra.mxu0 %v1481
    %2562 = vmatprep.subr.mxu0 0.0
    %2563 = vmatpush1.msra.mxu0 %v1482
    %2564 = vmatprep.subr.mxu0 0.0
    %2565 = vmatpush1.msra.mxu0 %v1483
    %2566 = vmatprep.subr.mxu0 0.0
    %2567 = vmatpush1.msra.mxu0 %v1484
    %2568 = vmatprep.subr.mxu0 0.0
    %2569 = vmatpush1.msra.mxu0 0.0
    %2570 = vmatprep.subr.mxu0 0.0
    %2571 = vmatpush1.msra.mxu0 0.0
    %2572 = vmatprep.subr.mxu0 0.0
    %2573 = vmatpush1.msra.mxu0 0.0
    %2574 = vmatprep.subr.mxu0 0.0
    %2575 = vmatpush1.msra.mxu0 0.0
    %2576 = vmatprep.subr.mxu0 0.0
    %2577 = vmatpush1.msra.mxu0 0.0
    %2578 = vmatprep.subr.mxu0 0.0
    %2579 = vmatpush1.msra.mxu0 0.0
    %2580 = vmatprep.subr.mxu0 0.0
    %2581 = vmatpush1.msra.mxu0 0.0
    %2582 = vmatprep.subr.mxu0 0.0
    %2583 = vmatpush1.msra.mxu0 0.0
    %2584 = vmatprep.subr.mxu0 0.0
    %2585 = vmatpush1.msra.mxu0 0.0
    %2586 = vmatprep.subr.mxu0 0.0
    %2587 = vmatpush1.msra.mxu0 0.0
    %2588 = vmatprep.subr.mxu0 0.0
    %2589 = vmatpush1.msra.mxu0 0.0
    %2590 = vmatprep.subr.mxu0 0.0
    %2591 = vmatpush1.msra.mxu0 0.0
    %2592 = vmatprep.subr.mxu0 0.0
    %2593 = vmatpush1.msra.mxu0 0.0
    %2594 = vmatprep.subr.mxu0 0.0
    %2595 = vmatpush1.msra.mxu0 0.0
    %2596 = vmatprep.subr.mxu0 0.0
    %2597 = vmatpush1.msra.mxu0 0.0
    %2598 = vmatprep.subr.mxu0 0.0
    %2599 = vmatpush1.msra.mxu0 0.0
    %2600 = vmatprep.subr.mxu0 0.0
    %2601 = vmatpush1.msra.mxu0 0.0
    %2602 = vmatprep.subr.mxu0 0.0
    %2603 = vmatpush1.msra.mxu0 0.0
    %2604 = vmatprep.subr.mxu0 0.0
    %2605 = vmatpush1.msra.mxu0 0.0
    %2606 = vmatprep.subr.mxu0 0.0
    %2607 = vmatpush1.msra.mxu0 0.0
    %2608 = vmatprep.subr.mxu0 0.0
    %2609 = vmatpush1.msra.mxu0 0.0
    %2610 = vmatprep.subr.mxu0 0.0
    %2611 = vmatpush1.msra.mxu0 0.0
    %2612 = vmatprep.subr.mxu0 0.0
    %2613 = vmatpush1.msra.mxu0 0.0
    %2614 = vmatprep.subr.mxu0 0.0
    %2615 = vmatpush1.msra.mxu0 0.0
    %2616 = vmatprep.subr.mxu0 0.0
    %2617 = vmatpush1.msra.mxu0 0.0
    %2618 = vmatprep.subr.mxu0 0.0
    %2619 = vmatpush1.msra.mxu0 0.0
    %2620 = vmatprep.subr.mxu0 0.0
    %2621 = vmatpush1.msra.mxu0 0.0
    %2622 = vmatprep.subr.mxu0 0.0
    %2623 = vmatpush1.msra.mxu0 0.0
    %2624 = vmatprep.mubr.f32.mxu0 0.0
    %2625 = vmatmul.mubr.f32.gmra.mrb[0].mxu0 %v2555
    %v2626 = vpop.f32.mrb[0].mxu0
    %v2627 = vadd.f32 %v2552, %v2626
    %v2628 = vpop.f32.mrb[0].mxu0
    %2629 = vmatprep.mubr.f32.mxu0 0.0
    %2630 = vmatmul.mubr.f32.gmra.mrb[0].mxu0 %v2558
    %v2631 = vpop.f32.mrb[0].mxu0
    %v2632 = vadd.f32 %v2552, %v2631
    %v2633 = vpop.f32.mrb[0].mxu0
    %2634 = vdwg.mxu0
    %v2635 = vmax.f32 %v2627, 0.0
    %v2636 = vmax.f32 %v2632, 0.0
    %v2638 = vlaneseq
    %v2639 = vshrl.u32 %v2638, 7
    %v2640 = vsub.s32 0, %v2639
    %v2641 = vrot.slane %v1497, %v2640
    %v2644 = vsel %vm1336, %v2635, 0
    %v2647 = vsel %vm1336, %v2636, 0
    %2649 = vmatprep.subr.mxu0 0.0
    %2650 = vmatpush1.msra.mxu0 %v1488
    %2651 = vmatprep.subr.mxu0 0.0
    %2652 = vmatpush1.msra.mxu0 %v1489
    %2653 = vmatprep.subr.mxu0 0.0
    %2654 = vmatpush1.msra.mxu0 %v1490
    %2655 = vmatprep.subr.mxu0 0.0
    %2656 = vmatpush1.msra.mxu0 %v1491
    %2657 = vmatprep.subr.mxu0 0.0
    %2658 = vmatpush1.msra.mxu0 %v1492
    %2659 = vmatprep.subr.mxu0 0.0
    %2660 = vmatpush1.msra.mxu0 %v1493
    %2661 = vmatprep.subr.mxu0 0.0
    %2662 = vmatpush1.msra.mxu0 %v1494
    %2663 = vmatprep.subr.mxu0 0.0
    %2664 = vmatpush1.msra.mxu0 %v1495
    %2665 = vmatprep.subr.mxu0 0.0
    %2666 = vmatpush1.msra.mxu0 0.0
    %2667 = vmatprep.subr.mxu0 0.0
    %2668 = vmatpush1.msra.mxu0 0.0
    %2669 = vmatprep.subr.mxu0 0.0
    %2670 = vmatpush1.msra.mxu0 0.0
    %2671 = vmatprep.subr.mxu0 0.0
    %2672 = vmatpush1.msra.mxu0 0.0
    %2673 = vmatprep.subr.mxu0 0.0
    %2674 = vmatpush1.msra.mxu0 0.0
    %2675 = vmatprep.subr.mxu0 0.0
    %2676 = vmatpush1.msra.mxu0 0.0
    %2677 = vmatprep.subr.mxu0 0.0
    %2678 = vmatpush1.msra.mxu0 0.0
    %2679 = vmatprep.subr.mxu0 0.0
    %2680 = vmatpush1.msra.mxu0 0.0
    %2681 = vmatprep.subr.mxu0 0.0
    %2682 = vmatpush1.msra.mxu0 0.0
    %2683 = vmatprep.subr.mxu0 0.0
    %2684 = vmatpush1.msra.mxu0 0.0
    %2685 = vmatprep.subr.mxu0 0.0
    %2686 = vmatpush1.msra.mxu0 0.0
    %2687 = vmatprep.subr.mxu0 0.0
    %2688 = vmatpush1.msra.mxu0 0.0
    %2689 = vmatprep.subr.mxu0 0.0
    %2690 = vmatpush1.msra.mxu0 0.0
    %2691 = vmatprep.subr.mxu0 0.0
    %2692 = vmatpush1.msra.mxu0 0.0
    %2693 = vmatprep.subr.mxu0 0.0
    %2694 = vmatpush1.msra.mxu0 0.0
    %2695 = vmatprep.subr.mxu0 0.0
    %2696 = vmatpush1.msra.mxu0 0.0
    %2697 = vmatprep.subr.mxu0 0.0
    %2698 = vmatpush1.msra.mxu0 0.0
    %2699 = vmatprep.subr.mxu0 0.0
    %2700 = vmatpush1.msra.mxu0 0.0
    %2701 = vmatprep.subr.mxu0 0.0
    %2702 = vmatpush1.msra.mxu0 0.0
    %2703 = vmatprep.subr.mxu0 0.0
    %2704 = vmatpush1.msra.mxu0 0.0
    %2705 = vmatprep.subr.mxu0 0.0
    %2706 = vmatpush1.msra.mxu0 0.0
    %2707 = vmatprep.subr.mxu0 0.0
    %2708 = vmatpush1.msra.mxu0 0.0
    %2709 = vmatprep.subr.mxu0 0.0
    %2710 = vmatpush1.msra.mxu0 0.0
    %2711 = vmatprep.subr.mxu0 0.0
    %2712 = vmatpush1.msra.mxu0 0.0
    %2713 = vmatprep.mubr.f32.mxu0 0.0
    %2714 = vmatmul.mubr.f32.gmra.mrb[0].mxu0 %v2644
    %v2715 = vpop.f32.mrb[0].mxu0
    %v2716 = vadd.f32 %v2641, %v2715
    %v2717 = vpop.f32.mrb[0].mxu0
    %2718 = vmatprep.mubr.f32.mxu0 0.0
    %2719 = vmatmul.mubr.f32.gmra.mrb[0].mxu0 %v2647
    %v2720 = vpop.f32.mrb[0].mxu0
    %v2721 = vadd.f32 %v2641, %v2720
    %v2722 = vpop.f32.mrb[0].mxu0
    %2723 = vdwg.mxu0
    %v2724 = vadd.f32 %v2546, %v2716
    %v2725 = vadd.f32 %v2547, %v2721
    %v2726 = vsel %vm196, %v2724, 0.0
    %2727 = vadd.xlane.f32.xlu0 %v2726
    %v2728 = vpop.xlane.xlu0 %2727
    %v2729 = vsel %vm196, %v2725, 0.0
    %2730 = vadd.xlane.f32.xlu0 %v2729
    %v2731 = vpop.xlane.xlu0 %2730
    %v2732 = vmul.f32 %v2728, %v1204
    %v2733 = vmul.f32 %v2731, %v1204
    %v2734 = vsub.f32 %v2724, %v2732
    %v2735 = vsub.f32 %v2725, %v2733
    %v2736 = vmul.f32 %v2734, %v2734
    %v2737 = vmul.f32 %v2735, %v2735
    %v2738 = vsel %vm196, %v2736, 0.0
    %2739 = vadd.xlane.f32.xlu0 %v2738
    %v2740 = vpop.xlane.xlu0 %2739
    %v2741 = vsel %vm196, %v2737, 0.0
    %2742 = vadd.xlane.f32.xlu0 %v2741
    %v2743 = vpop.xlane.xlu0 %2742
    %v2744 = vmul.f32 %v2740, %v1204
    %v2745 = vmul.f32 %v2743, %v1204
    %v2746 = vadd.f32 %v2744, 1e-05
    %v2747 = vadd.f32 %v2745, 1e-05
    %v2748 = vrsqrt.pop %v2746
    %v2749 = vrsqrt.pop %v2747
    %v2750 = vmul.f32 %v2734, %v2748
    %v2751 = vmul.f32 %v2735, %v2749
    %v2753 = vlaneseq
    %v2754 = vshrl.u32 %v2753, 7
    %v2755 = vsub.s32 0, %v2754
    %v2756 = vrot.slane %v1499, %v2755
    %v2758 = vmul.f32 %v2750, %v2756
    %v2759 = vmul.f32 %v2751, %v2756
    %v2761 = vlaneseq
    %v2762 = vshrl.u32 %v2761, 7
    %v2763 = vsub.s32 0, %v2762
    %v2764 = vrot.slane %v1501, %v2763
    %v2766 = vadd.f32 %v2758, %v2764
    %v2767 = vadd.f32 %v2759, %v2764
    %2768 = vst.msk [vmem:[#allocation2] sm:$0xff] %vm196, %v2766
    %2769 = vst.msk [vmem:[#allocation2 + $0x8] sm:$0xff] %vm196, %v2767
    // Predicated region
    $region62: #{tpu_custom_call.1} parent=1 // pred_check
      _
    $region63: #{tpu_custom_call.1} parent=1 // pred_check_branch
      %2771 = sbr.rel (0) target = $region65
    $region64: #{tpu_custom_call.1} parent=1 // pred_region
      %s2773 = ssub.s32 256, 256
      %2774 = vsyncadd [#allocation3], %s2773
      %s2775 = sshll.u32 [#allocation2], 4
      %s2776 = int_to_ptr.vmem [resolvable:$true] %s2775
      %2781 = dma.vmem_to_hbm [thread:$0]  %s2776, 256, %s15, [#allocation3], 128, 128, 8
    $region65: #{tpu_custom_call.1} parent=1 // pred_fallthru
      _
    // Predicated region
    $region66: #{tpu_custom_call.1} parent=1 // pred_check
      _
    $region67: #{tpu_custom_call.1} parent=1 // pred_check_branch
      %2783 = sbr.rel (0) target = $region69
    $region68: #{tpu_custom_call.1} parent=1 // pred_region
      %2784 = dma.done [#allocation3], 256
    $region69: #{tpu_custom_call.1} parent=1 // pred_fallthru
      _
    %2785 = vsyncpa [#allocation3], 1

</llo_original>
